<compile_context>
chip_gen: v7x
topology: tpu7x:2x2x1
jax: 0.10.0
libtpu: 0.0.40
codegen_flags: <defaults>
</compile_context>

<pallas_src>
import numpy as np
import jax
import jax.numpy as jnp
from jax.experimental import pallas as pl
from jax.experimental.pallas import tpu as pltpu


def _round_up(x, m):
    return (x + m - 1) // m * m


# --------------------------------------------------------------------------- #
# Stage 0: Conv3d(1 -> k, kernel=(16,4,4), stride=(16,4,4), bias=False) + ReLU #
# --------------------------------------------------------------------------- #

def _compress_kernel(w_ref, p_ref, o_ref):
    # w_ref: (k, K) VMEM | p_ref: (1, K, Mn) VMEM | o_ref: (1, k, Mn) VMEM
    acc = jnp.dot(w_ref[...], p_ref[0],
                  preferred_element_type=jnp.float32,
                  precision=jax.lax.Precision.HIGHEST)   # tiny dot; exact f32 is free
    o_ref[0] = jnp.maximum(acc, 0.0).astype(o_ref.dtype)


def compressive_conv_relu(x, w_comp):
    """relu(Conv3d(x, w_comp, stride=kernel=(16,4,4), no bias)); NCDHW in/out."""
    N, Cin, D, H, W = x.shape
    k = w_comp.shape[0]
    KD, KH, KW = w_comp.shape[2:]
    assert D % KD == 0 and H % KH == 0 and W % KW == 0
    Dp, Hp, Wp = D // KD, H // KH, W // KW
    Mn = Dp * Hp * Wp
    K = Cin * KD * KH * KW

    # stride == kernel -> non-overlapping patches: im2col is a pure permutation
    # (no data expansion).  K ordered (ci, kd, kh, kw) to match OIDHW weights.
    p = x.reshape(N, Cin, Dp, KD, Hp, KH, Wp, KW)
    p = p.transpose(0, 1, 3, 5, 7, 2, 4, 6)
    p = p.reshape(N, K, Mn)
    w = w_comp.reshape(k, K)

    out = pl.pallas_call(
        _compress_kernel,
        out_shape=jax.ShapeDtypeStruct((N, k, Mn), jnp.float32),
        grid=(N,),
        in_specs=[
            pl.BlockSpec((k, K), lambda n: (0, 0)),
            pl.BlockSpec((1, K, Mn), lambda n: (n, 0, 0)),
        ],
        out_specs=pl.BlockSpec((1, k, Mn), lambda n: (n, 0, 0)),
        compiler_params=pltpu.CompilerParams(
            dimension_semantics=("parallel",)),
    )(w, p)
    return out.reshape(N, k, Dp, Hp, Wp)


# --------------------------------------------------------------------------- #
# Stages 1 & 2: nearest upsample (4,2,2) -> Conv3d (5,3,3), pad (2,1,1) -> ReLU #
# --------------------------------------------------------------------------- #
# For each sample the padded, upsampled input is flattened to a lane-dense row
# x_flat[ci, :] and the conv becomes
#   out_flat[co, m] = relu(b[co] + sum_{ci,kd,kh,kw} w[co,ci,kd,kh,kw]
#                                   * x_flat[ci, m + kd*Hp*Wp + kh*Wp + kw])
# i.e. Cin*45 statically-shifted scaled adds.  Positions m that fall in the
# padding ring are computed too (garbage) and discarded by the reshape+slice
# in the wrapper, which keeps every in-kernel slice static and lane-dense.

def _make_ups_conv_kernel(Cin, Cout, offsets, L):
    n_tap = len(offsets)

    def kernel(w_ref, b_ref, x_ref, o_ref):
        # w_ref: (Cout, Cin*n_tap) SMEM | b_ref: (Cout,) SMEM
        # x_ref: (1, Cin, Ls) VMEM      | o_ref: (1, Cout, L) VMEM
        for co in range(Cout):
            acc = jnp.zeros((1, L), jnp.float32) + b_ref[co]
            for ci in range(Cin):
                base = ci * n_tap
                for j, off in enumerate(offsets):
                    seg = x_ref[0, ci:ci + 1, off:off + L]       # (1, L), static slice
                    acc = acc + w_ref[co, base + j] * seg
            o_ref[0, co:co + 1, :] = jnp.maximum(acc, 0.0)

    return kernel


def upsample_conv_relu(x, w, b, *, scale=(4, 2, 2), padding=(2, 1, 1)):
    """relu(Conv3d(upsample_nearest(x, scale), w, b, stride=1, pad=padding))."""
    N, Cin, Dl, Hl, Wl = x.shape
    Cout, Cin_w, KD, KH, KW = w.shape
    assert Cin_w == Cin
    sd, sh, sw = scale
    pd, ph, pw = padding
    D, H, W = Dl * sd, Hl * sh, Wl * sw
    Dp, Hp, Wp = D + 2 * pd, H + 2 * ph, W + 2 * pw
    Lpad = Dp * Hp * Wp
    max_off = (KD - 1) * Hp * Wp + (KH - 1) * Wp + (KW - 1)
    Lout = _round_up(Lpad, 128)              # lane-dense output row per sample
    Ls = _round_up(Lout + max_off, 128)      # input row incl. shift headroom

    # TODO(synk): the nearest-neighbour upsample + zero-pad/flatten stay as
    # KB-scale XLA ops between the pallas_calls; folding them into the kernel
    # would need an in-kernel 5-D gather/reshape with no clean Mosaic lowering.
    u = jnp.repeat(jnp.repeat(jnp.repeat(x, sd, axis=2), sh, axis=3), sw, axis=4)
    u = jnp.pad(u, ((0, 0), (0, 0), (pd, pd), (ph, ph), (pw, pw)))
    xf = u.reshape(N, Cin, Lpad)
    xf = jnp.pad(xf, ((0, 0), (0, 0), (0, Ls - Lpad)))

    offsets = tuple(kd * Hp * Wp + kh * Wp + kw
                    for kd in range(KD) for kh in range(KH) for kw in range(KW))
    wf = w.reshape(Cout, Cin * KD * KH * KW).astype(jnp.float32)
    bf = b.astype(jnp.float32)

    out = pl.pallas_call(
        _make_ups_conv_kernel(Cin, Cout, offsets, Lout),
        out_shape=jax.ShapeDtypeStruct((N, Cout, Lout), jnp.float32),
        grid=(N,),
        in_specs=[
            pl.BlockSpec(memory_space=pltpu.MemorySpace.SMEM),   # conv weights (scalars)
            pl.BlockSpec(memory_space=pltpu.MemorySpace.SMEM),   # bias (scalars)
            pl.BlockSpec((1, Cin, Ls), lambda n: (n, 0, 0)),     # per-sample input row
        ],
        out_specs=pl.BlockSpec((1, Cout, Lout), lambda n: (n, 0, 0)),
        compiler_params=pltpu.CompilerParams(
            dimension_semantics=("parallel",)),
    )(wf, bf, xf)

    y = out[:, :, :Lpad].reshape(N, Cout, Dp, Hp, Wp)
    return y[:, :, :D, :H, :W]


# --------------------------- Module forward -------------------------------- #

def compressive3d_forward(x, params):
    B = compressive_conv_relu(x, params["w_comp"])               # (N, k, D/16, H/4, W/4)
    y1 = upsample_conv_relu(B, params["w1"], params["b1"])       # (N, k//2, D/4, H/2, W/2)
    y2 = upsample_conv_relu(y1, params["w2"], params["b2"])      # (N, 1, D, H, W)
    return y2


def init_params(key, k=2):
    """Deterministic kaiming_normal(fan_in, relu)-style init, zero biases."""
    k1, k2, k3 = jax.random.split(key, 3)
    fan0 = 1 * 16 * 4 * 4
    w_comp = jax.random.normal(k1, (k, 1, 16, 4, 4), jnp.float32) * np.sqrt(2.0 / fan0)
    fan1 = k * 5 * 3 * 3
    w1 = jax.random.normal(k2, (k // 2, k, 5, 3, 3), jnp.float32) * np.sqrt(2.0 / fan1)
    b1 = jnp.zeros((k // 2,), jnp.float32)
    fan2 = (k // 2) * 5 * 3 * 3
    w2 = jax.random.normal(k3, (1, k // 2, 5, 3, 3), jnp.float32) * np.sqrt(2.0 / fan2)
    b2 = jnp.zeros((1,), jnp.float32)
    return dict(w_comp=w_comp, w1=w1, b1=b1, w2=w2, b2=b2)


# ----------------------------- Reference ----------------------------------- #

def _upsample_nearest(x, scale):
    sd, sh, sw = scale
    x = jnp.repeat(x, sd, axis=2)
    x = jnp.repeat(x, sh, axis=3)
    x = jnp.repeat(x, sw, axis=4)
    return x


def _conv3d_ref(x, w, b, stride, padding):
    dn = jax.lax.conv_dimension_numbers(x.shape, w.shape, ('NCDHW', 'OIDHW', 'NCDHW'))
    y = jax.lax.conv_general_dilated(
        x, w, stride, [(p, p) for p in padding],
        dimension_numbers=dn, precision=jax.lax.Precision.HIGHEST)
    if b is not None:
        y = y + b.reshape(1, -1, 1, 1, 1)
    return y


def forward_ref(x, params):
    B = jnp.maximum(_conv3d_ref(x, params["w_comp"], None, (16, 4, 4), (0, 0, 0)), 0.0)
    u1 = _upsample_nearest(B, (4, 2, 2))
    y1 = jnp.maximum(_conv3d_ref(u1, params["w1"], params["b1"], (1, 1, 1), (2, 1, 1)), 0.0)
    u2 = _upsample_nearest(y1, (4, 2, 2))
    y2 = jnp.maximum(_conv3d_ref(u2, params["w2"], params["b2"], (1, 1, 1), (2, 1, 1)), 0.0)
    return y2


# ------------------------------- Main --------------------------------------- #

if __name__ == "__main__":
    key = jax.random.PRNGKey(0)
    kx, kp = jax.random.split(key)

    # Input (N, C=1, D, H, W); D % 16 == 0, H % 4 == 0, W % 4 == 0.
    x = jax.random.normal(kx, (2, 1, 16, 8, 8), jnp.float32)
    params = init_params(kp, k=2)

    fwd = jax.jit(compressive3d_forward)
    out = jax.block_until_ready(fwd(x, params))
    assert out.shape == (2, 1, 16, 8, 8), out.shape

    ref = jax.block_until_ready(jax.jit(forward_ref)(x, params))
    np.testing.assert_allclose(np.asarray(out), np.asarray(ref), rtol=2e-3, atol=2e-3)

    print("KERNEL_OK")
</pallas_src>

<mosaic_0001>
module attributes {stable_mosaic.version = 11 : i64} {
  func.func @_compress_kernel(%arg0: i32, %arg1: memref<2x256xf32, #tpu.memory_space<vmem>>, %arg2: memref<1x256x4xf32, #tpu.memory_space<vmem>>, %arg3: memref<1x2x4xf32, #tpu.memory_space<vmem>>) attributes {dimension_semantics = [#tpu.dimension_semantics<parallel>], iteration_bounds = array<i64: 2>, scalar_prefetch = 0 : i64, scratch_operands = 0 : i64, tpu.core_type = #tpu.core_type<tc>, window_params = [{pipeline_mode = #tpu.pipeline_mode<synchronous>, transform_indices = @transform_0, window_bounds = array<i64: 2, 256>}, {transform_indices = @transform_1, window_bounds = array<i64: 1, 256, 4>}, {transform_indices = @transform_2, window_bounds = array<i64: 1, 2, 4>}]} {
    %c0 = arith.constant 0 : index
    %c0_0 = arith.constant 0 : index
    %0 = vector.load %arg1[%c0, %c0_0] : memref<2x256xf32, #tpu.memory_space<vmem>>, vector<2x256xf32>
    %c0_1 = arith.constant 0 : index
    %c0_2 = arith.constant 0 : index
    %c0_3 = arith.constant 0 : index
    %1 = vector.load %arg2[%c0_1, %c0_2, %c0_3] : memref<1x256x4xf32, #tpu.memory_space<vmem>>, vector<1x256x4xf32>
    %2 = vector.shape_cast %1 : vector<1x256x4xf32> to vector<256x4xf32>
    %cst = arith.constant dense<0.000000e+00> : vector<2x4xf32>
    %3 = tpu.matmul %0, %2, %cst {dimension_numbers = #tpu.dot_dimension_numbers<[1], [0], [0], [1], [0, 0, 1, 1], [], []>, precision = #tpu.contract_precision<fp32>} : vector<2x256xf32>, vector<256x4xf32>, vector<2x4xf32> -> vector<2x4xf32>
    %cst_4 = arith.constant 0.000000e+00 : f32
    %4 = vector.broadcast %cst_4 : f32 to vector<2x4xf32>
    %5 = arith.maximumf %3, %4 : vector<2x4xf32>
    %c0_5 = arith.constant 0 : index
    %c0_6 = arith.constant 0 : index
    %c0_7 = arith.constant 0 : index
    %6 = vector.load %arg3[%c0_5, %c0_6, %c0_7] : memref<1x2x4xf32, #tpu.memory_space<vmem>>, vector<1x2x4xf32>
    %7 = vector.shape_cast %6 : vector<1x2x4xf32> to vector<2x4xf32>
    %8 = vector.shape_cast %5 : vector<2x4xf32> to vector<1x2x4xf32>
    tpu.vector_store %arg3[%c0_5, %c0_6, %c0_7], %8 {strides = array<i32>} : memref<1x2x4xf32, #tpu.memory_space<vmem>>, vector<1x2x4xf32>,
    return
  }
  func.func @transform_0(%arg0: i32) -> (i32, i32) {
    %c0_i32 = arith.constant 0 : i32
    %c0_i32_0 = arith.constant 0 : i32
    %c0_i32_1 = arith.constant 0 : i32
    return %c0_i32, %c0_i32_0 : i32, i32
  }
  func.func @transform_1(%arg0: i32) -> (i32, i32, i32) {
    %c0_i32 = arith.constant 0 : i32
    %c0_i32_0 = arith.constant 0 : i32
    %c0_i32_1 = arith.constant 0 : i32
    return %arg0, %c0_i32, %c0_i32_0 : i32, i32, i32
  }
  func.func @transform_2(%arg0: i32) -> (i32, i32, i32) {
    %c0_i32 = arith.constant 0 : i32
    %c0_i32_0 = arith.constant 0 : i32
    %c0_i32_1 = arith.constant 0 : i32
    return %arg0, %c0_i32, %c0_i32_0 : i32, i32, i32
  }
}

module attributes {stable_mosaic.version = 11 : i64} {
  func.func @kernel(%arg0: i32, %arg1: memref<1x90xf32, #tpu.memory_space<smem>>, %arg2: memref<1xf32, #tpu.memory_space<smem>>, %arg3: memref<1x2x640xf32, #tpu.memory_space<vmem>>, %arg4: memref<1x1x384xf32, #tpu.memory_space<vmem>>) attributes {dimension_semantics = [#tpu.dimension_semantics<parallel>], iteration_bounds = array<i64: 2>, scalar_prefetch = 0 : i64, scratch_operands = 0 : i64, tpu.core_type = #tpu.core_type<tc>, window_params = [{transform_indices = @transform_0, window_bounds = array<i64: 1, 90>}, {transform_indices = @transform_1, window_bounds = array<i64: 1>}, {transform_indices = @transform_2, window_bounds = array<i64: 1, 2, 640>}, {transform_indices = @transform_3, window_bounds = array<i64: 1, 1, 384>}]} {
    %cst = arith.constant 0.000000e+00 : f32
    %0 = vector.broadcast %cst : f32 to vector<1x384xf32>
    %c0 = arith.constant 0 : index
    %1 = memref.load %arg2[%c0] : memref<1xf32, #tpu.memory_space<smem>>
    %2 = vector.broadcast %1 : f32 to vector<1x384xf32>
    %3 = arith.addf %0, %2 : vector<1x384xf32>
    %c0_0 = arith.constant 0 : index
    %c0_1 = arith.constant 0 : index
    %c0_2 = arith.constant 0 : index
    %4 = vector.load %arg3[%c0_0, %c0_1, %c0_2] : memref<1x2x640xf32, #tpu.memory_space<vmem>>, vector<1x1x384xf32>
    %5 = vector.shape_cast %4 : vector<1x1x384xf32> to vector<1x384xf32>
    %c0_3 = arith.constant 0 : index
    %c0_4 = arith.constant 0 : index
    %6 = memref.load %arg1[%c0_3, %c0_4] : memref<1x90xf32, #tpu.memory_space<smem>>
    %7 = vector.broadcast %6 : f32 to vector<1x384xf32>
    %8 = arith.mulf %7, %5 : vector<1x384xf32>
    %9 = arith.addf %3, %8 : vector<1x384xf32>
    %c0_5 = arith.constant 0 : index
    %c0_6 = arith.constant 0 : index
    %c1 = arith.constant 1 : index
    %10 = vector.load %arg3[%c0_5, %c0_6, %c1] : memref<1x2x640xf32, #tpu.memory_space<vmem>>, vector<1x1x384xf32>
    %11 = vector.shape_cast %10 : vector<1x1x384xf32> to vector<1x384xf32>
    %c0_7 = arith.constant 0 : index
    %c1_8 = arith.constant 1 : index
    %12 = memref.load %arg1[%c0_7, %c1_8] : memref<1x90xf32, #tpu.memory_space<smem>>
    %13 = vector.broadcast %12 : f32 to vector<1x384xf32>
    %14 = arith.mulf %13, %11 : vector<1x384xf32>
    %15 = arith.addf %9, %14 : vector<1x384xf32>
    %c0_9 = arith.constant 0 : index
    %c0_10 = arith.constant 0 : index
    %c2 = arith.constant 2 : index
    %16 = vector.load %arg3[%c0_9, %c0_10, %c2] : memref<1x2x640xf32, #tpu.memory_space<vmem>>, vector<1x1x384xf32>
    %17 = vector.shape_cast %16 : vector<1x1x384xf32> to vector<1x384xf32>
    %c0_11 = arith.constant 0 : index
    %c2_12 = arith.constant 2 : index
    %18 = memref.load %arg1[%c0_11, %c2_12] : memref<1x90xf32, #tpu.memory_space<smem>>
    %19 = vector.broadcast %18 : f32 to vector<1x384xf32>
    %20 = arith.mulf %19, %17 : vector<1x384xf32>
    %21 = arith.addf %15, %20 : vector<1x384xf32>
    %c0_13 = arith.constant 0 : index
    %c0_14 = arith.constant 0 : index
    %c6 = arith.constant 6 : index
    %22 = vector.load %arg3[%c0_13, %c0_14, %c6] : memref<1x2x640xf32, #tpu.memory_space<vmem>>, vector<1x1x384xf32>
    %23 = vector.shape_cast %22 : vector<1x1x384xf32> to vector<1x384xf32>
    %c0_15 = arith.constant 0 : index
    %c3 = arith.constant 3 : index
    %24 = memref.load %arg1[%c0_15, %c3] : memref<1x90xf32, #tpu.memory_space<smem>>
    %25 = vector.broadcast %24 : f32 to vector<1x384xf32>
    %26 = arith.mulf %25, %23 : vector<1x384xf32>
    %27 = arith.addf %21, %26 : vector<1x384xf32>
    %c0_16 = arith.constant 0 : index
    %c0_17 = arith.constant 0 : index
    %c7 = arith.constant 7 : index
    %28 = vector.load %arg3[%c0_16, %c0_17, %c7] : memref<1x2x640xf32, #tpu.memory_space<vmem>>, vector<1x1x384xf32>
    %29 = vector.shape_cast %28 : vector<1x1x384xf32> to vector<1x384xf32>
    %c0_18 = arith.constant 0 : index
    %c4 = arith.constant 4 : index
    %30 = memref.load %arg1[%c0_18, %c4] : memref<1x90xf32, #tpu.memory_space<smem>>
    %31 = vector.broadcast %30 : f32 to vector<1x384xf32>
    %32 = arith.mulf %31, %29 : vector<1x384xf32>
    %33 = arith.addf %27, %32 : vector<1x384xf32>
    %c0_19 = arith.constant 0 : index
    %c0_20 = arith.constant 0 : index
    %c8 = arith.constant 8 : index
    %34 = vector.load %arg3[%c0_19, %c0_20, %c8] : memref<1x2x640xf32, #tpu.memory_space<vmem>>, vector<1x1x384xf32>
    %35 = vector.shape_cast %34 : vector<1x1x384xf32> to vector<1x384xf32>
    %c0_21 = arith.constant 0 : index
    %c5 = arith.constant 5 : index
    %36 = memref.load %arg1[%c0_21, %c5] : memref<1x90xf32, #tpu.memory_space<smem>>
    %37 = vector.broadcast %36 : f32 to vector<1x384xf32>
    %38 = arith.mulf %37, %35 : vector<1x384xf32>
    %39 = arith.addf %33, %38 : vector<1x384xf32>
    %c0_22 = arith.constant 0 : index
    %c0_23 = arith.constant 0 : index
    %c12 = arith.constant 12 : index
    %40 = vector.load %arg3[%c0_22, %c0_23, %c12] : memref<1x2x640xf32, #tpu.memory_space<vmem>>, vector<1x1x384xf32>
    %41 = vector.shape_cast %40 : vector<1x1x384xf32> to vector<1x384xf32>
    %c0_24 = arith.constant 0 : index
    %c6_25 = arith.constant 6 : index
    %42 = memref.load %arg1[%c0_24, %c6_25] : memref<1x90xf32, #tpu.memory_space<smem>>
    %43 = vector.broadcast %42 : f32 to vector<1x384xf32>
    %44 = arith.mulf %43, %41 : vector<1x384xf32>
    %45 = arith.addf %39, %44 : vector<1x384xf32>
    %c0_26 = arith.constant 0 : index
    %c0_27 = arith.constant 0 : index
    %c13 = arith.constant 13 : index
    %46 = vector.load %arg3[%c0_26, %c0_27, %c13] : memref<1x2x640xf32, #tpu.memory_space<vmem>>, vector<1x1x384xf32>
    %47 = vector.shape_cast %46 : vector<1x1x384xf32> to vector<1x384xf32>
    %c0_28 = arith.constant 0 : index
    %c7_29 = arith.constant 7 : index
    %48 = memref.load %arg1[%c0_28, %c7_29] : memref<1x90xf32, #tpu.memory_space<smem>>
    %49 = vector.broadcast %48 : f32 to vector<1x384xf32>
    %50 = arith.mulf %49, %47 : vector<1x384xf32>
    %51 = arith.addf %45, %50 : vector<1x384xf32>
    %c0_30 = arith.constant 0 : index
    %c0_31 = arith.constant 0 : index
    %c14 = arith.constant 14 : index
    %52 = vector.load %arg3[%c0_30, %c0_31, %c14] : memref<1x2x640xf32, #tpu.memory_space<vmem>>, vector<1x1x384xf32>
    %53 = vector.shape_cast %52 : vector<1x1x384xf32> to vector<1x384xf32>
    %c0_32 = arith.constant 0 : index
    %c8_33 = arith.constant 8 : index
    %54 = memref.load %arg1[%c0_32, %c8_33] : memref<1x90xf32, #tpu.memory_space<smem>>
    %55 = vector.broadcast %54 : f32 to vector<1x384xf32>
    %56 = arith.mulf %55, %53 : vector<1x384xf32>
    %57 = arith.addf %51, %56 : vector<1x384xf32>
    %c0_34 = arith.constant 0 : index
    %c0_35 = arith.constant 0 : index
    %c36 = arith.constant 36 : index
    %58 = vector.load %arg3[%c0_34, %c0_35, %c36] : memref<1x2x640xf32, #tpu.memory_space<vmem>>, vector<1x1x384xf32>
    %59 = vector.shape_cast %58 : vector<1x1x384xf32> to vector<1x384xf32>
    %c0_36 = arith.constant 0 : index
    %c9 = arith.constant 9 : index
    %60 = memref.load %arg1[%c0_36, %c9] : memref<1x90xf32, #tpu.memory_space<smem>>
    %61 = vector.broadcast %60 : f32 to vector<1x384xf32>
    %62 = arith.mulf %61, %59 : vector<1x384xf32>
    %63 = arith.addf %57, %62 : vector<1x384xf32>
    %c0_37 = arith.constant 0 : index
    %c0_38 = arith.constant 0 : index
    %c37 = arith.constant 37 : index
    %64 = vector.load %arg3[%c0_37, %c0_38, %c37] : memref<1x2x640xf32, #tpu.memory_space<vmem>>, vector<1x1x384xf32>
    %65 = vector.shape_cast %64 : vector<1x1x384xf32> to vector<1x384xf32>
    %c0_39 = arith.constant 0 : index
    %c10 = arith.constant 10 : index
    %66 = memref.load %arg1[%c0_39, %c10] : memref<1x90xf32, #tpu.memory_space<smem>>
    %67 = vector.broadcast %66 : f32 to vector<1x384xf32>
    %68 = arith.mulf %67, %65 : vector<1x384xf32>
    %69 = arith.addf %63, %68 : vector<1x384xf32>
    %c0_40 = arith.constant 0 : index
    %c0_41 = arith.constant 0 : index
    %c38 = arith.constant 38 : index
    %70 = vector.load %arg3[%c0_40, %c0_41, %c38] : memref<1x2x640xf32, #tpu.memory_space<vmem>>, vector<1x1x384xf32>
    %71 = vector.shape_cast %70 : vector<1x1x384xf32> to vector<1x384xf32>
    %c0_42 = arith.constant 0 : index
    %c11 = arith.constant 11 : index
    %72 = memref.load %arg1[%c0_42, %c11] : memref<1x90xf32, #tpu.memory_space<smem>>
    %73 = vector.broadcast %72 : f32 to vector<1x384xf32>
    %74 = arith.mulf %73, %71 : vector<1x384xf32>
    %75 = arith.addf %69, %74 : vector<1x384xf32>
    %c0_43 = arith.constant 0 : index
    %c0_44 = arith.constant 0 : index
    %c42 = arith.constant 42 : index
    %76 = vector.load %arg3[%c0_43, %c0_44, %c42] : memref<1x2x640xf32, #tpu.memory_space<vmem>>, vector<1x1x384xf32>
    %77 = vector.shape_cast %76 : vector<1x1x384xf32> to vector<1x384xf32>
    %c0_45 = arith.constant 0 : index
    %c12_46 = arith.constant 12 : index
    %78 = memref.load %arg1[%c0_45, %c12_46] : memref<1x90xf32, #tpu.memory_space<smem>>
    %79 = vector.broadcast %78 : f32 to vector<1x384xf32>
    %80 = arith.mulf %79, %77 : vector<1x384xf32>
    %81 = arith.addf %75, %80 : vector<1x384xf32>
    %c0_47 = arith.constant 0 : index
    %c0_48 = arith.constant 0 : index
    %c43 = arith.constant 43 : index
    %82 = vector.load %arg3[%c0_47, %c0_48, %c43] : memref<1x2x640xf32, #tpu.memory_space<vmem>>, vector<1x1x384xf32>
    %83 = vector.shape_cast %82 : vector<1x1x384xf32> to vector<1x384xf32>
    %c0_49 = arith.constant 0 : index
    %c13_50 = arith.constant 13 : index
    %84 = memref.load %arg1[%c0_49, %c13_50] : memref<1x90xf32, #tpu.memory_space<smem>>
    %85 = vector.broadcast %84 : f32 to vector<1x384xf32>
    %86 = arith.mulf %85, %83 : vector<1x384xf32>
    %87 = arith.addf %81, %86 : vector<1x384xf32>
    %c0_51 = arith.constant 0 : index
    %c0_52 = arith.constant 0 : index
    %c44 = arith.constant 44 : index
    %88 = vector.load %arg3[%c0_51, %c0_52, %c44] : memref<1x2x640xf32, #tpu.memory_space<vmem>>, vector<1x1x384xf32>
    %89 = vector.shape_cast %88 : vector<1x1x384xf32> to vector<1x384xf32>
    %c0_53 = arith.constant 0 : index
    %c14_54 = arith.constant 14 : index
    %90 = memref.load %arg1[%c0_53, %c14_54] : memref<1x90xf32, #tpu.memory_space<smem>>
    %91 = vector.broadcast %90 : f32 to vector<1x384xf32>
    %92 = arith.mulf %91, %89 : vector<1x384xf32>
    %93 = arith.addf %87, %92 : vector<1x384xf32>
    %c0_55 = arith.constant 0 : index
    %c0_56 = arith.constant 0 : index
    %c48 = arith.constant 48 : index
    %94 = vector.load %arg3[%c0_55, %c0_56, %c48] : memref<1x2x640xf32, #tpu.memory_space<vmem>>, vector<1x1x384xf32>
    %95 = vector.shape_cast %94 : vector<1x1x384xf32> to vector<1x384xf32>
    %c0_57 = arith.constant 0 : index
    %c15 = arith.constant 15 : index
    %96 = memref.load %arg1[%c0_57, %c15] : memref<1x90xf32, #tpu.memory_space<smem>>
    %97 = vector.broadcast %96 : f32 to vector<1x384xf32>
    %98 = arith.mulf %97, %95 : vector<1x384xf32>
    %99 = arith.addf %93, %98 : vector<1x384xf32>
    %c0_58 = arith.constant 0 : index
    %c0_59 = arith.constant 0 : index
    %c49 = arith.constant 49 : index
    %100 = vector.load %arg3[%c0_58, %c0_59, %c49] : memref<1x2x640xf32, #tpu.memory_space<vmem>>, vector<1x1x384xf32>
    %101 = vector.shape_cast %100 : vector<1x1x384xf32> to vector<1x384xf32>
    %c0_60 = arith.constant 0 : index
    %c16 = arith.constant 16 : index
    %102 = memref.load %arg1[%c0_60, %c16] : memref<1x90xf32, #tpu.memory_space<smem>>
    %103 = vector.broadcast %102 : f32 to vector<1x384xf32>
    %104 = arith.mulf %103, %101 : vector<1x384xf32>
    %105 = arith.addf %99, %104 : vector<1x384xf32>
    %c0_61 = arith.constant 0 : index
    %c0_62 = arith.constant 0 : index
    %c50 = arith.constant 50 : index
    %106 = vector.load %arg3[%c0_61, %c0_62, %c50] : memref<1x2x640xf32, #tpu.memory_space<vmem>>, vector<1x1x384xf32>
    %107 = vector.shape_cast %106 : vector<1x1x384xf32> to vector<1x384xf32>
    %c0_63 = arith.constant 0 : index
    %c17 = arith.constant 17 : index
    %108 = memref.load %arg1[%c0_63, %c17] : memref<1x90xf32, #tpu.memory_space<smem>>
    %109 = vector.broadcast %108 : f32 to vector<1x384xf32>
    %110 = arith.mulf %109, %107 : vector<1x384xf32>
    %111 = arith.addf %105, %110 : vector<1x384xf32>
    %c0_64 = arith.constant 0 : index
    %c0_65 = arith.constant 0 : index
    %c72 = arith.constant 72 : index
    %112 = vector.load %arg3[%c0_64, %c0_65, %c72] : memref<1x2x640xf32, #tpu.memory_space<vmem>>, vector<1x1x384xf32>
    %113 = vector.shape_cast %112 : vector<1x1x384xf32> to vector<1x384xf32>
    %c0_66 = arith.constant 0 : index
    %c18 = arith.constant 18 : index
    %114 = memref.load %arg1[%c0_66, %c18] : memref<1x90xf32, #tpu.memory_space<smem>>
    %115 = vector.broadcast %114 : f32 to vector<1x384xf32>
    %116 = arith.mulf %115, %113 : vector<1x384xf32>
    %117 = arith.addf %111, %116 : vector<1x384xf32>
    %c0_67 = arith.constant 0 : index
    %c0_68 = arith.constant 0 : index
    %c73 = arith.constant 73 : index
    %118 = vector.load %arg3[%c0_67, %c0_68, %c73] : memref<1x2x640xf32, #tpu.memory_space<vmem>>, vector<1x1x384xf32>
    %119 = vector.shape_cast %118 : vector<1x1x384xf32> to vector<1x384xf32>
    %c0_69 = arith.constant 0 : index
    %c19 = arith.constant 19 : index
    %120 = memref.load %arg1[%c0_69, %c19] : memref<1x90xf32, #tpu.memory_space<smem>>
    %121 = vector.broadcast %120 : f32 to vector<1x384xf32>
    %122 = arith.mulf %121, %119 : vector<1x384xf32>
    %123 = arith.addf %117, %122 : vector<1x384xf32>
    %c0_70 = arith.constant 0 : index
    %c0_71 = arith.constant 0 : index
    %c74 = arith.constant 74 : index
    %124 = vector.load %arg3[%c0_70, %c0_71, %c74] : memref<1x2x640xf32, #tpu.memory_space<vmem>>, vector<1x1x384xf32>
    %125 = vector.shape_cast %124 : vector<1x1x384xf32> to vector<1x384xf32>
    %c0_72 = arith.constant 0 : index
    %c20 = arith.constant 20 : index
    %126 = memref.load %arg1[%c0_72, %c20] : memref<1x90xf32, #tpu.memory_space<smem>>
    %127 = vector.broadcast %126 : f32 to vector<1x384xf32>
    %128 = arith.mulf %127, %125 : vector<1x384xf32>
    %129 = arith.addf %123, %128 : vector<1x384xf32>
    %c0_73 = arith.constant 0 : index
    %c0_74 = arith.constant 0 : index
    %c78 = arith.constant 78 : index
    %130 = vector.load %arg3[%c0_73, %c0_74, %c78] : memref<1x2x640xf32, #tpu.memory_space<vmem>>, vector<1x1x384xf32>
    %131 = vector.shape_cast %130 : vector<1x1x384xf32> to vector<1x384xf32>
    %c0_75 = arith.constant 0 : index
    %c21 = arith.constant 21 : index
    %132 = memref.load %arg1[%c0_75, %c21] : memref<1x90xf32, #tpu.memory_space<smem>>
    %133 = vector.broadcast %132 : f32 to vector<1x384xf32>
    %134 = arith.mulf %133, %131 : vector<1x384xf32>
    %135 = arith.addf %129, %134 : vector<1x384xf32>
    %c0_76 = arith.constant 0 : index
    %c0_77 = arith.constant 0 : index
    %c79 = arith.constant 79 : index
    %136 = vector.load %arg3[%c0_76, %c0_77, %c79] : memref<1x2x640xf32, #tpu.memory_space<vmem>>, vector<1x1x384xf32>
    %137 = vector.shape_cast %136 : vector<1x1x384xf32> to vector<1x384xf32>
    %c0_78 = arith.constant 0 : index
    %c22 = arith.constant 22 : index
    %138 = memref.load %arg1[%c0_78, %c22] : memref<1x90xf32, #tpu.memory_space<smem>>
    %139 = vector.broadcast %138 : f32 to vector<1x384xf32>
    %140 = arith.mulf %139, %137 : vector<1x384xf32>
    %141 = arith.addf %135, %140 : vector<1x384xf32>
    %c0_79 = arith.constant 0 : index
    %c0_80 = arith.constant 0 : index
    %c80 = arith.constant 80 : index
    %142 = vector.load %arg3[%c0_79, %c0_80, %c80] : memref<1x2x640xf32, #tpu.memory_space<vmem>>, vector<1x1x384xf32>
    %143 = vector.shape_cast %142 : vector<1x1x384xf32> to vector<1x384xf32>
    %c0_81 = arith.constant 0 : index
    %c23 = arith.constant 23 : index
    %144 = memref.load %arg1[%c0_81, %c23] : memref<1x90xf32, #tpu.memory_space<smem>>
    %145 = vector.broadcast %144 : f32 to vector<1x384xf32>
    %146 = arith.mulf %145, %143 : vector<1x384xf32>
    %147 = arith.addf %141, %146 : vector<1x384xf32>
    %c0_82 = arith.constant 0 : index
    %c0_83 = arith.constant 0 : index
    %c84 = arith.constant 84 : index
    %148 = vector.load %arg3[%c0_82, %c0_83, %c84] : memref<1x2x640xf32, #tpu.memory_space<vmem>>, vector<1x1x384xf32>
    %149 = vector.shape_cast %148 : vector<1x1x384xf32> to vector<1x384xf32>
    %c0_84 = arith.constant 0 : index
    %c24 = arith.constant 24 : index
    %150 = memref.load %arg1[%c0_84, %c24] : memref<1x90xf32, #tpu.memory_space<smem>>
    %151 = vector.broadcast %150 : f32 to vector<1x384xf32>
    %152 = arith.mulf %151, %149 : vector<1x384xf32>
    %153 = arith.addf %147, %152 : vector<1x384xf32>
    %c0_85 = arith.constant 0 : index
    %c0_86 = arith.constant 0 : index
    %c85 = arith.constant 85 : index
    %154 = vector.load %arg3[%c0_85, %c0_86, %c85] : memref<1x2x640xf32, #tpu.memory_space<vmem>>, vector<1x1x384xf32>
    %155 = vector.shape_cast %154 : vector<1x1x384xf32> to vector<1x384xf32>
    %c0_87 = arith.constant 0 : index
    %c25 = arith.constant 25 : index
    %156 = memref.load %arg1[%c0_87, %c25] : memref<1x90xf32, #tpu.memory_space<smem>>
    %157 = vector.broadcast %156 : f32 to vector<1x384xf32>
    %158 = arith.mulf %157, %155 : vector<1x384xf32>
    %159 = arith.addf %153, %158 : vector<1x384xf32>
    %c0_88 = arith.constant 0 : index
    %c0_89 = arith.constant 0 : index
    %c86 = arith.constant 86 : index
    %160 = vector.load %arg3[%c0_88, %c0_89, %c86] : memref<1x2x640xf32, #tpu.memory_space<vmem>>, vector<1x1x384xf32>
    %161 = vector.shape_cast %160 : vector<1x1x384xf32> to vector<1x384xf32>
    %c0_90 = arith.constant 0 : index
    %c26 = arith.constant 26 : index
    %162 = memref.load %arg1[%c0_90, %c26] : memref<1x90xf32, #tpu.memory_space<smem>>
    %163 = vector.broadcast %162 : f32 to vector<1x384xf32>
    %164 = arith.mulf %163, %161 : vector<1x384xf32>
    %165 = arith.addf %159, %164 : vector<1x384xf32>
    %c0_91 = arith.constant 0 : index
    %c0_92 = arith.constant 0 : index
    %c108 = arith.constant 108 : index
    %166 = vector.load %arg3[%c0_91, %c0_92, %c108] : memref<1x2x640xf32, #tpu.memory_space<vmem>>, vector<1x1x384xf32>
    %167 = vector.shape_cast %166 : vector<1x1x384xf32> to vector<1x384xf32>
    %c0_93 = arith.constant 0 : index
    %c27 = arith.constant 27 : index
    %168 = memref.load %arg1[%c0_93, %c27] : memref<1x90xf32, #tpu.memory_space<smem>>
    %169 = vector.broadcast %168 : f32 to vector<1x384xf32>
    %170 = arith.mulf %169, %167 : vector<1x384xf32>
    %171 = arith.addf %165, %170 : vector<1x384xf32>
    %c0_94 = arith.constant 0 : index
    %c0_95 = arith.constant 0 : index
    %c109 = arith.constant 109 : index
    %172 = vector.load %arg3[%c0_94, %c0_95, %c109] : memref<1x2x640xf32, #tpu.memory_space<vmem>>, vector<1x1x384xf32>
    %173 = vector.shape_cast %172 : vector<1x1x384xf32> to vector<1x384xf32>
    %c0_96 = arith.constant 0 : index
    %c28 = arith.constant 28 : index
    %174 = memref.load %arg1[%c0_96, %c28] : memref<1x90xf32, #tpu.memory_space<smem>>
    %175 = vector.broadcast %174 : f32 to vector<1x384xf32>
    %176 = arith.mulf %175, %173 : vector<1x384xf32>
    %177 = arith.addf %171, %176 : vector<1x384xf32>
    %c0_97 = arith.constant 0 : index
    %c0_98 = arith.constant 0 : index
    %c110 = arith.constant 110 : index
    %178 = vector.load %arg3[%c0_97, %c0_98, %c110] : memref<1x2x640xf32, #tpu.memory_space<vmem>>, vector<1x1x384xf32>
    %179 = vector.shape_cast %178 : vector<1x1x384xf32> to vector<1x384xf32>
    %c0_99 = arith.constant 0 : index
    %c29 = arith.constant 29 : index
    %180 = memref.load %arg1[%c0_99, %c29] : memref<1x90xf32, #tpu.memory_space<smem>>
    %181 = vector.broadcast %180 : f32 to vector<1x384xf32>
    %182 = arith.mulf %181, %179 : vector<1x384xf32>
    %183 = arith.addf %177, %182 : vector<1x384xf32>
    %c0_100 = arith.constant 0 : index
    %c0_101 = arith.constant 0 : index
    %c114 = arith.constant 114 : index
    %184 = vector.load %arg3[%c0_100, %c0_101, %c114] : memref<1x2x640xf32, #tpu.memory_space<vmem>>, vector<1x1x384xf32>
    %185 = vector.shape_cast %184 : vector<1x1x384xf32> to vector<1x384xf32>
    %c0_102 = arith.constant 0 : index
    %c30 = arith.constant 30 : index
    %186 = memref.load %arg1[%c0_102, %c30] : memref<1x90xf32, #tpu.memory_space<smem>>
    %187 = vector.broadcast %186 : f32 to vector<1x384xf32>
    %188 = arith.mulf %187, %185 : vector<1x384xf32>
    %189 = arith.addf %183, %188 : vector<1x384xf32>
    %c0_103 = arith.constant 0 : index
    %c0_104 = arith.constant 0 : index
    %c115 = arith.constant 115 : index
    %190 = vector.load %arg3[%c0_103, %c0_104, %c115] : memref<1x2x640xf32, #tpu.memory_space<vmem>>, vector<1x1x384xf32>
    %191 = vector.shape_cast %190 : vector<1x1x384xf32> to vector<1x384xf32>
    %c0_105 = arith.constant 0 : index
    %c31 = arith.constant 31 : index
    %192 = memref.load %arg1[%c0_105, %c31] : memref<1x90xf32, #tpu.memory_space<smem>>
    %193 = vector.broadcast %192 : f32 to vector<1x384xf32>
    %194 = arith.mulf %193, %191 : vector<1x384xf32>
    %195 = arith.addf %189, %194 : vector<1x384xf32>
    %c0_106 = arith.constant 0 : index
    %c0_107 = arith.constant 0 : index
    %c116 = arith.constant 116 : index
    %196 = vector.load %arg3[%c0_106, %c0_107, %c116] : memref<1x2x640xf32, #tpu.memory_space<vmem>>, vector<1x1x384xf32>
    %197 = vector.shape_cast %196 : vector<1x1x384xf32> to vector<1x384xf32>
    %c0_108 = arith.constant 0 : index
    %c32 = arith.constant 32 : index
    %198 = memref.load %arg1[%c0_108, %c32] : memref<1x90xf32, #tpu.memory_space<smem>>
    %199 = vector.broadcast %198 : f32 to vector<1x384xf32>
    %200 = arith.mulf %199, %197 : vector<1x384xf32>
    %201 = arith.addf %195, %200 : vector<1x384xf32>
    %c0_109 = arith.constant 0 : index
    %c0_110 = arith.constant 0 : index
    %c120 = arith.constant 120 : index
    %202 = vector.load %arg3[%c0_109, %c0_110, %c120] : memref<1x2x640xf32, #tpu.memory_space<vmem>>, vector<1x1x384xf32>
    %203 = vector.shape_cast %202 : vector<1x1x384xf32> to vector<1x384xf32>
    %c0_111 = arith.constant 0 : index
    %c33 = arith.constant 33 : index
    %204 = memref.load %arg1[%c0_111, %c33] : memref<1x90xf32, #tpu.memory_space<smem>>
    %205 = vector.broadcast %204 : f32 to vector<1x384xf32>
    %206 = arith.mulf %205, %203 : vector<1x384xf32>
    %207 = arith.addf %201, %206 : vector<1x384xf32>
    %c0_112 = arith.constant 0 : index
    %c0_113 = arith.constant 0 : index
    %c121 = arith.constant 121 : index
    %208 = vector.load %arg3[%c0_112, %c0_113, %c121] : memref<1x2x640xf32, #tpu.memory_space<vmem>>, vector<1x1x384xf32>
    %209 = vector.shape_cast %208 : vector<1x1x384xf32> to vector<1x384xf32>
    %c0_114 = arith.constant 0 : index
    %c34 = arith.constant 34 : index
    %210 = memref.load %arg1[%c0_114, %c34] : memref<1x90xf32, #tpu.memory_space<smem>>
    %211 = vector.broadcast %210 : f32 to vector<1x384xf32>
    %212 = arith.mulf %211, %209 : vector<1x384xf32>
    %213 = arith.addf %207, %212 : vector<1x384xf32>
    %c0_115 = arith.constant 0 : index
    %c0_116 = arith.constant 0 : index
    %c122 = arith.constant 122 : index
    %214 = vector.load %arg3[%c0_115, %c0_116, %c122] : memref<1x2x640xf32, #tpu.memory_space<vmem>>, vector<1x1x384xf32>
    %215 = vector.shape_cast %214 : vector<1x1x384xf32> to vector<1x384xf32>
    %c0_117 = arith.constant 0 : index
    %c35 = arith.constant 35 : index
    %216 = memref.load %arg1[%c0_117, %c35] : memref<1x90xf32, #tpu.memory_space<smem>>
    %217 = vector.broadcast %216 : f32 to vector<1x384xf32>
    %218 = arith.mulf %217, %215 : vector<1x384xf32>
    %219 = arith.addf %213, %218 : vector<1x384xf32>
    %c0_118 = arith.constant 0 : index
    %c0_119 = arith.constant 0 : index
    %c144 = arith.constant 144 : index
    %220 = vector.load %arg3[%c0_118, %c0_119, %c144] : memref<1x2x640xf32, #tpu.memory_space<vmem>>, vector<1x1x384xf32>
    %221 = vector.shape_cast %220 : vector<1x1x384xf32> to vector<1x384xf32>
    %c0_120 = arith.constant 0 : index
    %c36_121 = arith.constant 36 : index
    %222 = memref.load %arg1[%c0_120, %c36_121] : memref<1x90xf32, #tpu.memory_space<smem>>
    %223 = vector.broadcast %222 : f32 to vector<1x384xf32>
    %224 = arith.mulf %223, %221 : vector<1x384xf32>
    %225 = arith.addf %219, %224 : vector<1x384xf32>
    %c0_122 = arith.constant 0 : index
    %c0_123 = arith.constant 0 : index
    %c145 = arith.constant 145 : index
    %226 = vector.load %arg3[%c0_122, %c0_123, %c145] : memref<1x2x640xf32, #tpu.memory_space<vmem>>, vector<1x1x384xf32>
    %227 = vector.shape_cast %226 : vector<1x1x384xf32> to vector<1x384xf32>
    %c0_124 = arith.constant 0 : index
    %c37_125 = arith.constant 37 : index
    %228 = memref.load %arg1[%c0_124, %c37_125] : memref<1x90xf32, #tpu.memory_space<smem>>
    %229 = vector.broadcast %228 : f32 to vector<1x384xf32>
    %230 = arith.mulf %229, %227 : vector<1x384xf32>
    %231 = arith.addf %225, %230 : vector<1x384xf32>
    %c0_126 = arith.constant 0 : index
    %c0_127 = arith.constant 0 : index
    %c146 = arith.constant 146 : index
    %232 = vector.load %arg3[%c0_126, %c0_127, %c146] : memref<1x2x640xf32, #tpu.memory_space<vmem>>, vector<1x1x384xf32>
    %233 = vector.shape_cast %232 : vector<1x1x384xf32> to vector<1x384xf32>
    %c0_128 = arith.constant 0 : index
    %c38_129 = arith.constant 38 : index
    %234 = memref.load %arg1[%c0_128, %c38_129] : memref<1x90xf32, #tpu.memory_space<smem>>
    %235 = vector.broadcast %234 : f32 to vector<1x384xf32>
    %236 = arith.mulf %235, %233 : vector<1x384xf32>
    %237 = arith.addf %231, %236 : vector<1x384xf32>
    %c0_130 = arith.constant 0 : index
    %c0_131 = arith.constant 0 : index
    %c150 = arith.constant 150 : index
    %238 = vector.load %arg3[%c0_130, %c0_131, %c150] : memref<1x2x640xf32, #tpu.memory_space<vmem>>, vector<1x1x384xf32>
    %239 = vector.shape_cast %238 : vector<1x1x384xf32> to vector<1x384xf32>
    %c0_132 = arith.constant 0 : index
    %c39 = arith.constant 39 : index
    %240 = memref.load %arg1[%c0_132, %c39] : memref<1x90xf32, #tpu.memory_space<smem>>
    %241 = vector.broadcast %240 : f32 to vector<1x384xf32>
    %242 = arith.mulf %241, %239 : vector<1x384xf32>
    %243 = arith.addf %237, %242 : vector<1x384xf32>
    %c0_133 = arith.constant 0 : index
    %c0_134 = arith.constant 0 : index
    %c151 = arith.constant 151 : index
    %244 = vector.load %arg3[%c0_133, %c0_134, %c151] : memref<1x2x640xf32, #tpu.memory_space<vmem>>, vector<1x1x384xf32>
    %245 = vector.shape_cast %244 : vector<1x1x384xf32> to vector<1x384xf32>
    %c0_135 = arith.constant 0 : index
    %c40 = arith.constant 40 : index
    %246 = memref.load %arg1[%c0_135, %c40] : memref<1x90xf32, #tpu.memory_space<smem>>
    %247 = vector.broadcast %246 : f32 to vector<1x384xf32>
    %248 = arith.mulf %247, %245 : vector<1x384xf32>
    %249 = arith.addf %243, %248 : vector<1x384xf32>
    %c0_136 = arith.constant 0 : index
    %c0_137 = arith.constant 0 : index
    %c152 = arith.constant 152 : index
    %250 = vector.load %arg3[%c0_136, %c0_137, %c152] : memref<1x2x640xf32, #tpu.memory_space<vmem>>, vector<1x1x384xf32>
    %251 = vector.shape_cast %250 : vector<1x1x384xf32> to vector<1x384xf32>
    %c0_138 = arith.constant 0 : index
    %c41 = arith.constant 41 : index
    %252 = memref.load %arg1[%c0_138, %c41] : memref<1x90xf32, #tpu.memory_space<smem>>
    %253 = vector.broadcast %252 : f32 to vector<1x384xf32>
    %254 = arith.mulf %253, %251 : vector<1x384xf32>
    %255 = arith.addf %249, %254 : vector<1x384xf32>
    %c0_139 = arith.constant 0 : index
    %c0_140 = arith.constant 0 : index
    %c156 = arith.constant 156 : index
    %256 = vector.load %arg3[%c0_139, %c0_140, %c156] : memref<1x2x640xf32, #tpu.memory_space<vmem>>, vector<1x1x384xf32>
    %257 = vector.shape_cast %256 : vector<1x1x384xf32> to vector<1x384xf32>
    %c0_141 = arith.constant 0 : index
    %c42_142 = arith.constant 42 : index
    %258 = memref.load %arg1[%c0_141, %c42_142] : memref<1x90xf32, #tpu.memory_space<smem>>
    %259 = vector.broadcast %258 : f32 to vector<1x384xf32>
    %260 = arith.mulf %259, %257 : vector<1x384xf32>
    %261 = arith.addf %255, %260 : vector<1x384xf32>
    %c0_143 = arith.constant 0 : index
    %c0_144 = arith.constant 0 : index
    %c157 = arith.constant 157 : index
    %262 = vector.load %arg3[%c0_143, %c0_144, %c157] : memref<1x2x640xf32, #tpu.memory_space<vmem>>, vector<1x1x384xf32>
    %263 = vector.shape_cast %262 : vector<1x1x384xf32> to vector<1x384xf32>
    %c0_145 = arith.constant 0 : index
    %c43_146 = arith.constant 43 : index
    %264 = memref.load %arg1[%c0_145, %c43_146] : memref<1x90xf32, #tpu.memory_space<smem>>
    %265 = vector.broadcast %264 : f32 to vector<1x384xf32>
    %266 = arith.mulf %265, %263 : vector<1x384xf32>
    %267 = arith.addf %261, %266 : vector<1x384xf32>
    %c0_147 = arith.constant 0 : index
    %c0_148 = arith.constant 0 : index
    %c158 = arith.constant 158 : index
    %268 = vector.load %arg3[%c0_147, %c0_148, %c158] : memref<1x2x640xf32, #tpu.memory_space<vmem>>, vector<1x1x384xf32>
    %269 = vector.shape_cast %268 : vector<1x1x384xf32> to vector<1x384xf32>
    %c0_149 = arith.constant 0 : index
    %c44_150 = arith.constant 44 : index
    %270 = memref.load %arg1[%c0_149, %c44_150] : memref<1x90xf32, #tpu.memory_space<smem>>
    %271 = vector.broadcast %270 : f32 to vector<1x384xf32>
    %272 = arith.mulf %271, %269 : vector<1x384xf32>
    %273 = arith.addf %267, %272 : vector<1x384xf32>
    %c0_151 = arith.constant 0 : index
    %c1_152 = arith.constant 1 : index
    %c0_153 = arith.constant 0 : index
    %274 = vector.load %arg3[%c0_151, %c1_152, %c0_153] : memref<1x2x640xf32, #tpu.memory_space<vmem>>, vector<1x1x384xf32>
    %275 = vector.shape_cast %274 : vector<1x1x384xf32> to vector<1x384xf32>
    %c0_154 = arith.constant 0 : index
    %c45 = arith.constant 45 : index
    %276 = memref.load %arg1[%c0_154, %c45] : memref<1x90xf32, #tpu.memory_space<smem>>
    %277 = vector.broadcast %276 : f32 to vector<1x384xf32>
    %278 = arith.mulf %277, %275 : vector<1x384xf32>
    %279 = arith.addf %273, %278 : vector<1x384xf32>
    %c0_155 = arith.constant 0 : index
    %c1_156 = arith.constant 1 : index
    %c1_157 = arith.constant 1 : index
    %280 = vector.load %arg3[%c0_155, %c1_156, %c1_157] : memref<1x2x640xf32, #tpu.memory_space<vmem>>, vector<1x1x384xf32>
    %281 = vector.shape_cast %280 : vector<1x1x384xf32> to vector<1x384xf32>
    %c0_158 = arith.constant 0 : index
    %c46 = arith.constant 46 : index
    %282 = memref.load %arg1[%c0_158, %c46] : memref<1x90xf32, #tpu.memory_space<smem>>
    %283 = vector.broadcast %282 : f32 to vector<1x384xf32>
    %284 = arith.mulf %283, %281 : vector<1x384xf32>
    %285 = arith.addf %279, %284 : vector<1x384xf32>
    %c0_159 = arith.constant 0 : index
    %c1_160 = arith.constant 1 : index
    %c2_161 = arith.constant 2 : index
    %286 = vector.load %arg3[%c0_159, %c1_160, %c2_161] : memref<1x2x640xf32, #tpu.memory_space<vmem>>, vector<1x1x384xf32>
    %287 = vector.shape_cast %286 : vector<1x1x384xf32> to vector<1x384xf32>
    %c0_162 = arith.constant 0 : index
    %c47 = arith.constant 47 : index
    %288 = memref.load %arg1[%c0_162, %c47] : memref<1x90xf32, #tpu.memory_space<smem>>
    %289 = vector.broadcast %288 : f32 to vector<1x384xf32>
    %290 = arith.mulf %289, %287 : vector<1x384xf32>
    %291 = arith.addf %285, %290 : vector<1x384xf32>
    %c0_163 = arith.constant 0 : index
    %c1_164 = arith.constant 1 : index
    %c6_165 = arith.constant 6 : index
    %292 = vector.load %arg3[%c0_163, %c1_164, %c6_165] : memref<1x2x640xf32, #tpu.memory_space<vmem>>, vector<1x1x384xf32>
    %293 = vector.shape_cast %292 : vector<1x1x384xf32> to vector<1x384xf32>
    %c0_166 = arith.constant 0 : index
    %c48_167 = arith.constant 48 : index
    %294 = memref.load %arg1[%c0_166, %c48_167] : memref<1x90xf32, #tpu.memory_space<smem>>
    %295 = vector.broadcast %294 : f32 to vector<1x384xf32>
    %296 = arith.mulf %295, %293 : vector<1x384xf32>
    %297 = arith.addf %291, %296 : vector<1x384xf32>
    %c0_168 = arith.constant 0 : index
    %c1_169 = arith.constant 1 : index
    %c7_170 = arith.constant 7 : index
    %298 = vector.load %arg3[%c0_168, %c1_169, %c7_170] : memref<1x2x640xf32, #tpu.memory_space<vmem>>, vector<1x1x384xf32>
    %299 = vector.shape_cast %298 : vector<1x1x384xf32> to vector<1x384xf32>
    %c0_171 = arith.constant 0 : index
    %c49_172 = arith.constant 49 : index
    %300 = memref.load %arg1[%c0_171, %c49_172] : memref<1x90xf32, #tpu.memory_space<smem>>
    %301 = vector.broadcast %300 : f32 to vector<1x384xf32>
    %302 = arith.mulf %301, %299 : vector<1x384xf32>
    %303 = arith.addf %297, %302 : vector<1x384xf32>
    %c0_173 = arith.constant 0 : index
    %c1_174 = arith.constant 1 : index
    %c8_175 = arith.constant 8 : index
    %304 = vector.load %arg3[%c0_173, %c1_174, %c8_175] : memref<1x2x640xf32, #tpu.memory_space<vmem>>, vector<1x1x384xf32>
    %305 = vector.shape_cast %304 : vector<1x1x384xf32> to vector<1x384xf32>
    %c0_176 = arith.constant 0 : index
    %c50_177 = arith.constant 50 : index
    %306 = memref.load %arg1[%c0_176, %c50_177] : memref<1x90xf32, #tpu.memory_space<smem>>
    %307 = vector.broadcast %306 : f32 to vector<1x384xf32>
    %308 = arith.mulf %307, %305 : vector<1x384xf32>
    %309 = arith.addf %303, %308 : vector<1x384xf32>
    %c0_178 = arith.constant 0 : index
    %c1_179 = arith.constant 1 : index
    %c12_180 = arith.constant 12 : index
    %310 = vector.load %arg3[%c0_178, %c1_179, %c12_180] : memref<1x2x640xf32, #tpu.memory_space<vmem>>, vector<1x1x384xf32>
    %311 = vector.shape_cast %310 : vector<1x1x384xf32> to vector<1x384xf32>
    %c0_181 = arith.constant 0 : index
    %c51 = arith.constant 51 : index
    %312 = memref.load %arg1[%c0_181, %c51] : memref<1x90xf32, #tpu.memory_space<smem>>
    %313 = vector.broadcast %312 : f32 to vector<1x384xf32>
    %314 = arith.mulf %313, %311 : vector<1x384xf32>
    %315 = arith.addf %309, %314 : vector<1x384xf32>
    %c0_182 = arith.constant 0 : index
    %c1_183 = arith.constant 1 : index
    %c13_184 = arith.constant 13 : index
    %316 = vector.load %arg3[%c0_182, %c1_183, %c13_184] : memref<1x2x640xf32, #tpu.memory_space<vmem>>, vector<1x1x384xf32>
    %317 = vector.shape_cast %316 : vector<1x1x384xf32> to vector<1x384xf32>
    %c0_185 = arith.constant 0 : index
    %c52 = arith.constant 52 : index
    %318 = memref.load %arg1[%c0_185, %c52] : memref<1x90xf32, #tpu.memory_space<smem>>
    %319 = vector.broadcast %318 : f32 to vector<1x384xf32>
    %320 = arith.mulf %319, %317 : vector<1x384xf32>
    %321 = arith.addf %315, %320 : vector<1x384xf32>
    %c0_186 = arith.constant 0 : index
    %c1_187 = arith.constant 1 : index
    %c14_188 = arith.constant 14 : index
    %322 = vector.load %arg3[%c0_186, %c1_187, %c14_188] : memref<1x2x640xf32, #tpu.memory_space<vmem>>, vector<1x1x384xf32>
    %323 = vector.shape_cast %322 : vector<1x1x384xf32> to vector<1x384xf32>
    %c0_189 = arith.constant 0 : index
    %c53 = arith.constant 53 : index
    %324 = memref.load %arg1[%c0_189, %c53] : memref<1x90xf32, #tpu.memory_space<smem>>
    %325 = vector.broadcast %324 : f32 to vector<1x384xf32>
    %326 = arith.mulf %325, %323 : vector<1x384xf32>
    %327 = arith.addf %321, %326 : vector<1x384xf32>
    %c0_190 = arith.constant 0 : index
    %c1_191 = arith.constant 1 : index
    %c36_192 = arith.constant 36 : index
    %328 = vector.load %arg3[%c0_190, %c1_191, %c36_192] : memref<1x2x640xf32, #tpu.memory_space<vmem>>, vector<1x1x384xf32>
    %329 = vector.shape_cast %328 : vector<1x1x384xf32> to vector<1x384xf32>
    %c0_193 = arith.constant 0 : index
    %c54 = arith.constant 54 : index
    %330 = memref.load %arg1[%c0_193, %c54] : memref<1x90xf32, #tpu.memory_space<smem>>
    %331 = vector.broadcast %330 : f32 to vector<1x384xf32>
    %332 = arith.mulf %331, %329 : vector<1x384xf32>
    %333 = arith.addf %327, %332 : vector<1x384xf32>
    %c0_194 = arith.constant 0 : index
    %c1_195 = arith.constant 1 : index
    %c37_196 = arith.constant 37 : index
    %334 = vector.load %arg3[%c0_194, %c1_195, %c37_196] : memref<1x2x640xf32, #tpu.memory_space<vmem>>, vector<1x1x384xf32>
    %335 = vector.shape_cast %334 : vector<1x1x384xf32> to vector<1x384xf32>
    %c0_197 = arith.constant 0 : index
    %c55 = arith.constant 55 : index
    %336 = memref.load %arg1[%c0_197, %c55] : memref<1x90xf32, #tpu.memory_space<smem>>
    %337 = vector.broadcast %336 : f32 to vector<1x384xf32>
    %338 = arith.mulf %337, %335 : vector<1x384xf32>
    %339 = arith.addf %333, %338 : vector<1x384xf32>
    %c0_198 = arith.constant 0 : index
    %c1_199 = arith.constant 1 : index
    %c38_200 = arith.constant 38 : index
    %340 = vector.load %arg3[%c0_198, %c1_199, %c38_200] : memref<1x2x640xf32, #tpu.memory_space<vmem>>, vector<1x1x384xf32>
    %341 = vector.shape_cast %340 : vector<1x1x384xf32> to vector<1x384xf32>
    %c0_201 = arith.constant 0 : index
    %c56 = arith.constant 56 : index
    %342 = memref.load %arg1[%c0_201, %c56] : memref<1x90xf32, #tpu.memory_space<smem>>
    %343 = vector.broadcast %342 : f32 to vector<1x384xf32>
    %344 = arith.mulf %343, %341 : vector<1x384xf32>
    %345 = arith.addf %339, %344 : vector<1x384xf32>
    %c0_202 = arith.constant 0 : index
    %c1_203 = arith.constant 1 : index
    %c42_204 = arith.constant 42 : index
    %346 = vector.load %arg3[%c0_202, %c1_203, %c42_204] : memref<1x2x640xf32, #tpu.memory_space<vmem>>, vector<1x1x384xf32>
    %347 = vector.shape_cast %346 : vector<1x1x384xf32> to vector<1x384xf32>
    %c0_205 = arith.constant 0 : index
    %c57 = arith.constant 57 : index
    %348 = memref.load %arg1[%c0_205, %c57] : memref<1x90xf32, #tpu.memory_space<smem>>
    %349 = vector.broadcast %348 : f32 to vector<1x384xf32>
    %350 = arith.mulf %349, %347 : vector<1x384xf32>
    %351 = arith.addf %345, %350 : vector<1x384xf32>
    %c0_206 = arith.constant 0 : index
    %c1_207 = arith.constant 1 : index
    %c43_208 = arith.constant 43 : index
    %352 = vector.load %arg3[%c0_206, %c1_207, %c43_208] : memref<1x2x640xf32, #tpu.memory_space<vmem>>, vector<1x1x384xf32>
    %353 = vector.shape_cast %352 : vector<1x1x384xf32> to vector<1x384xf32>
    %c0_209 = arith.constant 0 : index
    %c58 = arith.constant 58 : index
    %354 = memref.load %arg1[%c0_209, %c58] : memref<1x90xf32, #tpu.memory_space<smem>>
    %355 = vector.broadcast %354 : f32 to vector<1x384xf32>
    %356 = arith.mulf %355, %353 : vector<1x384xf32>
    %357 = arith.addf %351, %356 : vector<1x384xf32>
    %c0_210 = arith.constant 0 : index
    %c1_211 = arith.constant 1 : index
    %c44_212 = arith.constant 44 : index
    %358 = vector.load %arg3[%c0_210, %c1_211, %c44_212] : memref<1x2x640xf32, #tpu.memory_space<vmem>>, vector<1x1x384xf32>
    %359 = vector.shape_cast %358 : vector<1x1x384xf32> to vector<1x384xf32>
    %c0_213 = arith.constant 0 : index
    %c59 = arith.constant 59 : index
    %360 = memref.load %arg1[%c0_213, %c59] : memref<1x90xf32, #tpu.memory_space<smem>>
    %361 = vector.broadcast %360 : f32 to vector<1x384xf32>
    %362 = arith.mulf %361, %359 : vector<1x384xf32>
    %363 = arith.addf %357, %362 : vector<1x384xf32>
    %c0_214 = arith.constant 0 : index
    %c1_215 = arith.constant 1 : index
    %c48_216 = arith.constant 48 : index
    %364 = vector.load %arg3[%c0_214, %c1_215, %c48_216] : memref<1x2x640xf32, #tpu.memory_space<vmem>>, vector<1x1x384xf32>
    %365 = vector.shape_cast %364 : vector<1x1x384xf32> to vector<1x384xf32>
    %c0_217 = arith.constant 0 : index
    %c60 = arith.constant 60 : index
    %366 = memref.load %arg1[%c0_217, %c60] : memref<1x90xf32, #tpu.memory_space<smem>>
    %367 = vector.broadcast %366 : f32 to vector<1x384xf32>
    %368 = arith.mulf %367, %365 : vector<1x384xf32>
    %369 = arith.addf %363, %368 : vector<1x384xf32>
    %c0_218 = arith.constant 0 : index
    %c1_219 = arith.constant 1 : index
    %c49_220 = arith.constant 49 : index
    %370 = vector.load %arg3[%c0_218, %c1_219, %c49_220] : memref<1x2x640xf32, #tpu.memory_space<vmem>>, vector<1x1x384xf32>
    %371 = vector.shape_cast %370 : vector<1x1x384xf32> to vector<1x384xf32>
    %c0_221 = arith.constant 0 : index
    %c61 = arith.constant 61 : index
    %372 = memref.load %arg1[%c0_221, %c61] : memref<1x90xf32, #tpu.memory_space<smem>>
    %373 = vector.broadcast %372 : f32 to vector<1x384xf32>
    %374 = arith.mulf %373, %371 : vector<1x384xf32>
    %375 = arith.addf %369, %374 : vector<1x384xf32>
    %c0_222 = arith.constant 0 : index
    %c1_223 = arith.constant 1 : index
    %c50_224 = arith.constant 50 : index
    %376 = vector.load %arg3[%c0_222, %c1_223, %c50_224] : memref<1x2x640xf32, #tpu.memory_space<vmem>>, vector<1x1x384xf32>
    %377 = vector.shape_cast %376 : vector<1x1x384xf32> to vector<1x384xf32>
    %c0_225 = arith.constant 0 : index
    %c62 = arith.constant 62 : index
    %378 = memref.load %arg1[%c0_225, %c62] : memref<1x90xf32, #tpu.memory_space<smem>>
    %379 = vector.broadcast %378 : f32 to vector<1x384xf32>
    %380 = arith.mulf %379, %377 : vector<1x384xf32>
    %381 = arith.addf %375, %380 : vector<1x384xf32>
    %c0_226 = arith.constant 0 : index
    %c1_227 = arith.constant 1 : index
    %c72_228 = arith.constant 72 : index
    %382 = vector.load %arg3[%c0_226, %c1_227, %c72_228] : memref<1x2x640xf32, #tpu.memory_space<vmem>>, vector<1x1x384xf32>
    %383 = vector.shape_cast %382 : vector<1x1x384xf32> to vector<1x384xf32>
    %c0_229 = arith.constant 0 : index
    %c63 = arith.constant 63 : index
    %384 = memref.load %arg1[%c0_229, %c63] : memref<1x90xf32, #tpu.memory_space<smem>>
    %385 = vector.broadcast %384 : f32 to vector<1x384xf32>
    %386 = arith.mulf %385, %383 : vector<1x384xf32>
    %387 = arith.addf %381, %386 : vector<1x384xf32>
    %c0_230 = arith.constant 0 : index
    %c1_231 = arith.constant 1 : index
    %c73_232 = arith.constant 73 : index
    %388 = vector.load %arg3[%c0_230, %c1_231, %c73_232] : memref<1x2x640xf32, #tpu.memory_space<vmem>>, vector<1x1x384xf32>
    %389 = vector.shape_cast %388 : vector<1x1x384xf32> to vector<1x384xf32>
    %c0_233 = arith.constant 0 : index
    %c64 = arith.constant 64 : index
    %390 = memref.load %arg1[%c0_233, %c64] : memref<1x90xf32, #tpu.memory_space<smem>>
    %391 = vector.broadcast %390 : f32 to vector<1x384xf32>
    %392 = arith.mulf %391, %389 : vector<1x384xf32>
    %393 = arith.addf %387, %392 : vector<1x384xf32>
    %c0_234 = arith.constant 0 : index
    %c1_235 = arith.constant 1 : index
    %c74_236 = arith.constant 74 : index
    %394 = vector.load %arg3[%c0_234, %c1_235, %c74_236] : memref<1x2x640xf32, #tpu.memory_space<vmem>>, vector<1x1x384xf32>
    %395 = vector.shape_cast %394 : vector<1x1x384xf32> to vector<1x384xf32>
    %c0_237 = arith.constant 0 : index
    %c65 = arith.constant 65 : index
    %396 = memref.load %arg1[%c0_237, %c65] : memref<1x90xf32, #tpu.memory_space<smem>>
    %397 = vector.broadcast %396 : f32 to vector<1x384xf32>
    %398 = arith.mulf %397, %395 : vector<1x384xf32>
    %399 = arith.addf %393, %398 : vector<1x384xf32>
    %c0_238 = arith.constant 0 : index
    %c1_239 = arith.constant 1 : index
    %c78_240 = arith.constant 78 : index
    %400 = vector.load %arg3[%c0_238, %c1_239, %c78_240] : memref<1x2x640xf32, #tpu.memory_space<vmem>>, vector<1x1x384xf32>
    %401 = vector.shape_cast %400 : vector<1x1x384xf32> to vector<1x384xf32>
    %c0_241 = arith.constant 0 : index
    %c66 = arith.constant 66 : index
    %402 = memref.load %arg1[%c0_241, %c66] : memref<1x90xf32, #tpu.memory_space<smem>>
    %403 = vector.broadcast %402 : f32 to vector<1x384xf32>
    %404 = arith.mulf %403, %401 : vector<1x384xf32>
    %405 = arith.addf %399, %404 : vector<1x384xf32>
    %c0_242 = arith.constant 0 : index
    %c1_243 = arith.constant 1 : index
    %c79_244 = arith.constant 79 : index
    %406 = vector.load %arg3[%c0_242, %c1_243, %c79_244] : memref<1x2x640xf32, #tpu.memory_space<vmem>>, vector<1x1x384xf32>
    %407 = vector.shape_cast %406 : vector<1x1x384xf32> to vector<1x384xf32>
    %c0_245 = arith.constant 0 : index
    %c67 = arith.constant 67 : index
    %408 = memref.load %arg1[%c0_245, %c67] : memref<1x90xf32, #tpu.memory_space<smem>>
    %409 = vector.broadcast %408 : f32 to vector<1x384xf32>
    %410 = arith.mulf %409, %407 : vector<1x384xf32>
    %411 = arith.addf %405, %410 : vector<1x384xf32>
    %c0_246 = arith.constant 0 : index
    %c1_247 = arith.constant 1 : index
    %c80_248 = arith.constant 80 : index
    %412 = vector.load %arg3[%c0_246, %c1_247, %c80_248] : memref<1x2x640xf32, #tpu.memory_space<vmem>>, vector<1x1x384xf32>
    %413 = vector.shape_cast %412 : vector<1x1x384xf32> to vector<1x384xf32>
    %c0_249 = arith.constant 0 : index
    %c68 = arith.constant 68 : index
    %414 = memref.load %arg1[%c0_249, %c68] : memref<1x90xf32, #tpu.memory_space<smem>>
    %415 = vector.broadcast %414 : f32 to vector<1x384xf32>
    %416 = arith.mulf %415, %413 : vector<1x384xf32>
    %417 = arith.addf %411, %416 : vector<1x384xf32>
    %c0_250 = arith.constant 0 : index
    %c1_251 = arith.constant 1 : index
    %c84_252 = arith.constant 84 : index
    %418 = vector.load %arg3[%c0_250, %c1_251, %c84_252] : memref<1x2x640xf32, #tpu.memory_space<vmem>>, vector<1x1x384xf32>
    %419 = vector.shape_cast %418 : vector<1x1x384xf32> to vector<1x384xf32>
    %c0_253 = arith.constant 0 : index
    %c69 = arith.constant 69 : index
    %420 = memref.load %arg1[%c0_253, %c69] : memref<1x90xf32, #tpu.memory_space<smem>>
    %421 = vector.broadcast %420 : f32 to vector<1x384xf32>
    %422 = arith.mulf %421, %419 : vector<1x384xf32>
    %423 = arith.addf %417, %422 : vector<1x384xf32>
    %c0_254 = arith.constant 0 : index
    %c1_255 = arith.constant 1 : index
    %c85_256 = arith.constant 85 : index
    %424 = vector.load %arg3[%c0_254, %c1_255, %c85_256] : memref<1x2x640xf32, #tpu.memory_space<vmem>>, vector<1x1x384xf32>
    %425 = vector.shape_cast %424 : vector<1x1x384xf32> to vector<1x384xf32>
    %c0_257 = arith.constant 0 : index
    %c70 = arith.constant 70 : index
    %426 = memref.load %arg1[%c0_257, %c70] : memref<1x90xf32, #tpu.memory_space<smem>>
    %427 = vector.broadcast %426 : f32 to vector<1x384xf32>
    %428 = arith.mulf %427, %425 : vector<1x384xf32>
    %429 = arith.addf %423, %428 : vector<1x384xf32>
    %c0_258 = arith.constant 0 : index
    %c1_259 = arith.constant 1 : index
    %c86_260 = arith.constant 86 : index
    %430 = vector.load %arg3[%c0_258, %c1_259, %c86_260] : memref<1x2x640xf32, #tpu.memory_space<vmem>>, vector<1x1x384xf32>
    %431 = vector.shape_cast %430 : vector<1x1x384xf32> to vector<1x384xf32>
    %c0_261 = arith.constant 0 : index
    %c71 = arith.constant 71 : index
    %432 = memref.load %arg1[%c0_261, %c71] : memref<1x90xf32, #tpu.memory_space<smem>>
    %433 = vector.broadcast %432 : f32 to vector<1x384xf32>
    %434 = arith.mulf %433, %431 : vector<1x384xf32>
    %435 = arith.addf %429, %434 : vector<1x384xf32>
    %c0_262 = arith.constant 0 : index
    %c1_263 = arith.constant 1 : index
    %c108_264 = arith.constant 108 : index
    %436 = vector.load %arg3[%c0_262, %c1_263, %c108_264] : memref<1x2x640xf32, #tpu.memory_space<vmem>>, vector<1x1x384xf32>
    %437 = vector.shape_cast %436 : vector<1x1x384xf32> to vector<1x384xf32>
    %c0_265 = arith.constant 0 : index
    %c72_266 = arith.constant 72 : index
    %438 = memref.load %arg1[%c0_265, %c72_266] : memref<1x90xf32, #tpu.memory_space<smem>>
    %439 = vector.broadcast %438 : f32 to vector<1x384xf32>
    %440 = arith.mulf %439, %437 : vector<1x384xf32>
    %441 = arith.addf %435, %440 : vector<1x384xf32>
    %c0_267 = arith.constant 0 : index
    %c1_268 = arith.constant 1 : index
    %c109_269 = arith.constant 109 : index
    %442 = vector.load %arg3[%c0_267, %c1_268, %c109_269] : memref<1x2x640xf32, #tpu.memory_space<vmem>>, vector<1x1x384xf32>
    %443 = vector.shape_cast %442 : vector<1x1x384xf32> to vector<1x384xf32>
    %c0_270 = arith.constant 0 : index
    %c73_271 = arith.constant 73 : index
    %444 = memref.load %arg1[%c0_270, %c73_271] : memref<1x90xf32, #tpu.memory_space<smem>>
    %445 = vector.broadcast %444 : f32 to vector<1x384xf32>
    %446 = arith.mulf %445, %443 : vector<1x384xf32>
    %447 = arith.addf %441, %446 : vector<1x384xf32>
    %c0_272 = arith.constant 0 : index
    %c1_273 = arith.constant 1 : index
    %c110_274 = arith.constant 110 : index
    %448 = vector.load %arg3[%c0_272, %c1_273, %c110_274] : memref<1x2x640xf32, #tpu.memory_space<vmem>>, vector<1x1x384xf32>
    %449 = vector.shape_cast %448 : vector<1x1x384xf32> to vector<1x384xf32>
    %c0_275 = arith.constant 0 : index
    %c74_276 = arith.constant 74 : index
    %450 = memref.load %arg1[%c0_275, %c74_276] : memref<1x90xf32, #tpu.memory_space<smem>>
    %451 = vector.broadcast %450 : f32 to vector<1x384xf32>
    %452 = arith.mulf %451, %449 : vector<1x384xf32>
    %453 = arith.addf %447, %452 : vector<1x384xf32>
    %c0_277 = arith.constant 0 : index
    %c1_278 = arith.constant 1 : index
    %c114_279 = arith.constant 114 : index
    %454 = vector.load %arg3[%c0_277, %c1_278, %c114_279] : memref<1x2x640xf32, #tpu.memory_space<vmem>>, vector<1x1x384xf32>
    %455 = vector.shape_cast %454 : vector<1x1x384xf32> to vector<1x384xf32>
    %c0_280 = arith.constant 0 : index
    %c75 = arith.constant 75 : index
    %456 = memref.load %arg1[%c0_280, %c75] : memref<1x90xf32, #tpu.memory_space<smem>>
    %457 = vector.broadcast %456 : f32 to vector<1x384xf32>
    %458 = arith.mulf %457, %455 : vector<1x384xf32>
    %459 = arith.addf %453, %458 : vector<1x384xf32>
    %c0_281 = arith.constant 0 : index
    %c1_282 = arith.constant 1 : index
    %c115_283 = arith.constant 115 : index
    %460 = vector.load %arg3[%c0_281, %c1_282, %c115_283] : memref<1x2x640xf32, #tpu.memory_space<vmem>>, vector<1x1x384xf32>
    %461 = vector.shape_cast %460 : vector<1x1x384xf32> to vector<1x384xf32>
    %c0_284 = arith.constant 0 : index
    %c76 = arith.constant 76 : index
    %462 = memref.load %arg1[%c0_284, %c76] : memref<1x90xf32, #tpu.memory_space<smem>>
    %463 = vector.broadcast %462 : f32 to vector<1x384xf32>
    %464 = arith.mulf %463, %461 : vector<1x384xf32>
    %465 = arith.addf %459, %464 : vector<1x384xf32>
    %c0_285 = arith.constant 0 : index
    %c1_286 = arith.constant 1 : index
    %c116_287 = arith.constant 116 : index
    %466 = vector.load %arg3[%c0_285, %c1_286, %c116_287] : memref<1x2x640xf32, #tpu.memory_space<vmem>>, vector<1x1x384xf32>
    %467 = vector.shape_cast %466 : vector<1x1x384xf32> to vector<1x384xf32>
    %c0_288 = arith.constant 0 : index
    %c77 = arith.constant 77 : index
    %468 = memref.load %arg1[%c0_288, %c77] : memref<1x90xf32, #tpu.memory_space<smem>>
    %469 = vector.broadcast %468 : f32 to vector<1x384xf32>
    %470 = arith.mulf %469, %467 : vector<1x384xf32>
    %471 = arith.addf %465, %470 : vector<1x384xf32>
    %c0_289 = arith.constant 0 : index
    %c1_290 = arith.constant 1 : index
    %c120_291 = arith.constant 120 : index
    %472 = vector.load %arg3[%c0_289, %c1_290, %c120_291] : memref<1x2x640xf32, #tpu.memory_space<vmem>>, vector<1x1x384xf32>
    %473 = vector.shape_cast %472 : vector<1x1x384xf32> to vector<1x384xf32>
    %c0_292 = arith.constant 0 : index
    %c78_293 = arith.constant 78 : index
    %474 = memref.load %arg1[%c0_292, %c78_293] : memref<1x90xf32, #tpu.memory_space<smem>>
    %475 = vector.broadcast %474 : f32 to vector<1x384xf32>
    %476 = arith.mulf %475, %473 : vector<1x384xf32>
    %477 = arith.addf %471, %476 : vector<1x384xf32>
    %c0_294 = arith.constant 0 : index
    %c1_295 = arith.constant 1 : index
    %c121_296 = arith.constant 121 : index
    %478 = vector.load %arg3[%c0_294, %c1_295, %c121_296] : memref<1x2x640xf32, #tpu.memory_space<vmem>>, vector<1x1x384xf32>
    %479 = vector.shape_cast %478 : vector<1x1x384xf32> to vector<1x384xf32>
    %c0_297 = arith.constant 0 : index
    %c79_298 = arith.constant 79 : index
    %480 = memref.load %arg1[%c0_297, %c79_298] : memref<1x90xf32, #tpu.memory_space<smem>>
    %481 = vector.broadcast %480 : f32 to vector<1x384xf32>
    %482 = arith.mulf %481, %479 : vector<1x384xf32>
    %483 = arith.addf %477, %482 : vector<1x384xf32>
    %c0_299 = arith.constant 0 : index
    %c1_300 = arith.constant 1 : index
    %c122_301 = arith.constant 122 : index
    %484 = vector.load %arg3[%c0_299, %c1_300, %c122_301] : memref<1x2x640xf32, #tpu.memory_space<vmem>>, vector<1x1x384xf32>
    %485 = vector.shape_cast %484 : vector<1x1x384xf32> to vector<1x384xf32>
    %c0_302 = arith.constant 0 : index
    %c80_303 = arith.constant 80 : index
    %486 = memref.load %arg1[%c0_302, %c80_303] : memref<1x90xf32, #tpu.memory_space<smem>>
    %487 = vector.broadcast %486 : f32 to vector<1x384xf32>
    %488 = arith.mulf %487, %485 : vector<1x384xf32>
    %489 = arith.addf %483, %488 : vector<1x384xf32>
    %c0_304 = arith.constant 0 : index
    %c1_305 = arith.constant 1 : index
    %c144_306 = arith.constant 144 : index
    %490 = vector.load %arg3[%c0_304, %c1_305, %c144_306] : memref<1x2x640xf32, #tpu.memory_space<vmem>>, vector<1x1x384xf32>
    %491 = vector.shape_cast %490 : vector<1x1x384xf32> to vector<1x384xf32>
    %c0_307 = arith.constant 0 : index
    %c81 = arith.constant 81 : index
    %492 = memref.load %arg1[%c0_307, %c81] : memref<1x90xf32, #tpu.memory_space<smem>>
    %493 = vector.broadcast %492 : f32 to vector<1x384xf32>
    %494 = arith.mulf %493, %491 : vector<1x384xf32>
    %495 = arith.addf %489, %494 : vector<1x384xf32>
    %c0_308 = arith.constant 0 : index
    %c1_309 = arith.constant 1 : index
    %c145_310 = arith.constant 145 : index
    %496 = vector.load %arg3[%c0_308, %c1_309, %c145_310] : memref<1x2x640xf32, #tpu.memory_space<vmem>>, vector<1x1x384xf32>
    %497 = vector.shape_cast %496 : vector<1x1x384xf32> to vector<1x384xf32>
    %c0_311 = arith.constant 0 : index
    %c82 = arith.constant 82 : index
    %498 = memref.load %arg1[%c0_311, %c82] : memref<1x90xf32, #tpu.memory_space<smem>>
    %499 = vector.broadcast %498 : f32 to vector<1x384xf32>
    %500 = arith.mulf %499, %497 : vector<1x384xf32>
    %501 = arith.addf %495, %500 : vector<1x384xf32>
    %c0_312 = arith.constant 0 : index
    %c1_313 = arith.constant 1 : index
    %c146_314 = arith.constant 146 : index
    %502 = vector.load %arg3[%c0_312, %c1_313, %c146_314] : memref<1x2x640xf32, #tpu.memory_space<vmem>>, vector<1x1x384xf32>
    %503 = vector.shape_cast %502 : vector<1x1x384xf32> to vector<1x384xf32>
    %c0_315 = arith.constant 0 : index
    %c83 = arith.constant 83 : index
    %504 = memref.load %arg1[%c0_315, %c83] : memref<1x90xf32, #tpu.memory_space<smem>>
    %505 = vector.broadcast %504 : f32 to vector<1x384xf32>
    %506 = arith.mulf %505, %503 : vector<1x384xf32>
    %507 = arith.addf %501, %506 : vector<1x384xf32>
    %c0_316 = arith.constant 0 : index
    %c1_317 = arith.constant 1 : index
    %c150_318 = arith.constant 150 : index
    %508 = vector.load %arg3[%c0_316, %c1_317, %c150_318] : memref<1x2x640xf32, #tpu.memory_space<vmem>>, vector<1x1x384xf32>
    %509 = vector.shape_cast %508 : vector<1x1x384xf32> to vector<1x384xf32>
    %c0_319 = arith.constant 0 : index
    %c84_320 = arith.constant 84 : index
    %510 = memref.load %arg1[%c0_319, %c84_320] : memref<1x90xf32, #tpu.memory_space<smem>>
    %511 = vector.broadcast %510 : f32 to vector<1x384xf32>
    %512 = arith.mulf %511, %509 : vector<1x384xf32>
    %513 = arith.addf %507, %512 : vector<1x384xf32>
    %c0_321 = arith.constant 0 : index
    %c1_322 = arith.constant 1 : index
    %c151_323 = arith.constant 151 : index
    %514 = vector.load %arg3[%c0_321, %c1_322, %c151_323] : memref<1x2x640xf32, #tpu.memory_space<vmem>>, vector<1x1x384xf32>
    %515 = vector.shape_cast %514 : vector<1x1x384xf32> to vector<1x384xf32>
    %c0_324 = arith.constant 0 : index
    %c85_325 = arith.constant 85 : index
    %516 = memref.load %arg1[%c0_324, %c85_325] : memref<1x90xf32, #tpu.memory_space<smem>>
    %517 = vector.broadcast %516 : f32 to vector<1x384xf32>
    %518 = arith.mulf %517, %515 : vector<1x384xf32>
    %519 = arith.addf %513, %518 : vector<1x384xf32>
    %c0_326 = arith.constant 0 : index
    %c1_327 = arith.constant 1 : index
    %c152_328 = arith.constant 152 : index
    %520 = vector.load %arg3[%c0_326, %c1_327, %c152_328] : memref<1x2x640xf32, #tpu.memory_space<vmem>>, vector<1x1x384xf32>
    %521 = vector.shape_cast %520 : vector<1x1x384xf32> to vector<1x384xf32>
    %c0_329 = arith.constant 0 : index
    %c86_330 = arith.constant 86 : index
    %522 = memref.load %arg1[%c0_329, %c86_330] : memref<1x90xf32, #tpu.memory_space<smem>>
    %523 = vector.broadcast %522 : f32 to vector<1x384xf32>
    %524 = arith.mulf %523, %521 : vector<1x384xf32>
    %525 = arith.addf %519, %524 : vector<1x384xf32>
    %c0_331 = arith.constant 0 : index
    %c1_332 = arith.constant 1 : index
    %c156_333 = arith.constant 156 : index
    %526 = vector.load %arg3[%c0_331, %c1_332, %c156_333] : memref<1x2x640xf32, #tpu.memory_space<vmem>>, vector<1x1x384xf32>
    %527 = vector.shape_cast %526 : vector<1x1x384xf32> to vector<1x384xf32>
    %c0_334 = arith.constant 0 : index
    %c87 = arith.constant 87 : index
    %528 = memref.load %arg1[%c0_334, %c87] : memref<1x90xf32, #tpu.memory_space<smem>>
    %529 = vector.broadcast %528 : f32 to vector<1x384xf32>
    %530 = arith.mulf %529, %527 : vector<1x384xf32>
    %531 = arith.addf %525, %530 : vector<1x384xf32>
    %c0_335 = arith.constant 0 : index
    %c1_336 = arith.constant 1 : index
    %c157_337 = arith.constant 157 : index
    %532 = vector.load %arg3[%c0_335, %c1_336, %c157_337] : memref<1x2x640xf32, #tpu.memory_space<vmem>>, vector<1x1x384xf32>
    %533 = vector.shape_cast %532 : vector<1x1x384xf32> to vector<1x384xf32>
    %c0_338 = arith.constant 0 : index
    %c88 = arith.constant 88 : index
    %534 = memref.load %arg1[%c0_338, %c88] : memref<1x90xf32, #tpu.memory_space<smem>>
    %535 = vector.broadcast %534 : f32 to vector<1x384xf32>
    %536 = arith.mulf %535, %533 : vector<1x384xf32>
    %537 = arith.addf %531, %536 : vector<1x384xf32>
    %c0_339 = arith.constant 0 : index
    %c1_340 = arith.constant 1 : index
    %c158_341 = arith.constant 158 : index
    %538 = vector.load %arg3[%c0_339, %c1_340, %c158_341] : memref<1x2x640xf32, #tpu.memory_space<vmem>>, vector<1x1x384xf32>
    %539 = vector.shape_cast %538 : vector<1x1x384xf32> to vector<1x384xf32>
    %c0_342 = arith.constant 0 : index
    %c89 = arith.constant 89 : index
    %540 = memref.load %arg1[%c0_342, %c89] : memref<1x90xf32, #tpu.memory_space<smem>>
    %541 = vector.broadcast %540 : f32 to vector<1x384xf32>
    %542 = arith.mulf %541, %539 : vector<1x384xf32>
    %543 = arith.addf %537, %542 : vector<1x384xf32>
    %cst_343 = arith.constant 0.000000e+00 : f32
    %544 = vector.broadcast %cst_343 : f32 to vector<1x384xf32>
    %545 = arith.maximumf %543, %544 : vector<1x384xf32>
    %c0_344 = arith.constant 0 : index
    %c0_345 = arith.constant 0 : index
    %c0_346 = arith.constant 0 : index
    %546 = vector.load %arg4[%c0_344, %c0_345, %c0_346] : memref<1x1x384xf32, #tpu.memory_space<vmem>>, vector<1x1x384xf32>
    %547 = vector.shape_cast %546 : vector<1x1x384xf32> to vector<1x384xf32>
    %548 = vector.shape_cast %545 : vector<1x384xf32> to vector<1x1x384xf32>
    tpu.vector_store %arg4[%c0_344, %c0_345, %c0_346], %548 {strides = array<i32>} : memref<1x1x384xf32, #tpu.memory_space<vmem>>, vector<1x1x384xf32>,
    return
  }
  func.func @transform_0(%arg0: i32) -> (i32, i32) {
    %c0_i32 = arith.constant 0 : i32
    %c0_i32_0 = arith.constant 0 : i32
    %c0_i32_1 = arith.constant 0 : i32
    return %c0_i32, %c0_i32_0 : i32, i32
  }
  func.func @transform_1(%arg0: i32) -> i32 {
    %c0_i32 = arith.constant 0 : i32
    %c0_i32_0 = arith.constant 0 : i32
    return %c0_i32 : i32
  }
  func.func @transform_2(%arg0: i32) -> (i32, i32, i32) {
    %c0_i32 = arith.constant 0 : i32
    %c0_i32_0 = arith.constant 0 : i32
    %c0_i32_1 = arith.constant 0 : i32
    return %arg0, %c0_i32, %c0_i32_0 : i32, i32, i32
  }
  func.func @transform_3(%arg0: i32) -> (i32, i32, i32) {
    %c0_i32 = arith.constant 0 : i32
    %c0_i32_0 = arith.constant 0 : i32
    %c0_i32_1 = arith.constant 0 : i32
    return %arg0, %c0_i32, %c0_i32_0 : i32, i32, i32
  }
}

module attributes {stable_mosaic.version = 11 : i64} {
  func.func @kernel(%arg0: i32, %arg1: memref<1x45xf32, #tpu.memory_space<smem>>, %arg2: memref<1xf32, #tpu.memory_space<smem>>, %arg3: memref<1x1x2560xf32, #tpu.memory_space<vmem>>, %arg4: memref<1x1x2048xf32, #tpu.memory_space<vmem>>) attributes {dimension_semantics = [#tpu.dimension_semantics<parallel>], iteration_bounds = array<i64: 2>, scalar_prefetch = 0 : i64, scratch_operands = 0 : i64, tpu.core_type = #tpu.core_type<tc>, window_params = [{transform_indices = @transform_0, window_bounds = array<i64: 1, 45>}, {transform_indices = @transform_1, window_bounds = array<i64: 1>}, {transform_indices = @transform_2, window_bounds = array<i64: 1, 1, 2560>}, {transform_indices = @transform_3, window_bounds = array<i64: 1, 1, 2048>}]} {
    %cst = arith.constant 0.000000e+00 : f32
    %0 = vector.broadcast %cst : f32 to vector<1x2048xf32>
    %c0 = arith.constant 0 : index
    %1 = memref.load %arg2[%c0] : memref<1xf32, #tpu.memory_space<smem>>
    %2 = vector.broadcast %1 : f32 to vector<1x2048xf32>
    %3 = arith.addf %0, %2 : vector<1x2048xf32>
    %c0_0 = arith.constant 0 : index
    %c0_1 = arith.constant 0 : index
    %c0_2 = arith.constant 0 : index
    %4 = vector.load %arg3[%c0_0, %c0_1, %c0_2] : memref<1x1x2560xf32, #tpu.memory_space<vmem>>, vector<1x1x2048xf32>
    %5 = vector.shape_cast %4 : vector<1x1x2048xf32> to vector<1x2048xf32>
    %c0_3 = arith.constant 0 : index
    %c0_4 = arith.constant 0 : index
    %6 = memref.load %arg1[%c0_3, %c0_4] : memref<1x45xf32, #tpu.memory_space<smem>>
    %7 = vector.broadcast %6 : f32 to vector<1x2048xf32>
    %8 = arith.mulf %7, %5 : vector<1x2048xf32>
    %9 = arith.addf %3, %8 : vector<1x2048xf32>
    %c0_5 = arith.constant 0 : index
    %c0_6 = arith.constant 0 : index
    %c1 = arith.constant 1 : index
    %10 = vector.load %arg3[%c0_5, %c0_6, %c1] : memref<1x1x2560xf32, #tpu.memory_space<vmem>>, vector<1x1x2048xf32>
    %11 = vector.shape_cast %10 : vector<1x1x2048xf32> to vector<1x2048xf32>
    %c0_7 = arith.constant 0 : index
    %c1_8 = arith.constant 1 : index
    %12 = memref.load %arg1[%c0_7, %c1_8] : memref<1x45xf32, #tpu.memory_space<smem>>
    %13 = vector.broadcast %12 : f32 to vector<1x2048xf32>
    %14 = arith.mulf %13, %11 : vector<1x2048xf32>
    %15 = arith.addf %9, %14 : vector<1x2048xf32>
    %c0_9 = arith.constant 0 : index
    %c0_10 = arith.constant 0 : index
    %c2 = arith.constant 2 : index
    %16 = vector.load %arg3[%c0_9, %c0_10, %c2] : memref<1x1x2560xf32, #tpu.memory_space<vmem>>, vector<1x1x2048xf32>
    %17 = vector.shape_cast %16 : vector<1x1x2048xf32> to vector<1x2048xf32>
    %c0_11 = arith.constant 0 : index
    %c2_12 = arith.constant 2 : index
    %18 = memref.load %arg1[%c0_11, %c2_12] : memref<1x45xf32, #tpu.memory_space<smem>>
    %19 = vector.broadcast %18 : f32 to vector<1x2048xf32>
    %20 = arith.mulf %19, %17 : vector<1x2048xf32>
    %21 = arith.addf %15, %20 : vector<1x2048xf32>
    %c0_13 = arith.constant 0 : index
    %c0_14 = arith.constant 0 : index
    %c10 = arith.constant 10 : index
    %22 = vector.load %arg3[%c0_13, %c0_14, %c10] : memref<1x1x2560xf32, #tpu.memory_space<vmem>>, vector<1x1x2048xf32>
    %23 = vector.shape_cast %22 : vector<1x1x2048xf32> to vector<1x2048xf32>
    %c0_15 = arith.constant 0 : index
    %c3 = arith.constant 3 : index
    %24 = memref.load %arg1[%c0_15, %c3] : memref<1x45xf32, #tpu.memory_space<smem>>
    %25 = vector.broadcast %24 : f32 to vector<1x2048xf32>
    %26 = arith.mulf %25, %23 : vector<1x2048xf32>
    %27 = arith.addf %21, %26 : vector<1x2048xf32>
    %c0_16 = arith.constant 0 : index
    %c0_17 = arith.constant 0 : index
    %c11 = arith.constant 11 : index
    %28 = vector.load %arg3[%c0_16, %c0_17, %c11] : memref<1x1x2560xf32, #tpu.memory_space<vmem>>, vector<1x1x2048xf32>
    %29 = vector.shape_cast %28 : vector<1x1x2048xf32> to vector<1x2048xf32>
    %c0_18 = arith.constant 0 : index
    %c4 = arith.constant 4 : index
    %30 = memref.load %arg1[%c0_18, %c4] : memref<1x45xf32, #tpu.memory_space<smem>>
    %31 = vector.broadcast %30 : f32 to vector<1x2048xf32>
    %32 = arith.mulf %31, %29 : vector<1x2048xf32>
    %33 = arith.addf %27, %32 : vector<1x2048xf32>
    %c0_19 = arith.constant 0 : index
    %c0_20 = arith.constant 0 : index
    %c12 = arith.constant 12 : index
    %34 = vector.load %arg3[%c0_19, %c0_20, %c12] : memref<1x1x2560xf32, #tpu.memory_space<vmem>>, vector<1x1x2048xf32>
    %35 = vector.shape_cast %34 : vector<1x1x2048xf32> to vector<1x2048xf32>
    %c0_21 = arith.constant 0 : index
    %c5 = arith.constant 5 : index
    %36 = memref.load %arg1[%c0_21, %c5] : memref<1x45xf32, #tpu.memory_space<smem>>
    %37 = vector.broadcast %36 : f32 to vector<1x2048xf32>
    %38 = arith.mulf %37, %35 : vector<1x2048xf32>
    %39 = arith.addf %33, %38 : vector<1x2048xf32>
    %c0_22 = arith.constant 0 : index
    %c0_23 = arith.constant 0 : index
    %c20 = arith.constant 20 : index
    %40 = vector.load %arg3[%c0_22, %c0_23, %c20] : memref<1x1x2560xf32, #tpu.memory_space<vmem>>, vector<1x1x2048xf32>
    %41 = vector.shape_cast %40 : vector<1x1x2048xf32> to vector<1x2048xf32>
    %c0_24 = arith.constant 0 : index
    %c6 = arith.constant 6 : index
    %42 = memref.load %arg1[%c0_24, %c6] : memref<1x45xf32, #tpu.memory_space<smem>>
    %43 = vector.broadcast %42 : f32 to vector<1x2048xf32>
    %44 = arith.mulf %43, %41 : vector<1x2048xf32>
    %45 = arith.addf %39, %44 : vector<1x2048xf32>
    %c0_25 = arith.constant 0 : index
    %c0_26 = arith.constant 0 : index
    %c21 = arith.constant 21 : index
    %46 = vector.load %arg3[%c0_25, %c0_26, %c21] : memref<1x1x2560xf32, #tpu.memory_space<vmem>>, vector<1x1x2048xf32>
    %47 = vector.shape_cast %46 : vector<1x1x2048xf32> to vector<1x2048xf32>
    %c0_27 = arith.constant 0 : index
    %c7 = arith.constant 7 : index
    %48 = memref.load %arg1[%c0_27, %c7] : memref<1x45xf32, #tpu.memory_space<smem>>
    %49 = vector.broadcast %48 : f32 to vector<1x2048xf32>
    %50 = arith.mulf %49, %47 : vector<1x2048xf32>
    %51 = arith.addf %45, %50 : vector<1x2048xf32>
    %c0_28 = arith.constant 0 : index
    %c0_29 = arith.constant 0 : index
    %c22 = arith.constant 22 : index
    %52 = vector.load %arg3[%c0_28, %c0_29, %c22] : memref<1x1x2560xf32, #tpu.memory_space<vmem>>, vector<1x1x2048xf32>
    %53 = vector.shape_cast %52 : vector<1x1x2048xf32> to vector<1x2048xf32>
    %c0_30 = arith.constant 0 : index
    %c8 = arith.constant 8 : index
    %54 = memref.load %arg1[%c0_30, %c8] : memref<1x45xf32, #tpu.memory_space<smem>>
    %55 = vector.broadcast %54 : f32 to vector<1x2048xf32>
    %56 = arith.mulf %55, %53 : vector<1x2048xf32>
    %57 = arith.addf %51, %56 : vector<1x2048xf32>
    %c0_31 = arith.constant 0 : index
    %c0_32 = arith.constant 0 : index
    %c100 = arith.constant 100 : index
    %58 = vector.load %arg3[%c0_31, %c0_32, %c100] : memref<1x1x2560xf32, #tpu.memory_space<vmem>>, vector<1x1x2048xf32>
    %59 = vector.shape_cast %58 : vector<1x1x2048xf32> to vector<1x2048xf32>
    %c0_33 = arith.constant 0 : index
    %c9 = arith.constant 9 : index
    %60 = memref.load %arg1[%c0_33, %c9] : memref<1x45xf32, #tpu.memory_space<smem>>
    %61 = vector.broadcast %60 : f32 to vector<1x2048xf32>
    %62 = arith.mulf %61, %59 : vector<1x2048xf32>
    %63 = arith.addf %57, %62 : vector<1x2048xf32>
    %c0_34 = arith.constant 0 : index
    %c0_35 = arith.constant 0 : index
    %c101 = arith.constant 101 : index
    %64 = vector.load %arg3[%c0_34, %c0_35, %c101] : memref<1x1x2560xf32, #tpu.memory_space<vmem>>, vector<1x1x2048xf32>
    %65 = vector.shape_cast %64 : vector<1x1x2048xf32> to vector<1x2048xf32>
    %c0_36 = arith.constant 0 : index
    %c10_37 = arith.constant 10 : index
    %66 = memref.load %arg1[%c0_36, %c10_37] : memref<1x45xf32, #tpu.memory_space<smem>>
    %67 = vector.broadcast %66 : f32 to vector<1x2048xf32>
    %68 = arith.mulf %67, %65 : vector<1x2048xf32>
    %69 = arith.addf %63, %68 : vector<1x2048xf32>
    %c0_38 = arith.constant 0 : index
    %c0_39 = arith.constant 0 : index
    %c102 = arith.constant 102 : index
    %70 = vector.load %arg3[%c0_38, %c0_39, %c102] : memref<1x1x2560xf32, #tpu.memory_space<vmem>>, vector<1x1x2048xf32>
    %71 = vector.shape_cast %70 : vector<1x1x2048xf32> to vector<1x2048xf32>
    %c0_40 = arith.constant 0 : index
    %c11_41 = arith.constant 11 : index
    %72 = memref.load %arg1[%c0_40, %c11_41] : memref<1x45xf32, #tpu.memory_space<smem>>
    %73 = vector.broadcast %72 : f32 to vector<1x2048xf32>
    %74 = arith.mulf %73, %71 : vector<1x2048xf32>
    %75 = arith.addf %69, %74 : vector<1x2048xf32>
    %c0_42 = arith.constant 0 : index
    %c0_43 = arith.constant 0 : index
    %c110 = arith.constant 110 : index
    %76 = vector.load %arg3[%c0_42, %c0_43, %c110] : memref<1x1x2560xf32, #tpu.memory_space<vmem>>, vector<1x1x2048xf32>
    %77 = vector.shape_cast %76 : vector<1x1x2048xf32> to vector<1x2048xf32>
    %c0_44 = arith.constant 0 : index
    %c12_45 = arith.constant 12 : index
    %78 = memref.load %arg1[%c0_44, %c12_45] : memref<1x45xf32, #tpu.memory_space<smem>>
    %79 = vector.broadcast %78 : f32 to vector<1x2048xf32>
    %80 = arith.mulf %79, %77 : vector<1x2048xf32>
    %81 = arith.addf %75, %80 : vector<1x2048xf32>
    %c0_46 = arith.constant 0 : index
    %c0_47 = arith.constant 0 : index
    %c111 = arith.constant 111 : index
    %82 = vector.load %arg3[%c0_46, %c0_47, %c111] : memref<1x1x2560xf32, #tpu.memory_space<vmem>>, vector<1x1x2048xf32>
    %83 = vector.shape_cast %82 : vector<1x1x2048xf32> to vector<1x2048xf32>
    %c0_48 = arith.constant 0 : index
    %c13 = arith.constant 13 : index
    %84 = memref.load %arg1[%c0_48, %c13] : memref<1x45xf32, #tpu.memory_space<smem>>
    %85 = vector.broadcast %84 : f32 to vector<1x2048xf32>
    %86 = arith.mulf %85, %83 : vector<1x2048xf32>
    %87 = arith.addf %81, %86 : vector<1x2048xf32>
    %c0_49 = arith.constant 0 : index
    %c0_50 = arith.constant 0 : index
    %c112 = arith.constant 112 : index
    %88 = vector.load %arg3[%c0_49, %c0_50, %c112] : memref<1x1x2560xf32, #tpu.memory_space<vmem>>, vector<1x1x2048xf32>
    %89 = vector.shape_cast %88 : vector<1x1x2048xf32> to vector<1x2048xf32>
    %c0_51 = arith.constant 0 : index
    %c14 = arith.constant 14 : index
    %90 = memref.load %arg1[%c0_51, %c14] : memref<1x45xf32, #tpu.memory_space<smem>>
    %91 = vector.broadcast %90 : f32 to vector<1x2048xf32>
    %92 = arith.mulf %91, %89 : vector<1x2048xf32>
    %93 = arith.addf %87, %92 : vector<1x2048xf32>
    %c0_52 = arith.constant 0 : index
    %c0_53 = arith.constant 0 : index
    %c120 = arith.constant 120 : index
    %94 = vector.load %arg3[%c0_52, %c0_53, %c120] : memref<1x1x2560xf32, #tpu.memory_space<vmem>>, vector<1x1x2048xf32>
    %95 = vector.shape_cast %94 : vector<1x1x2048xf32> to vector<1x2048xf32>
    %c0_54 = arith.constant 0 : index
    %c15 = arith.constant 15 : index
    %96 = memref.load %arg1[%c0_54, %c15] : memref<1x45xf32, #tpu.memory_space<smem>>
    %97 = vector.broadcast %96 : f32 to vector<1x2048xf32>
    %98 = arith.mulf %97, %95 : vector<1x2048xf32>
    %99 = arith.addf %93, %98 : vector<1x2048xf32>
    %c0_55 = arith.constant 0 : index
    %c0_56 = arith.constant 0 : index
    %c121 = arith.constant 121 : index
    %100 = vector.load %arg3[%c0_55, %c0_56, %c121] : memref<1x1x2560xf32, #tpu.memory_space<vmem>>, vector<1x1x2048xf32>
    %101 = vector.shape_cast %100 : vector<1x1x2048xf32> to vector<1x2048xf32>
    %c0_57 = arith.constant 0 : index
    %c16 = arith.constant 16 : index
    %102 = memref.load %arg1[%c0_57, %c16] : memref<1x45xf32, #tpu.memory_space<smem>>
    %103 = vector.broadcast %102 : f32 to vector<1x2048xf32>
    %104 = arith.mulf %103, %101 : vector<1x2048xf32>
    %105 = arith.addf %99, %104 : vector<1x2048xf32>
    %c0_58 = arith.constant 0 : index
    %c0_59 = arith.constant 0 : index
    %c122 = arith.constant 122 : index
    %106 = vector.load %arg3[%c0_58, %c0_59, %c122] : memref<1x1x2560xf32, #tpu.memory_space<vmem>>, vector<1x1x2048xf32>
    %107 = vector.shape_cast %106 : vector<1x1x2048xf32> to vector<1x2048xf32>
    %c0_60 = arith.constant 0 : index
    %c17 = arith.constant 17 : index
    %108 = memref.load %arg1[%c0_60, %c17] : memref<1x45xf32, #tpu.memory_space<smem>>
    %109 = vector.broadcast %108 : f32 to vector<1x2048xf32>
    %110 = arith.mulf %109, %107 : vector<1x2048xf32>
    %111 = arith.addf %105, %110 : vector<1x2048xf32>
    %c0_61 = arith.constant 0 : index
    %c0_62 = arith.constant 0 : index
    %c200 = arith.constant 200 : index
    %112 = vector.load %arg3[%c0_61, %c0_62, %c200] : memref<1x1x2560xf32, #tpu.memory_space<vmem>>, vector<1x1x2048xf32>
    %113 = vector.shape_cast %112 : vector<1x1x2048xf32> to vector<1x2048xf32>
    %c0_63 = arith.constant 0 : index
    %c18 = arith.constant 18 : index
    %114 = memref.load %arg1[%c0_63, %c18] : memref<1x45xf32, #tpu.memory_space<smem>>
    %115 = vector.broadcast %114 : f32 to vector<1x2048xf32>
    %116 = arith.mulf %115, %113 : vector<1x2048xf32>
    %117 = arith.addf %111, %116 : vector<1x2048xf32>
    %c0_64 = arith.constant 0 : index
    %c0_65 = arith.constant 0 : index
    %c201 = arith.constant 201 : index
    %118 = vector.load %arg3[%c0_64, %c0_65, %c201] : memref<1x1x2560xf32, #tpu.memory_space<vmem>>, vector<1x1x2048xf32>
    %119 = vector.shape_cast %118 : vector<1x1x2048xf32> to vector<1x2048xf32>
    %c0_66 = arith.constant 0 : index
    %c19 = arith.constant 19 : index
    %120 = memref.load %arg1[%c0_66, %c19] : memref<1x45xf32, #tpu.memory_space<smem>>
    %121 = vector.broadcast %120 : f32 to vector<1x2048xf32>
    %122 = arith.mulf %121, %119 : vector<1x2048xf32>
    %123 = arith.addf %117, %122 : vector<1x2048xf32>
    %c0_67 = arith.constant 0 : index
    %c0_68 = arith.constant 0 : index
    %c202 = arith.constant 202 : index
    %124 = vector.load %arg3[%c0_67, %c0_68, %c202] : memref<1x1x2560xf32, #tpu.memory_space<vmem>>, vector<1x1x2048xf32>
    %125 = vector.shape_cast %124 : vector<1x1x2048xf32> to vector<1x2048xf32>
    %c0_69 = arith.constant 0 : index
    %c20_70 = arith.constant 20 : index
    %126 = memref.load %arg1[%c0_69, %c20_70] : memref<1x45xf32, #tpu.memory_space<smem>>
    %127 = vector.broadcast %126 : f32 to vector<1x2048xf32>
    %128 = arith.mulf %127, %125 : vector<1x2048xf32>
    %129 = arith.addf %123, %128 : vector<1x2048xf32>
    %c0_71 = arith.constant 0 : index
    %c0_72 = arith.constant 0 : index
    %c210 = arith.constant 210 : index
    %130 = vector.load %arg3[%c0_71, %c0_72, %c210] : memref<1x1x2560xf32, #tpu.memory_space<vmem>>, vector<1x1x2048xf32>
    %131 = vector.shape_cast %130 : vector<1x1x2048xf32> to vector<1x2048xf32>
    %c0_73 = arith.constant 0 : index
    %c21_74 = arith.constant 21 : index
    %132 = memref.load %arg1[%c0_73, %c21_74] : memref<1x45xf32, #tpu.memory_space<smem>>
    %133 = vector.broadcast %132 : f32 to vector<1x2048xf32>
    %134 = arith.mulf %133, %131 : vector<1x2048xf32>
    %135 = arith.addf %129, %134 : vector<1x2048xf32>
    %c0_75 = arith.constant 0 : index
    %c0_76 = arith.constant 0 : index
    %c211 = arith.constant 211 : index
    %136 = vector.load %arg3[%c0_75, %c0_76, %c211] : memref<1x1x2560xf32, #tpu.memory_space<vmem>>, vector<1x1x2048xf32>
    %137 = vector.shape_cast %136 : vector<1x1x2048xf32> to vector<1x2048xf32>
    %c0_77 = arith.constant 0 : index
    %c22_78 = arith.constant 22 : index
    %138 = memref.load %arg1[%c0_77, %c22_78] : memref<1x45xf32, #tpu.memory_space<smem>>
    %139 = vector.broadcast %138 : f32 to vector<1x2048xf32>
    %140 = arith.mulf %139, %137 : vector<1x2048xf32>
    %141 = arith.addf %135, %140 : vector<1x2048xf32>
    %c0_79 = arith.constant 0 : index
    %c0_80 = arith.constant 0 : index
    %c212 = arith.constant 212 : index
    %142 = vector.load %arg3[%c0_79, %c0_80, %c212] : memref<1x1x2560xf32, #tpu.memory_space<vmem>>, vector<1x1x2048xf32>
    %143 = vector.shape_cast %142 : vector<1x1x2048xf32> to vector<1x2048xf32>
    %c0_81 = arith.constant 0 : index
    %c23 = arith.constant 23 : index
    %144 = memref.load %arg1[%c0_81, %c23] : memref<1x45xf32, #tpu.memory_space<smem>>
    %145 = vector.broadcast %144 : f32 to vector<1x2048xf32>
    %146 = arith.mulf %145, %143 : vector<1x2048xf32>
    %147 = arith.addf %141, %146 : vector<1x2048xf32>
    %c0_82 = arith.constant 0 : index
    %c0_83 = arith.constant 0 : index
    %c220 = arith.constant 220 : index
    %148 = vector.load %arg3[%c0_82, %c0_83, %c220] : memref<1x1x2560xf32, #tpu.memory_space<vmem>>, vector<1x1x2048xf32>
    %149 = vector.shape_cast %148 : vector<1x1x2048xf32> to vector<1x2048xf32>
    %c0_84 = arith.constant 0 : index
    %c24 = arith.constant 24 : index
    %150 = memref.load %arg1[%c0_84, %c24] : memref<1x45xf32, #tpu.memory_space<smem>>
    %151 = vector.broadcast %150 : f32 to vector<1x2048xf32>
    %152 = arith.mulf %151, %149 : vector<1x2048xf32>
    %153 = arith.addf %147, %152 : vector<1x2048xf32>
    %c0_85 = arith.constant 0 : index
    %c0_86 = arith.constant 0 : index
    %c221 = arith.constant 221 : index
    %154 = vector.load %arg3[%c0_85, %c0_86, %c221] : memref<1x1x2560xf32, #tpu.memory_space<vmem>>, vector<1x1x2048xf32>
    %155 = vector.shape_cast %154 : vector<1x1x2048xf32> to vector<1x2048xf32>
    %c0_87 = arith.constant 0 : index
    %c25 = arith.constant 25 : index
    %156 = memref.load %arg1[%c0_87, %c25] : memref<1x45xf32, #tpu.memory_space<smem>>
    %157 = vector.broadcast %156 : f32 to vector<1x2048xf32>
    %158 = arith.mulf %157, %155 : vector<1x2048xf32>
    %159 = arith.addf %153, %158 : vector<1x2048xf32>
    %c0_88 = arith.constant 0 : index
    %c0_89 = arith.constant 0 : index
    %c222 = arith.constant 222 : index
    %160 = vector.load %arg3[%c0_88, %c0_89, %c222] : memref<1x1x2560xf32, #tpu.memory_space<vmem>>, vector<1x1x2048xf32>
    %161 = vector.shape_cast %160 : vector<1x1x2048xf32> to vector<1x2048xf32>
    %c0_90 = arith.constant 0 : index
    %c26 = arith.constant 26 : index
    %162 = memref.load %arg1[%c0_90, %c26] : memref<1x45xf32, #tpu.memory_space<smem>>
    %163 = vector.broadcast %162 : f32 to vector<1x2048xf32>
    %164 = arith.mulf %163, %161 : vector<1x2048xf32>
    %165 = arith.addf %159, %164 : vector<1x2048xf32>
    %c0_91 = arith.constant 0 : index
    %c0_92 = arith.constant 0 : index
    %c300 = arith.constant 300 : index
    %166 = vector.load %arg3[%c0_91, %c0_92, %c300] : memref<1x1x2560xf32, #tpu.memory_space<vmem>>, vector<1x1x2048xf32>
    %167 = vector.shape_cast %166 : vector<1x1x2048xf32> to vector<1x2048xf32>
    %c0_93 = arith.constant 0 : index
    %c27 = arith.constant 27 : index
    %168 = memref.load %arg1[%c0_93, %c27] : memref<1x45xf32, #tpu.memory_space<smem>>
    %169 = vector.broadcast %168 : f32 to vector<1x2048xf32>
    %170 = arith.mulf %169, %167 : vector<1x2048xf32>
    %171 = arith.addf %165, %170 : vector<1x2048xf32>
    %c0_94 = arith.constant 0 : index
    %c0_95 = arith.constant 0 : index
    %c301 = arith.constant 301 : index
    %172 = vector.load %arg3[%c0_94, %c0_95, %c301] : memref<1x1x2560xf32, #tpu.memory_space<vmem>>, vector<1x1x2048xf32>
    %173 = vector.shape_cast %172 : vector<1x1x2048xf32> to vector<1x2048xf32>
    %c0_96 = arith.constant 0 : index
    %c28 = arith.constant 28 : index
    %174 = memref.load %arg1[%c0_96, %c28] : memref<1x45xf32, #tpu.memory_space<smem>>
    %175 = vector.broadcast %174 : f32 to vector<1x2048xf32>
    %176 = arith.mulf %175, %173 : vector<1x2048xf32>
    %177 = arith.addf %171, %176 : vector<1x2048xf32>
    %c0_97 = arith.constant 0 : index
    %c0_98 = arith.constant 0 : index
    %c302 = arith.constant 302 : index
    %178 = vector.load %arg3[%c0_97, %c0_98, %c302] : memref<1x1x2560xf32, #tpu.memory_space<vmem>>, vector<1x1x2048xf32>
    %179 = vector.shape_cast %178 : vector<1x1x2048xf32> to vector<1x2048xf32>
    %c0_99 = arith.constant 0 : index
    %c29 = arith.constant 29 : index
    %180 = memref.load %arg1[%c0_99, %c29] : memref<1x45xf32, #tpu.memory_space<smem>>
    %181 = vector.broadcast %180 : f32 to vector<1x2048xf32>
    %182 = arith.mulf %181, %179 : vector<1x2048xf32>
    %183 = arith.addf %177, %182 : vector<1x2048xf32>
    %c0_100 = arith.constant 0 : index
    %c0_101 = arith.constant 0 : index
    %c310 = arith.constant 310 : index
    %184 = vector.load %arg3[%c0_100, %c0_101, %c310] : memref<1x1x2560xf32, #tpu.memory_space<vmem>>, vector<1x1x2048xf32>
    %185 = vector.shape_cast %184 : vector<1x1x2048xf32> to vector<1x2048xf32>
    %c0_102 = arith.constant 0 : index
    %c30 = arith.constant 30 : index
    %186 = memref.load %arg1[%c0_102, %c30] : memref<1x45xf32, #tpu.memory_space<smem>>
    %187 = vector.broadcast %186 : f32 to vector<1x2048xf32>
    %188 = arith.mulf %187, %185 : vector<1x2048xf32>
    %189 = arith.addf %183, %188 : vector<1x2048xf32>
    %c0_103 = arith.constant 0 : index
    %c0_104 = arith.constant 0 : index
    %c311 = arith.constant 311 : index
    %190 = vector.load %arg3[%c0_103, %c0_104, %c311] : memref<1x1x2560xf32, #tpu.memory_space<vmem>>, vector<1x1x2048xf32>
    %191 = vector.shape_cast %190 : vector<1x1x2048xf32> to vector<1x2048xf32>
    %c0_105 = arith.constant 0 : index
    %c31 = arith.constant 31 : index
    %192 = memref.load %arg1[%c0_105, %c31] : memref<1x45xf32, #tpu.memory_space<smem>>
    %193 = vector.broadcast %192 : f32 to vector<1x2048xf32>
    %194 = arith.mulf %193, %191 : vector<1x2048xf32>
    %195 = arith.addf %189, %194 : vector<1x2048xf32>
    %c0_106 = arith.constant 0 : index
    %c0_107 = arith.constant 0 : index
    %c312 = arith.constant 312 : index
    %196 = vector.load %arg3[%c0_106, %c0_107, %c312] : memref<1x1x2560xf32, #tpu.memory_space<vmem>>, vector<1x1x2048xf32>
    %197 = vector.shape_cast %196 : vector<1x1x2048xf32> to vector<1x2048xf32>
    %c0_108 = arith.constant 0 : index
    %c32 = arith.constant 32 : index
    %198 = memref.load %arg1[%c0_108, %c32] : memref<1x45xf32, #tpu.memory_space<smem>>
    %199 = vector.broadcast %198 : f32 to vector<1x2048xf32>
    %200 = arith.mulf %199, %197 : vector<1x2048xf32>
    %201 = arith.addf %195, %200 : vector<1x2048xf32>
    %c0_109 = arith.constant 0 : index
    %c0_110 = arith.constant 0 : index
    %c320 = arith.constant 320 : index
    %202 = vector.load %arg3[%c0_109, %c0_110, %c320] : memref<1x1x2560xf32, #tpu.memory_space<vmem>>, vector<1x1x2048xf32>
    %203 = vector.shape_cast %202 : vector<1x1x2048xf32> to vector<1x2048xf32>
    %c0_111 = arith.constant 0 : index
    %c33 = arith.constant 33 : index
    %204 = memref.load %arg1[%c0_111, %c33] : memref<1x45xf32, #tpu.memory_space<smem>>
    %205 = vector.broadcast %204 : f32 to vector<1x2048xf32>
    %206 = arith.mulf %205, %203 : vector<1x2048xf32>
    %207 = arith.addf %201, %206 : vector<1x2048xf32>
    %c0_112 = arith.constant 0 : index
    %c0_113 = arith.constant 0 : index
    %c321 = arith.constant 321 : index
    %208 = vector.load %arg3[%c0_112, %c0_113, %c321] : memref<1x1x2560xf32, #tpu.memory_space<vmem>>, vector<1x1x2048xf32>
    %209 = vector.shape_cast %208 : vector<1x1x2048xf32> to vector<1x2048xf32>
    %c0_114 = arith.constant 0 : index
    %c34 = arith.constant 34 : index
    %210 = memref.load %arg1[%c0_114, %c34] : memref<1x45xf32, #tpu.memory_space<smem>>
    %211 = vector.broadcast %210 : f32 to vector<1x2048xf32>
    %212 = arith.mulf %211, %209 : vector<1x2048xf32>
    %213 = arith.addf %207, %212 : vector<1x2048xf32>
    %c0_115 = arith.constant 0 : index
    %c0_116 = arith.constant 0 : index
    %c322 = arith.constant 322 : index
    %214 = vector.load %arg3[%c0_115, %c0_116, %c322] : memref<1x1x2560xf32, #tpu.memory_space<vmem>>, vector<1x1x2048xf32>
    %215 = vector.shape_cast %214 : vector<1x1x2048xf32> to vector<1x2048xf32>
    %c0_117 = arith.constant 0 : index
    %c35 = arith.constant 35 : index
    %216 = memref.load %arg1[%c0_117, %c35] : memref<1x45xf32, #tpu.memory_space<smem>>
    %217 = vector.broadcast %216 : f32 to vector<1x2048xf32>
    %218 = arith.mulf %217, %215 : vector<1x2048xf32>
    %219 = arith.addf %213, %218 : vector<1x2048xf32>
    %c0_118 = arith.constant 0 : index
    %c0_119 = arith.constant 0 : index
    %c400 = arith.constant 400 : index
    %220 = vector.load %arg3[%c0_118, %c0_119, %c400] : memref<1x1x2560xf32, #tpu.memory_space<vmem>>, vector<1x1x2048xf32>
    %221 = vector.shape_cast %220 : vector<1x1x2048xf32> to vector<1x2048xf32>
    %c0_120 = arith.constant 0 : index
    %c36 = arith.constant 36 : index
    %222 = memref.load %arg1[%c0_120, %c36] : memref<1x45xf32, #tpu.memory_space<smem>>
    %223 = vector.broadcast %222 : f32 to vector<1x2048xf32>
    %224 = arith.mulf %223, %221 : vector<1x2048xf32>
    %225 = arith.addf %219, %224 : vector<1x2048xf32>
    %c0_121 = arith.constant 0 : index
    %c0_122 = arith.constant 0 : index
    %c401 = arith.constant 401 : index
    %226 = vector.load %arg3[%c0_121, %c0_122, %c401] : memref<1x1x2560xf32, #tpu.memory_space<vmem>>, vector<1x1x2048xf32>
    %227 = vector.shape_cast %226 : vector<1x1x2048xf32> to vector<1x2048xf32>
    %c0_123 = arith.constant 0 : index
    %c37 = arith.constant 37 : index
    %228 = memref.load %arg1[%c0_123, %c37] : memref<1x45xf32, #tpu.memory_space<smem>>
    %229 = vector.broadcast %228 : f32 to vector<1x2048xf32>
    %230 = arith.mulf %229, %227 : vector<1x2048xf32>
    %231 = arith.addf %225, %230 : vector<1x2048xf32>
    %c0_124 = arith.constant 0 : index
    %c0_125 = arith.constant 0 : index
    %c402 = arith.constant 402 : index
    %232 = vector.load %arg3[%c0_124, %c0_125, %c402] : memref<1x1x2560xf32, #tpu.memory_space<vmem>>, vector<1x1x2048xf32>
    %233 = vector.shape_cast %232 : vector<1x1x2048xf32> to vector<1x2048xf32>
    %c0_126 = arith.constant 0 : index
    %c38 = arith.constant 38 : index
    %234 = memref.load %arg1[%c0_126, %c38] : memref<1x45xf32, #tpu.memory_space<smem>>
    %235 = vector.broadcast %234 : f32 to vector<1x2048xf32>
    %236 = arith.mulf %235, %233 : vector<1x2048xf32>
    %237 = arith.addf %231, %236 : vector<1x2048xf32>
    %c0_127 = arith.constant 0 : index
    %c0_128 = arith.constant 0 : index
    %c410 = arith.constant 410 : index
    %238 = vector.load %arg3[%c0_127, %c0_128, %c410] : memref<1x1x2560xf32, #tpu.memory_space<vmem>>, vector<1x1x2048xf32>
    %239 = vector.shape_cast %238 : vector<1x1x2048xf32> to vector<1x2048xf32>
    %c0_129 = arith.constant 0 : index
    %c39 = arith.constant 39 : index
    %240 = memref.load %arg1[%c0_129, %c39] : memref<1x45xf32, #tpu.memory_space<smem>>
    %241 = vector.broadcast %240 : f32 to vector<1x2048xf32>
    %242 = arith.mulf %241, %239 : vector<1x2048xf32>
    %243 = arith.addf %237, %242 : vector<1x2048xf32>
    %c0_130 = arith.constant 0 : index
    %c0_131 = arith.constant 0 : index
    %c411 = arith.constant 411 : index
    %244 = vector.load %arg3[%c0_130, %c0_131, %c411] : memref<1x1x2560xf32, #tpu.memory_space<vmem>>, vector<1x1x2048xf32>
    %245 = vector.shape_cast %244 : vector<1x1x2048xf32> to vector<1x2048xf32>
    %c0_132 = arith.constant 0 : index
    %c40 = arith.constant 40 : index
    %246 = memref.load %arg1[%c0_132, %c40] : memref<1x45xf32, #tpu.memory_space<smem>>
    %247 = vector.broadcast %246 : f32 to vector<1x2048xf32>
    %248 = arith.mulf %247, %245 : vector<1x2048xf32>
    %249 = arith.addf %243, %248 : vector<1x2048xf32>
    %c0_133 = arith.constant 0 : index
    %c0_134 = arith.constant 0 : index
    %c412 = arith.constant 412 : index
    %250 = vector.load %arg3[%c0_133, %c0_134, %c412] : memref<1x1x2560xf32, #tpu.memory_space<vmem>>, vector<1x1x2048xf32>
    %251 = vector.shape_cast %250 : vector<1x1x2048xf32> to vector<1x2048xf32>
    %c0_135 = arith.constant 0 : index
    %c41 = arith.constant 41 : index
    %252 = memref.load %arg1[%c0_135, %c41] : memref<1x45xf32, #tpu.memory_space<smem>>
    %253 = vector.broadcast %252 : f32 to vector<1x2048xf32>
    %254 = arith.mulf %253, %251 : vector<1x2048xf32>
    %255 = arith.addf %249, %254 : vector<1x2048xf32>
    %c0_136 = arith.constant 0 : index
    %c0_137 = arith.constant 0 : index
    %c420 = arith.constant 420 : index
    %256 = vector.load %arg3[%c0_136, %c0_137, %c420] : memref<1x1x2560xf32, #tpu.memory_space<vmem>>, vector<1x1x2048xf32>
    %257 = vector.shape_cast %256 : vector<1x1x2048xf32> to vector<1x2048xf32>
    %c0_138 = arith.constant 0 : index
    %c42 = arith.constant 42 : index
    %258 = memref.load %arg1[%c0_138, %c42] : memref<1x45xf32, #tpu.memory_space<smem>>
    %259 = vector.broadcast %258 : f32 to vector<1x2048xf32>
    %260 = arith.mulf %259, %257 : vector<1x2048xf32>
    %261 = arith.addf %255, %260 : vector<1x2048xf32>
    %c0_139 = arith.constant 0 : index
    %c0_140 = arith.constant 0 : index
    %c421 = arith.constant 421 : index
    %262 = vector.load %arg3[%c0_139, %c0_140, %c421] : memref<1x1x2560xf32, #tpu.memory_space<vmem>>, vector<1x1x2048xf32>
    %263 = vector.shape_cast %262 : vector<1x1x2048xf32> to vector<1x2048xf32>
    %c0_141 = arith.constant 0 : index
    %c43 = arith.constant 43 : index
    %264 = memref.load %arg1[%c0_141, %c43] : memref<1x45xf32, #tpu.memory_space<smem>>
    %265 = vector.broadcast %264 : f32 to vector<1x2048xf32>
    %266 = arith.mulf %265, %263 : vector<1x2048xf32>
    %267 = arith.addf %261, %266 : vector<1x2048xf32>
    %c0_142 = arith.constant 0 : index
    %c0_143 = arith.constant 0 : index
    %c422 = arith.constant 422 : index
    %268 = vector.load %arg3[%c0_142, %c0_143, %c422] : memref<1x1x2560xf32, #tpu.memory_space<vmem>>, vector<1x1x2048xf32>
    %269 = vector.shape_cast %268 : vector<1x1x2048xf32> to vector<1x2048xf32>
    %c0_144 = arith.constant 0 : index
    %c44 = arith.constant 44 : index
    %270 = memref.load %arg1[%c0_144, %c44] : memref<1x45xf32, #tpu.memory_space<smem>>
    %271 = vector.broadcast %270 : f32 to vector<1x2048xf32>
    %272 = arith.mulf %271, %269 : vector<1x2048xf32>
    %273 = arith.addf %267, %272 : vector<1x2048xf32>
    %cst_145 = arith.constant 0.000000e+00 : f32
    %274 = vector.broadcast %cst_145 : f32 to vector<1x2048xf32>
    %275 = arith.maximumf %273, %274 : vector<1x2048xf32>
    %c0_146 = arith.constant 0 : index
    %c0_147 = arith.constant 0 : index
    %c0_148 = arith.constant 0 : index
    %276 = vector.load %arg4[%c0_146, %c0_147, %c0_148] : memref<1x1x2048xf32, #tpu.memory_space<vmem>>, vector<1x1x2048xf32>
    %277 = vector.shape_cast %276 : vector<1x1x2048xf32> to vector<1x2048xf32>
    %278 = vector.shape_cast %275 : vector<1x2048xf32> to vector<1x1x2048xf32>
    tpu.vector_store %arg4[%c0_146, %c0_147, %c0_148], %278 {strides = array<i32>} : memref<1x1x2048xf32, #tpu.memory_space<vmem>>, vector<1x1x2048xf32>,
    return
  }
  func.func @transform_0(%arg0: i32) -> (i32, i32) {
    %c0_i32 = arith.constant 0 : i32
    %c0_i32_0 = arith.constant 0 : i32
    %c0_i32_1 = arith.constant 0 : i32
    return %c0_i32, %c0_i32_0 : i32, i32
  }
  func.func @transform_1(%arg0: i32) -> i32 {
    %c0_i32 = arith.constant 0 : i32
    %c0_i32_0 = arith.constant 0 : i32
    return %c0_i32 : i32
  }
  func.func @transform_2(%arg0: i32) -> (i32, i32, i32) {
    %c0_i32 = arith.constant 0 : i32
    %c0_i32_0 = arith.constant 0 : i32
    %c0_i32_1 = arith.constant 0 : i32
    return %arg0, %c0_i32, %c0_i32_0 : i32, i32, i32
  }
  func.func @transform_3(%arg0: i32) -> (i32, i32, i32) {
    %c0_i32 = arith.constant 0 : i32
    %c0_i32_0 = arith.constant 0 : i32
    %c0_i32_1 = arith.constant 0 : i32
    return %arg0, %c0_i32, %c0_i32_0 : i32, i32, i32
  }
}

</mosaic_0001>

<llo_original>
// kernel: compressive3d_forward.3
$region0: #{compressive3d_forward.3}
  #allocation0 [shape = 'u32[]', space=smem, size = 0x4, offset = 0x4, fixed_abs, tag = 'smem constant byte address 0x4 - core index']
  #allocation1 [shape = 'u32[144,128]{1,0:T(1,128)}', space=vmem, size = 0x12000, scoped, tag = 'internal scratch']
  %s0 = inlined_call_operand.vmem [shape: f32[2,256], index: 0, kind: input, shape index: {}]
  %s1 = inlined_call_operand.vmem [shape: f32[2,256,4], index: 1, kind: input, shape index: {}]
  %s2 = inlined_call_operand.vmem [shape: f32[2,2,4], index: 2, kind: output, shape index: {}]
  %s3 = sld [smem:[#allocation0]]
  $region41: #{compressive3d_forward.3} parent=0
    _
  %s5 = ssub.s32 1, %s3
  %s6 = scalar_select 0, %s5, %s3
  loop: start=0, step=1, limit=4
  $region2: #{compressive3d_forward.3} parent=0 // loop_pre_header
    _
  $region3: #{compressive3d_forward.3} parent=0 // loop_header
    %s8 = sphi 0, %s12
    %p9 = scmp.ge.s32.totalorder %s8, 4
    %s16 = sphi 0, %s16
    %s18 = sphi 0, %s16
    %s19 = sphi 0, %s18
    %s33 = sphi 0, %s19
    %s39 = sphi 0, %s41
    %s42 = sphi 0, %s39
    %s43 = sphi 0, %s42
    %s59 = sphi 0, %s43
    %s65 = sphi 0, %s67
    %s68 = sphi 0, %s65
    %s69 = sphi 0, %s68
    %s85 = sphi 0, %s69
  $region4: #{compressive3d_forward.3} parent=0 // loop_header_branch
    %11 = sbr.rel (%p9) target = $region8
  $region5: #{compressive3d_forward.3} parent=0 // loop_body
    %s13 = ssub.s32 %s8, 1
    %s14 = ssub.s32 %s8, 2
    %s15 = sadd.s32 %s8, 1
    %s17 = sadd.s32 %s16, 1
    %p20 = scmp.eq.s32.totalorder %s8, 1
    %p21 = scmp.ne.s32.totalorder %s16, %s18
    %p22 = scmp.eq.s32.totalorder %s8, 0
    %p23 = por %p21, %p22
    %p24 = scmp.ne.s32.totalorder %s16, %s18
    %p25 = scmp.eq.s32.totalorder %s13, 1
    %p26 = por %p24, %p25
    %p27 = scmp.ne.s32.totalorder %s18, %s19
    %p28 = scmp.eq.s32.totalorder %s13, 0
    %p29 = por %p27, %p28
    %p30 = scmp.ne.s32.totalorder %s18, %s19
    %p31 = scmp.eq.s32.totalorder %s14, 1
    %p32 = por %p30, %p31
    %p34 = scmp.ne.s32.totalorder %s19, %s33
    %p35 = scmp.eq.s32.totalorder %s14, 0
    %p36 = por %p34, %p35
    %s37 = ssub.s32 %s8, %s15
    %p38 = scmp.eq.s32.totalorder %s37, 0
    %s40 = sadd.s32 %s39, 1
    %s41 = scalar_select %p38, %s39, %s40
    %p44 = pneg %p38
    %p45 = scmp.eq.s32.totalorder %s8, 1
    %p46 = por %p44, %p45
    %p47 = scmp.ne.s32.totalorder %s39, %s42
    %p48 = scmp.eq.s32.totalorder %s8, 0
    %p49 = por %p47, %p48
    %p50 = scmp.ne.s32.totalorder %s39, %s42
    %p51 = scmp.eq.s32.totalorder %s13, 1
    %p52 = por %p50, %p51
    %p53 = scmp.ne.s32.totalorder %s42, %s43
    %p54 = scmp.eq.s32.totalorder %s13, 0
    %p55 = por %p53, %p54
    %p56 = scmp.ne.s32.totalorder %s42, %s43
    %p57 = scmp.eq.s32.totalorder %s14, 1
    %p58 = por %p56, %p57
    %p60 = scmp.ne.s32.totalorder %s43, %s59
    %p61 = scmp.eq.s32.totalorder %s14, 0
    %p62 = por %p60, %p61
    %s63 = ssub.s32 %s8, %s15
    %p64 = scmp.eq.s32.totalorder %s63, 0
    %s66 = sadd.s32 %s65, 1
    %s67 = scalar_select %p64, %s65, %s66
    %p70 = pneg %p64
    %p71 = scmp.eq.s32.totalorder %s8, 1
    %p72 = por %p70, %p71
    %p73 = scmp.ne.s32.totalorder %s65, %s68
    %p74 = scmp.eq.s32.totalorder %s8, 0
    %p75 = por %p73, %p74
    %p76 = scmp.ne.s32.totalorder %s65, %s68
    %p77 = scmp.eq.s32.totalorder %s13, 1
    %p78 = por %p76, %p77
    %p79 = scmp.ne.s32.totalorder %s68, %s69
    %p80 = scmp.eq.s32.totalorder %s13, 0
    %p81 = por %p79, %p80
    %p82 = scmp.ne.s32.totalorder %s68, %s69
    %p83 = scmp.eq.s32.totalorder %s14, 1
    %p84 = por %p82, %p83
    %p86 = scmp.ne.s32.totalorder %s69, %s85
    %p87 = scmp.eq.s32.totalorder %s14, 0
    %p88 = por %p86, %p87
    %p89 = scmp.le.s32.totalorder 1, %s8
    %p90 = scmp.lt.s32.totalorder %s8, 3
    %p91 = pnand %p89, %p90
    %p92 = pneg %p91
    // Predicated region
    $region9: #{compressive3d_forward.3} parent=5 // pred_check
      _
    $region10: #{compressive3d_forward.3} parent=5 // pred_check_branch
      %94 = sbr.rel (%p91) target = $region12
    $region11: #{compressive3d_forward.3} parent=5 // pred_region
      %s95 = ssub.s32 %s8, 1
      // Predicated region
      $region13: #{compressive3d_forward.3} parent=11 // pred_check
        %p96 = pneg %p29
      $region14: #{compressive3d_forward.3} parent=11 // pred_check_branch
        %98 = sbr.rel (%p96) target = $region16
      $region15: #{compressive3d_forward.3} parent=11 // pred_region
        _
      $region16: #{compressive3d_forward.3} parent=11 // pred_fallthru
        _
    $region12: #{compressive3d_forward.3} parent=5 // pred_fallthru
      _
    %p99 = scmp.lt.s32.totalorder %s8, 2
    // Predicated region
    $region17: #{compressive3d_forward.3} parent=5 // pred_check
      %p100 = pneg %p99
    $region18: #{compressive3d_forward.3} parent=5 // pred_check_branch
      %102 = sbr.rel (%p100) target = $region20
    $region19: #{compressive3d_forward.3} parent=5 // pred_region
      // Predicated region
      $region21: #{compressive3d_forward.3} parent=19 // pred_check
        %p103 = pneg %p49
      $region22: #{compressive3d_forward.3} parent=19 // pred_check_branch
        %105 = sbr.rel (%p103) target = $region24
      $region23: #{compressive3d_forward.3} parent=19 // pred_region
        %p106 = scmp.lt.s32.totalorder %s8, 1
        %s107 = scalar_select %p106, %s8, 1
        %s108 = smul.addr %s107, 32
        %s109 = smul.addr %s108, 8
        %s110 = scalar_lea.vmem %s1, %s109
      $region24: #{compressive3d_forward.3} parent=19 // pred_fallthru
        _
    $region20: #{compressive3d_forward.3} parent=5 // pred_fallthru
      _
    %p111 = scmp.le.s32.totalorder 1, %s8
    %p112 = scmp.lt.s32.totalorder %s8, 3
    %p113 = pnand %p111, %p112
    %p114 = pneg %p113
    // Predicated region
    $region25: #{compressive3d_forward.3} parent=5 // pred_check
      _
    $region26: #{compressive3d_forward.3} parent=5 // pred_check_branch
      %116 = sbr.rel (%p113) target = $region28
    $region27: #{compressive3d_forward.3} parent=5 // pred_region
      %s117 = ssub.s32 %s8, 1
      %p118 = pneg %p29
      %p119 = pneg %p26
      %p120 = scmp.lt.s32.totalorder %s13, 1
      %s121 = scalar_select %p120, %s13, 1
      %s122 = smul.addr %s121, 32
      %s123 = smul.addr %s122, 8
      %s124 = scalar_lea.vmem %s1, %s123
      %p125 = pneg %p55
      %p126 = pneg %p52
      %p127 = pneg %p81
      %p128 = pneg %p78
      %p129 = scmp.lt.s32.totalorder %s13, 1
      %s130 = scalar_select %p129, %s13, 1
      %s131 = smul.addr %s130, 2
      %s132 = scalar_lea.vmem %s2, %s131
      %p133 = scmp.lt.s32.totalorder %s13, 1
      %s134 = scalar_select %p133, %s13, 1
      %s135 = smul.addr %s134, 32
      %s136 = smul.addr %s135, 8
      %s137 = scalar_lea.vmem %s1, %s136
      %p138 = scmp.lt.s32.totalorder %s13, 1
      %s139 = scalar_select %p138, %s13, 1
      %s140 = smul.addr %s139, 2
      %s141 = scalar_lea.vmem %s2, %s140
      %v142 = vld [vmem:[%s0] sm:$0xf]
      %v143 = vld [vmem:[%s137] sm:$0xff]
      %v144 = vld [vmem:[%s137 + $0x8] sm:$0xff]
      %v145 = vld [vmem:[%s137 + $0x10] sm:$0xff]
      %v146 = vld [vmem:[%s137 + $0x18] sm:$0xff]
      %v147 = vld [vmem:[%s137 + $0x20] sm:$0xff]
      %v148 = vld [vmem:[%s137 + $0x28] sm:$0xff]
      %v149 = vld [vmem:[%s137 + $0x30] sm:$0xff]
      %v150 = vld [vmem:[%s137 + $0x38] sm:$0xff]
      %v151 = vld [vmem:[%s137 + $0x40] sm:$0xff]
      %v152 = vld [vmem:[%s137 + $0x48] sm:$0xff]
      %v153 = vld [vmem:[%s137 + $0x50] sm:$0xff]
      %v154 = vld [vmem:[%s137 + $0x58] sm:$0xff]
      %v155 = vld [vmem:[%s137 + $0x60] sm:$0xff]
      %v156 = vld [vmem:[%s137 + $0x68] sm:$0xff]
      %v157 = vld [vmem:[%s137 + $0x70] sm:$0xff]
      %v158 = vld [vmem:[%s137 + $0x78] sm:$0xff]
      %v159 = vld [vmem:[%s137 + $0x80] sm:$0xff]
      %v160 = vld [vmem:[%s137 + $0x88] sm:$0xff]
      %v161 = vld [vmem:[%s137 + $0x90] sm:$0xff]
      %v162 = vld [vmem:[%s137 + $0x98] sm:$0xff]
      %v163 = vld [vmem:[%s137 + $0xa0] sm:$0xff]
      %v164 = vld [vmem:[%s137 + $0xa8] sm:$0xff]
      %v165 = vld [vmem:[%s137 + $0xb0] sm:$0xff]
      %v166 = vld [vmem:[%s137 + $0xb8] sm:$0xff]
      %v167 = vld [vmem:[%s137 + $0xc0] sm:$0xff]
      %v168 = vld [vmem:[%s137 + $0xc8] sm:$0xff]
      %v169 = vld [vmem:[%s137 + $0xd0] sm:$0xff]
      %v170 = vld [vmem:[%s137 + $0xd8] sm:$0xff]
      %v171 = vld [vmem:[%s137 + $0xe0] sm:$0xff]
      %v172 = vld [vmem:[%s137 + $0xe8] sm:$0xff]
      %v173 = vld [vmem:[%s137 + $0xf0] sm:$0xff]
      %v174 = vld [vmem:[%s137 + $0xf8] sm:$0xff]
      %v177 = vunpack.c.l.s4 1983009808
      %v178 = vunpack.c.0.s8 %v177
      %v179 = vlaneseq
      %v180 = vshrl.u32 %v179, 7
      %v181 = vsub.s32 %v178, %v180
      %v182 = vrot.slane %v142, %v181
      %v183 = vcombine.high %v182, %v182
      %186 = vmatprep.subr.mxu0 0.0
      %v187 = vand.u32 %v143, 4294901760
      %188 = vmatpush1.msra.mxu0 %v187
      %189 = vmatprep.subr.mxu0 0.0
      %v190 = vand.u32 %v144, 4294901760
      %191 = vmatpush1.msra.mxu0 %v190
      %192 = vmatprep.subr.mxu0 0.0
      %v193 = vand.u32 %v145, 4294901760
      %194 = vmatpush1.msra.mxu0 %v193
      %195 = vmatprep.subr.mxu0 0.0
      %v196 = vand.u32 %v146, 4294901760
      %197 = vmatpush1.msra.mxu0 %v196
      %198 = vmatprep.subr.mxu0 0.0
      %v199 = vand.u32 %v147, 4294901760
      %200 = vmatpush1.msra.mxu0 %v199
      %201 = vmatprep.subr.mxu0 0.0
      %v202 = vand.u32 %v148, 4294901760
      %203 = vmatpush1.msra.mxu0 %v202
      %204 = vmatprep.subr.mxu0 0.0
      %v205 = vand.u32 %v149, 4294901760
      %206 = vmatpush1.msra.mxu0 %v205
      %207 = vmatprep.subr.mxu0 0.0
      %v208 = vand.u32 %v150, 4294901760
      %209 = vmatpush1.msra.mxu0 %v208
      %210 = vmatprep.subr.mxu0 0.0
      %v211 = vand.u32 %v151, 4294901760
      %212 = vmatpush1.msra.mxu0 %v211
      %213 = vmatprep.subr.mxu0 0.0
      %v214 = vand.u32 %v152, 4294901760
      %215 = vmatpush1.msra.mxu0 %v214
      %216 = vmatprep.subr.mxu0 0.0
      %v217 = vand.u32 %v153, 4294901760
      %218 = vmatpush1.msra.mxu0 %v217
      %219 = vmatprep.subr.mxu0 0.0
      %v220 = vand.u32 %v154, 4294901760
      %221 = vmatpush1.msra.mxu0 %v220
      %222 = vmatprep.subr.mxu0 0.0
      %v223 = vand.u32 %v155, 4294901760
      %224 = vmatpush1.msra.mxu0 %v223
      %225 = vmatprep.subr.mxu0 0.0
      %v226 = vand.u32 %v156, 4294901760
      %227 = vmatpush1.msra.mxu0 %v226
      %228 = vmatprep.subr.mxu0 0.0
      %v229 = vand.u32 %v157, 4294901760
      %230 = vmatpush1.msra.mxu0 %v229
      %231 = vmatprep.subr.mxu0 0.0
      %v232 = vand.u32 %v158, 4294901760
      %233 = vmatpush1.msra.mxu0 %v232
      %234 = vmatprep.subr.mxu0 0.0
      %v235 = vand.u32 %v159, 4294901760
      %236 = vmatpush1.msra.mxu0 %v235
      %237 = vmatprep.subr.mxu0 0.0
      %v238 = vand.u32 %v160, 4294901760
      %239 = vmatpush1.msra.mxu0 %v238
      %240 = vmatprep.subr.mxu0 0.0
      %v241 = vand.u32 %v161, 4294901760
      %242 = vmatpush1.msra.mxu0 %v241
      %243 = vmatprep.subr.mxu0 0.0
      %v244 = vand.u32 %v162, 4294901760
      %245 = vmatpush1.msra.mxu0 %v244
      %246 = vmatprep.subr.mxu0 0.0
      %v247 = vand.u32 %v163, 4294901760
      %248 = vmatpush1.msra.mxu0 %v247
      %249 = vmatprep.subr.mxu0 0.0
      %v250 = vand.u32 %v164, 4294901760
      %251 = vmatpush1.msra.mxu0 %v250
      %252 = vmatprep.subr.mxu0 0.0
      %v253 = vand.u32 %v165, 4294901760
      %254 = vmatpush1.msra.mxu0 %v253
      %255 = vmatprep.subr.mxu0 0.0
      %v256 = vand.u32 %v166, 4294901760
      %257 = vmatpush1.msra.mxu0 %v256
      %258 = vmatprep.subr.mxu0 0.0
      %v259 = vand.u32 %v167, 4294901760
      %260 = vmatpush1.msra.mxu0 %v259
      %261 = vmatprep.subr.mxu0 0.0
      %v262 = vand.u32 %v168, 4294901760
      %263 = vmatpush1.msra.mxu0 %v262
      %264 = vmatprep.subr.mxu0 0.0
      %v265 = vand.u32 %v169, 4294901760
      %266 = vmatpush1.msra.mxu0 %v265
      %267 = vmatprep.subr.mxu0 0.0
      %v268 = vand.u32 %v170, 4294901760
      %269 = vmatpush1.msra.mxu0 %v268
      %270 = vmatprep.subr.mxu0 0.0
      %v271 = vand.u32 %v171, 4294901760
      %272 = vmatpush1.msra.mxu0 %v271
      %273 = vmatprep.subr.mxu0 0.0
      %v274 = vand.u32 %v172, 4294901760
      %275 = vmatpush1.msra.mxu0 %v274
      %276 = vmatprep.subr.mxu0 0.0
      %v277 = vand.u32 %v173, 4294901760
      %278 = vmatpush1.msra.mxu0 %v277
      %279 = vmatprep.subr.mxu0 0.0
      %v280 = vand.u32 %v174, 4294901760
      %281 = vmatpush1.msra.mxu0 %v280
      %v282 = vand.u32 %v183, 4294901760
      %v283 = vsub.f32 %v183, %v282
      %v284 = vand.u32 %v283, 4294901760
      %v285 = vsub.f32 %v283, %v284
      %v286 = vand.u32 %v285, 4294901760
      %287 = vmatprep.mubr.f32.mxu0 %v286
      %v288 = vand.u32 %v182, 4294901760
      %v289 = vsub.f32 %v182, %v288
      %v290 = vand.u32 %v289, 4294901760
      %v291 = vsub.f32 %v289, %v290
      %v292 = vand.u32 %v291, 4294901760
      %293 = vmatmul.mubr.f32.gmra.mrb[0].mxu0 %v292
      %v294 = vpop.f32.mrb[0].mxu0
      %v295 = vadd.f32 0.0, %v294
      %v296 = vpop.f32.mrb[0].mxu0
      %297 = vdwg.mxu0
      %298 = vmatprep.subr.mxu0 0.0
      %v299 = vand.u32 %v143, 4294901760
      %v300 = vsub.f32 %v143, %v299
      %v301 = vand.u32 %v300, 4294901760
      %v302 = vsub.f32 %v300, %v301
      %v303 = vand.u32 %v302, 4294901760
      %304 = vmatpush1.msra.mxu0 %v303
      %305 = vmatprep.subr.mxu0 0.0
      %v306 = vand.u32 %v144, 4294901760
      %v307 = vsub.f32 %v144, %v306
      %v308 = vand.u32 %v307, 4294901760
      %v309 = vsub.f32 %v307, %v308
      %v310 = vand.u32 %v309, 4294901760
      %311 = vmatpush1.msra.mxu0 %v310
      %312 = vmatprep.subr.mxu0 0.0
      %v313 = vand.u32 %v145, 4294901760
      %v314 = vsub.f32 %v145, %v313
      %v315 = vand.u32 %v314, 4294901760
      %v316 = vsub.f32 %v314, %v315
      %v317 = vand.u32 %v316, 4294901760
      %318 = vmatpush1.msra.mxu0 %v317
      %319 = vmatprep.subr.mxu0 0.0
      %v320 = vand.u32 %v146, 4294901760
      %v321 = vsub.f32 %v146, %v320
      %v322 = vand.u32 %v321, 4294901760
      %v323 = vsub.f32 %v321, %v322
      %v324 = vand.u32 %v323, 4294901760
      %325 = vmatpush1.msra.mxu0 %v324
      %326 = vmatprep.subr.mxu0 0.0
      %v327 = vand.u32 %v147, 4294901760
      %v328 = vsub.f32 %v147, %v327
      %v329 = vand.u32 %v328, 4294901760
      %v330 = vsub.f32 %v328, %v329
      %v331 = vand.u32 %v330, 4294901760
      %332 = vmatpush1.msra.mxu0 %v331
      %333 = vmatprep.subr.mxu0 0.0
      %v334 = vand.u32 %v148, 4294901760
      %v335 = vsub.f32 %v148, %v334
      %v336 = vand.u32 %v335, 4294901760
      %v337 = vsub.f32 %v335, %v336
      %v338 = vand.u32 %v337, 4294901760
      %339 = vmatpush1.msra.mxu0 %v338
      %340 = vmatprep.subr.mxu0 0.0
      %v341 = vand.u32 %v149, 4294901760
      %v342 = vsub.f32 %v149, %v341
      %v343 = vand.u32 %v342, 4294901760
      %v344 = vsub.f32 %v342, %v343
      %v345 = vand.u32 %v344, 4294901760
      %346 = vmatpush1.msra.mxu0 %v345
      %347 = vmatprep.subr.mxu0 0.0
      %v348 = vand.u32 %v150, 4294901760
      %v349 = vsub.f32 %v150, %v348
      %v350 = vand.u32 %v349, 4294901760
      %v351 = vsub.f32 %v349, %v350
      %v352 = vand.u32 %v351, 4294901760
      %353 = vmatpush1.msra.mxu0 %v352
      %354 = vmatprep.subr.mxu0 0.0
      %v355 = vand.u32 %v151, 4294901760
      %v356 = vsub.f32 %v151, %v355
      %v357 = vand.u32 %v356, 4294901760
      %v358 = vsub.f32 %v356, %v357
      %v359 = vand.u32 %v358, 4294901760
      %360 = vmatpush1.msra.mxu0 %v359
      %361 = vmatprep.subr.mxu0 0.0
      %v362 = vand.u32 %v152, 4294901760
      %v363 = vsub.f32 %v152, %v362
      %v364 = vand.u32 %v363, 4294901760
      %v365 = vsub.f32 %v363, %v364
      %v366 = vand.u32 %v365, 4294901760
      %367 = vmatpush1.msra.mxu0 %v366
      %368 = vmatprep.subr.mxu0 0.0
      %v369 = vand.u32 %v153, 4294901760
      %v370 = vsub.f32 %v153, %v369
      %v371 = vand.u32 %v370, 4294901760
      %v372 = vsub.f32 %v370, %v371
      %v373 = vand.u32 %v372, 4294901760
      %374 = vmatpush1.msra.mxu0 %v373
      %375 = vmatprep.subr.mxu0 0.0
      %v376 = vand.u32 %v154, 4294901760
      %v377 = vsub.f32 %v154, %v376
      %v378 = vand.u32 %v377, 4294901760
      %v379 = vsub.f32 %v377, %v378
      %v380 = vand.u32 %v379, 4294901760
      %381 = vmatpush1.msra.mxu0 %v380
      %382 = vmatprep.subr.mxu0 0.0
      %v383 = vand.u32 %v155, 4294901760
      %v384 = vsub.f32 %v155, %v383
      %v385 = vand.u32 %v384, 4294901760
      %v386 = vsub.f32 %v384, %v385
      %v387 = vand.u32 %v386, 4294901760
      %388 = vmatpush1.msra.mxu0 %v387
      %389 = vmatprep.subr.mxu0 0.0
      %v390 = vand.u32 %v156, 4294901760
      %v391 = vsub.f32 %v156, %v390
      %v392 = vand.u32 %v391, 4294901760
      %v393 = vsub.f32 %v391, %v392
      %v394 = vand.u32 %v393, 4294901760
      %395 = vmatpush1.msra.mxu0 %v394
      %396 = vmatprep.subr.mxu0 0.0
      %v397 = vand.u32 %v157, 4294901760
      %v398 = vsub.f32 %v157, %v397
      %v399 = vand.u32 %v398, 4294901760
      %v400 = vsub.f32 %v398, %v399
      %v401 = vand.u32 %v400, 4294901760
      %402 = vmatpush1.msra.mxu0 %v401
      %403 = vmatprep.subr.mxu0 0.0
      %v404 = vand.u32 %v158, 4294901760
      %v405 = vsub.f32 %v158, %v404
      %v406 = vand.u32 %v405, 4294901760
      %v407 = vsub.f32 %v405, %v406
      %v408 = vand.u32 %v407, 4294901760
      %409 = vmatpush1.msra.mxu0 %v408
      %410 = vmatprep.subr.mxu0 0.0
      %v411 = vand.u32 %v159, 4294901760
      %v412 = vsub.f32 %v159, %v411
      %v413 = vand.u32 %v412, 4294901760
      %v414 = vsub.f32 %v412, %v413
      %v415 = vand.u32 %v414, 4294901760
      %416 = vmatpush1.msra.mxu0 %v415
      %417 = vmatprep.subr.mxu0 0.0
      %v418 = vand.u32 %v160, 4294901760
      %v419 = vsub.f32 %v160, %v418
      %v420 = vand.u32 %v419, 4294901760
      %v421 = vsub.f32 %v419, %v420
      %v422 = vand.u32 %v421, 4294901760
      %423 = vmatpush1.msra.mxu0 %v422
      %424 = vmatprep.subr.mxu0 0.0
      %v425 = vand.u32 %v161, 4294901760
      %v426 = vsub.f32 %v161, %v425
      %v427 = vand.u32 %v426, 4294901760
      %v428 = vsub.f32 %v426, %v427
      %v429 = vand.u32 %v428, 4294901760
      %430 = vmatpush1.msra.mxu0 %v429
      %431 = vmatprep.subr.mxu0 0.0
      %v432 = vand.u32 %v162, 4294901760
      %v433 = vsub.f32 %v162, %v432
      %v434 = vand.u32 %v433, 4294901760
      %v435 = vsub.f32 %v433, %v434
      %v436 = vand.u32 %v435, 4294901760
      %437 = vmatpush1.msra.mxu0 %v436
      %438 = vmatprep.subr.mxu0 0.0
      %v439 = vand.u32 %v163, 4294901760
      %v440 = vsub.f32 %v163, %v439
      %v441 = vand.u32 %v440, 4294901760
      %v442 = vsub.f32 %v440, %v441
      %v443 = vand.u32 %v442, 4294901760
      %444 = vmatpush1.msra.mxu0 %v443
      %445 = vmatprep.subr.mxu0 0.0
      %v446 = vand.u32 %v164, 4294901760
      %v447 = vsub.f32 %v164, %v446
      %v448 = vand.u32 %v447, 4294901760
      %v449 = vsub.f32 %v447, %v448
      %v450 = vand.u32 %v449, 4294901760
      %451 = vmatpush1.msra.mxu0 %v450
      %452 = vmatprep.subr.mxu0 0.0
      %v453 = vand.u32 %v165, 4294901760
      %v454 = vsub.f32 %v165, %v453
      %v455 = vand.u32 %v454, 4294901760
      %v456 = vsub.f32 %v454, %v455
      %v457 = vand.u32 %v456, 4294901760
      %458 = vmatpush1.msra.mxu0 %v457
      %459 = vmatprep.subr.mxu0 0.0
      %v460 = vand.u32 %v166, 4294901760
      %v461 = vsub.f32 %v166, %v460
      %v462 = vand.u32 %v461, 4294901760
      %v463 = vsub.f32 %v461, %v462
      %v464 = vand.u32 %v463, 4294901760
      %465 = vmatpush1.msra.mxu0 %v464
      %466 = vmatprep.subr.mxu0 0.0
      %v467 = vand.u32 %v167, 4294901760
      %v468 = vsub.f32 %v167, %v467
      %v469 = vand.u32 %v468, 4294901760
      %v470 = vsub.f32 %v468, %v469
      %v471 = vand.u32 %v470, 4294901760
      %472 = vmatpush1.msra.mxu0 %v471
      %473 = vmatprep.subr.mxu0 0.0
      %v474 = vand.u32 %v168, 4294901760
      %v475 = vsub.f32 %v168, %v474
      %v476 = vand.u32 %v475, 4294901760
      %v477 = vsub.f32 %v475, %v476
      %v478 = vand.u32 %v477, 4294901760
      %479 = vmatpush1.msra.mxu0 %v478
      %480 = vmatprep.subr.mxu0 0.0
      %v481 = vand.u32 %v169, 4294901760
      %v482 = vsub.f32 %v169, %v481
      %v483 = vand.u32 %v482, 4294901760
      %v484 = vsub.f32 %v482, %v483
      %v485 = vand.u32 %v484, 4294901760
      %486 = vmatpush1.msra.mxu0 %v485
      %487 = vmatprep.subr.mxu0 0.0
      %v488 = vand.u32 %v170, 4294901760
      %v489 = vsub.f32 %v170, %v488
      %v490 = vand.u32 %v489, 4294901760
      %v491 = vsub.f32 %v489, %v490
      %v492 = vand.u32 %v491, 4294901760
      %493 = vmatpush1.msra.mxu0 %v492
      %494 = vmatprep.subr.mxu0 0.0
      %v495 = vand.u32 %v171, 4294901760
      %v496 = vsub.f32 %v171, %v495
      %v497 = vand.u32 %v496, 4294901760
      %v498 = vsub.f32 %v496, %v497
      %v499 = vand.u32 %v498, 4294901760
      %500 = vmatpush1.msra.mxu0 %v499
      %501 = vmatprep.subr.mxu0 0.0
      %v502 = vand.u32 %v172, 4294901760
      %v503 = vsub.f32 %v172, %v502
      %v504 = vand.u32 %v503, 4294901760
      %v505 = vsub.f32 %v503, %v504
      %v506 = vand.u32 %v505, 4294901760
      %507 = vmatpush1.msra.mxu0 %v506
      %508 = vmatprep.subr.mxu0 0.0
      %v509 = vand.u32 %v173, 4294901760
      %v510 = vsub.f32 %v173, %v509
      %v511 = vand.u32 %v510, 4294901760
      %v512 = vsub.f32 %v510, %v511
      %v513 = vand.u32 %v512, 4294901760
      %514 = vmatpush1.msra.mxu0 %v513
      %515 = vmatprep.subr.mxu0 0.0
      %v516 = vand.u32 %v174, 4294901760
      %v517 = vsub.f32 %v174, %v516
      %v518 = vand.u32 %v517, 4294901760
      %v519 = vsub.f32 %v517, %v518
      %v520 = vand.u32 %v519, 4294901760
      %521 = vmatpush1.msra.mxu0 %v520
      %v522 = vand.u32 %v183, 4294901760
      %523 = vmatprep.mubr.f32.mxu0 %v522
      %v524 = vand.u32 %v182, 4294901760
      %525 = vmatmul.mubr.f32.gmra.mrb[0].mxu0 %v524
      %v526 = vpop.f32.mrb[0].mxu0
      %v527 = vadd.f32 %v295, %v526
      %v528 = vpop.f32.mrb[0].mxu0
      %529 = vdwg.mxu0
      %530 = vmatprep.subr.mxu0 0.0
      %v531 = vand.u32 %v143, 4294901760
      %v532 = vsub.f32 %v143, %v531
      %533 = vmatpush1.msra.mxu0 %v532
      %534 = vmatprep.subr.mxu0 0.0
      %v535 = vand.u32 %v144, 4294901760
      %v536 = vsub.f32 %v144, %v535
      %537 = vmatpush1.msra.mxu0 %v536
      %538 = vmatprep.subr.mxu0 0.0
      %v539 = vand.u32 %v145, 4294901760
      %v540 = vsub.f32 %v145, %v539
      %541 = vmatpush1.msra.mxu0 %v540
      %542 = vmatprep.subr.mxu0 0.0
      %v543 = vand.u32 %v146, 4294901760
      %v544 = vsub.f32 %v146, %v543
      %545 = vmatpush1.msra.mxu0 %v544
      %546 = vmatprep.subr.mxu0 0.0
      %v547 = vand.u32 %v147, 4294901760
      %v548 = vsub.f32 %v147, %v547
      %549 = vmatpush1.msra.mxu0 %v548
      %550 = vmatprep.subr.mxu0 0.0
      %v551 = vand.u32 %v148, 4294901760
      %v552 = vsub.f32 %v148, %v551
      %553 = vmatpush1.msra.mxu0 %v552
      %554 = vmatprep.subr.mxu0 0.0
      %v555 = vand.u32 %v149, 4294901760
      %v556 = vsub.f32 %v149, %v555
      %557 = vmatpush1.msra.mxu0 %v556
      %558 = vmatprep.subr.mxu0 0.0
      %v559 = vand.u32 %v150, 4294901760
      %v560 = vsub.f32 %v150, %v559
      %561 = vmatpush1.msra.mxu0 %v560
      %562 = vmatprep.subr.mxu0 0.0
      %v563 = vand.u32 %v151, 4294901760
      %v564 = vsub.f32 %v151, %v563
      %565 = vmatpush1.msra.mxu0 %v564
      %566 = vmatprep.subr.mxu0 0.0
      %v567 = vand.u32 %v152, 4294901760
      %v568 = vsub.f32 %v152, %v567
      %569 = vmatpush1.msra.mxu0 %v568
      %570 = vmatprep.subr.mxu0 0.0
      %v571 = vand.u32 %v153, 4294901760
      %v572 = vsub.f32 %v153, %v571
      %573 = vmatpush1.msra.mxu0 %v572
      %574 = vmatprep.subr.mxu0 0.0
      %v575 = vand.u32 %v154, 4294901760
      %v576 = vsub.f32 %v154, %v575
      %577 = vmatpush1.msra.mxu0 %v576
      %578 = vmatprep.subr.mxu0 0.0
      %v579 = vand.u32 %v155, 4294901760
      %v580 = vsub.f32 %v155, %v579
      %581 = vmatpush1.msra.mxu0 %v580
      %582 = vmatprep.subr.mxu0 0.0
      %v583 = vand.u32 %v156, 4294901760
      %v584 = vsub.f32 %v156, %v583
      %585 = vmatpush1.msra.mxu0 %v584
      %586 = vmatprep.subr.mxu0 0.0
      %v587 = vand.u32 %v157, 4294901760
      %v588 = vsub.f32 %v157, %v587
      %589 = vmatpush1.msra.mxu0 %v588
      %590 = vmatprep.subr.mxu0 0.0
      %v591 = vand.u32 %v158, 4294901760
      %v592 = vsub.f32 %v158, %v591
      %593 = vmatpush1.msra.mxu0 %v592
      %594 = vmatprep.subr.mxu0 0.0
      %v595 = vand.u32 %v159, 4294901760
      %v596 = vsub.f32 %v159, %v595
      %597 = vmatpush1.msra.mxu0 %v596
      %598 = vmatprep.subr.mxu0 0.0
      %v599 = vand.u32 %v160, 4294901760
      %v600 = vsub.f32 %v160, %v599
      %601 = vmatpush1.msra.mxu0 %v600
      %602 = vmatprep.subr.mxu0 0.0
      %v603 = vand.u32 %v161, 4294901760
      %v604 = vsub.f32 %v161, %v603
      %605 = vmatpush1.msra.mxu0 %v604
      %606 = vmatprep.subr.mxu0 0.0
      %v607 = vand.u32 %v162, 4294901760
      %v608 = vsub.f32 %v162, %v607
      %609 = vmatpush1.msra.mxu0 %v608
      %610 = vmatprep.subr.mxu0 0.0
      %v611 = vand.u32 %v163, 4294901760
      %v612 = vsub.f32 %v163, %v611
      %613 = vmatpush1.msra.mxu0 %v612
      %614 = vmatprep.subr.mxu0 0.0
      %v615 = vand.u32 %v164, 4294901760
      %v616 = vsub.f32 %v164, %v615
      %617 = vmatpush1.msra.mxu0 %v616
      %618 = vmatprep.subr.mxu0 0.0
      %v619 = vand.u32 %v165, 4294901760
      %v620 = vsub.f32 %v165, %v619
      %621 = vmatpush1.msra.mxu0 %v620
      %622 = vmatprep.subr.mxu0 0.0
      %v623 = vand.u32 %v166, 4294901760
      %v624 = vsub.f32 %v166, %v623
      %625 = vmatpush1.msra.mxu0 %v624
      %626 = vmatprep.subr.mxu0 0.0
      %v627 = vand.u32 %v167, 4294901760
      %v628 = vsub.f32 %v167, %v627
      %629 = vmatpush1.msra.mxu0 %v628
      %630 = vmatprep.subr.mxu0 0.0
      %v631 = vand.u32 %v168, 4294901760
      %v632 = vsub.f32 %v168, %v631
      %633 = vmatpush1.msra.mxu0 %v632
      %634 = vmatprep.subr.mxu0 0.0
      %v635 = vand.u32 %v169, 4294901760
      %v636 = vsub.f32 %v169, %v635
      %637 = vmatpush1.msra.mxu0 %v636
      %638 = vmatprep.subr.mxu0 0.0
      %v639 = vand.u32 %v170, 4294901760
      %v640 = vsub.f32 %v170, %v639
      %641 = vmatpush1.msra.mxu0 %v640
      %642 = vmatprep.subr.mxu0 0.0
      %v643 = vand.u32 %v171, 4294901760
      %v644 = vsub.f32 %v171, %v643
      %645 = vmatpush1.msra.mxu0 %v644
      %646 = vmatprep.subr.mxu0 0.0
      %v647 = vand.u32 %v172, 4294901760
      %v648 = vsub.f32 %v172, %v647
      %649 = vmatpush1.msra.mxu0 %v648
      %650 = vmatprep.subr.mxu0 0.0
      %v651 = vand.u32 %v173, 4294901760
      %v652 = vsub.f32 %v173, %v651
      %653 = vmatpush1.msra.mxu0 %v652
      %654 = vmatprep.subr.mxu0 0.0
      %v655 = vand.u32 %v174, 4294901760
      %v656 = vsub.f32 %v174, %v655
      %657 = vmatpush1.msra.mxu0 %v656
      %v658 = vand.u32 %v183, 4294901760
      %v659 = vsub.f32 %v183, %v658
      %660 = vmatprep.mubr.f32.mxu0 %v659
      %v661 = vand.u32 %v182, 4294901760
      %v662 = vsub.f32 %v182, %v661
      %663 = vmatmul.mubr.f32.gmra.mrb[0].mxu0 %v662
      %v664 = vpop.f32.mrb[0].mxu0
      %v665 = vadd.f32 %v527, %v664
      %v666 = vpop.f32.mrb[0].mxu0
      %667 = vdwg.mxu0
      %668 = vmatprep.subr.mxu0 0.0
      %v669 = vand.u32 %v143, 4294901760
      %670 = vmatpush1.msra.mxu0 %v669
      %671 = vmatprep.subr.mxu0 0.0
      %v672 = vand.u32 %v144, 4294901760
      %673 = vmatpush1.msra.mxu0 %v672
      %674 = vmatprep.subr.mxu0 0.0
      %v675 = vand.u32 %v145, 4294901760
      %676 = vmatpush1.msra.mxu0 %v675
      %677 = vmatprep.subr.mxu0 0.0
      %v678 = vand.u32 %v146, 4294901760
      %679 = vmatpush1.msra.mxu0 %v678
      %680 = vmatprep.subr.mxu0 0.0
      %v681 = vand.u32 %v147, 4294901760
      %682 = vmatpush1.msra.mxu0 %v681
      %683 = vmatprep.subr.mxu0 0.0
      %v684 = vand.u32 %v148, 4294901760
      %685 = vmatpush1.msra.mxu0 %v684
      %686 = vmatprep.subr.mxu0 0.0
      %v687 = vand.u32 %v149, 4294901760
      %688 = vmatpush1.msra.mxu0 %v687
      %689 = vmatprep.subr.mxu0 0.0
      %v690 = vand.u32 %v150, 4294901760
      %691 = vmatpush1.msra.mxu0 %v690
      %692 = vmatprep.subr.mxu0 0.0
      %v693 = vand.u32 %v151, 4294901760
      %694 = vmatpush1.msra.mxu0 %v693
      %695 = vmatprep.subr.mxu0 0.0
      %v696 = vand.u32 %v152, 4294901760
      %697 = vmatpush1.msra.mxu0 %v696
      %698 = vmatprep.subr.mxu0 0.0
      %v699 = vand.u32 %v153, 4294901760
      %700 = vmatpush1.msra.mxu0 %v699
      %701 = vmatprep.subr.mxu0 0.0
      %v702 = vand.u32 %v154, 4294901760
      %703 = vmatpush1.msra.mxu0 %v702
      %704 = vmatprep.subr.mxu0 0.0
      %v705 = vand.u32 %v155, 4294901760
      %706 = vmatpush1.msra.mxu0 %v705
      %707 = vmatprep.subr.mxu0 0.0
      %v708 = vand.u32 %v156, 4294901760
      %709 = vmatpush1.msra.mxu0 %v708
      %710 = vmatprep.subr.mxu0 0.0
      %v711 = vand.u32 %v157, 4294901760
      %712 = vmatpush1.msra.mxu0 %v711
      %713 = vmatprep.subr.mxu0 0.0
      %v714 = vand.u32 %v158, 4294901760
      %715 = vmatpush1.msra.mxu0 %v714
      %716 = vmatprep.subr.mxu0 0.0
      %v717 = vand.u32 %v159, 4294901760
      %718 = vmatpush1.msra.mxu0 %v717
      %719 = vmatprep.subr.mxu0 0.0
      %v720 = vand.u32 %v160, 4294901760
      %721 = vmatpush1.msra.mxu0 %v720
      %722 = vmatprep.subr.mxu0 0.0
      %v723 = vand.u32 %v161, 4294901760
      %724 = vmatpush1.msra.mxu0 %v723
      %725 = vmatprep.subr.mxu0 0.0
      %v726 = vand.u32 %v162, 4294901760
      %727 = vmatpush1.msra.mxu0 %v726
      %728 = vmatprep.subr.mxu0 0.0
      %v729 = vand.u32 %v163, 4294901760
      %730 = vmatpush1.msra.mxu0 %v729
      %731 = vmatprep.subr.mxu0 0.0
      %v732 = vand.u32 %v164, 4294901760
      %733 = vmatpush1.msra.mxu0 %v732
      %734 = vmatprep.subr.mxu0 0.0
      %v735 = vand.u32 %v165, 4294901760
      %736 = vmatpush1.msra.mxu0 %v735
      %737 = vmatprep.subr.mxu0 0.0
      %v738 = vand.u32 %v166, 4294901760
      %739 = vmatpush1.msra.mxu0 %v738
      %740 = vmatprep.subr.mxu0 0.0
      %v741 = vand.u32 %v167, 4294901760
      %742 = vmatpush1.msra.mxu0 %v741
      %743 = vmatprep.subr.mxu0 0.0
      %v744 = vand.u32 %v168, 4294901760
      %745 = vmatpush1.msra.mxu0 %v744
      %746 = vmatprep.subr.mxu0 0.0
      %v747 = vand.u32 %v169, 4294901760
      %748 = vmatpush1.msra.mxu0 %v747
      %749 = vmatprep.subr.mxu0 0.0
      %v750 = vand.u32 %v170, 4294901760
      %751 = vmatpush1.msra.mxu0 %v750
      %752 = vmatprep.subr.mxu0 0.0
      %v753 = vand.u32 %v171, 4294901760
      %754 = vmatpush1.msra.mxu0 %v753
      %755 = vmatprep.subr.mxu0 0.0
      %v756 = vand.u32 %v172, 4294901760
      %757 = vmatpush1.msra.mxu0 %v756
      %758 = vmatprep.subr.mxu0 0.0
      %v759 = vand.u32 %v173, 4294901760
      %760 = vmatpush1.msra.mxu0 %v759
      %761 = vmatprep.subr.mxu0 0.0
      %v762 = vand.u32 %v174, 4294901760
      %763 = vmatpush1.msra.mxu0 %v762
      %v764 = vand.u32 %v183, 4294901760
      %v765 = vsub.f32 %v183, %v764
      %v766 = vand.u32 %v765, 4294901760
      %767 = vmatprep.mubr.f32.mxu0 %v766
      %v768 = vand.u32 %v182, 4294901760
      %v769 = vsub.f32 %v182, %v768
      %v770 = vand.u32 %v769, 4294901760
      %771 = vmatmul.mubr.f32.gmra.mrb[0].mxu0 %v770
      %v772 = vpop.f32.mrb[0].mxu0
      %v773 = vadd.f32 %v665, %v772
      %v774 = vpop.f32.mrb[0].mxu0
      %775 = vdwg.mxu0
      %776 = vmatprep.subr.mxu0 0.0
      %v777 = vand.u32 %v143, 4294901760
      %v778 = vsub.f32 %v143, %v777
      %v779 = vand.u32 %v778, 4294901760
      %780 = vmatpush1.msra.mxu0 %v779
      %781 = vmatprep.subr.mxu0 0.0
      %v782 = vand.u32 %v144, 4294901760
      %v783 = vsub.f32 %v144, %v782
      %v784 = vand.u32 %v783, 4294901760
      %785 = vmatpush1.msra.mxu0 %v784
      %786 = vmatprep.subr.mxu0 0.0
      %v787 = vand.u32 %v145, 4294901760
      %v788 = vsub.f32 %v145, %v787
      %v789 = vand.u32 %v788, 4294901760
      %790 = vmatpush1.msra.mxu0 %v789
      %791 = vmatprep.subr.mxu0 0.0
      %v792 = vand.u32 %v146, 4294901760
      %v793 = vsub.f32 %v146, %v792
      %v794 = vand.u32 %v793, 4294901760
      %795 = vmatpush1.msra.mxu0 %v794
      %796 = vmatprep.subr.mxu0 0.0
      %v797 = vand.u32 %v147, 4294901760
      %v798 = vsub.f32 %v147, %v797
      %v799 = vand.u32 %v798, 4294901760
      %800 = vmatpush1.msra.mxu0 %v799
      %801 = vmatprep.subr.mxu0 0.0
      %v802 = vand.u32 %v148, 4294901760
      %v803 = vsub.f32 %v148, %v802
      %v804 = vand.u32 %v803, 4294901760
      %805 = vmatpush1.msra.mxu0 %v804
      %806 = vmatprep.subr.mxu0 0.0
      %v807 = vand.u32 %v149, 4294901760
      %v808 = vsub.f32 %v149, %v807
      %v809 = vand.u32 %v808, 4294901760
      %810 = vmatpush1.msra.mxu0 %v809
      %811 = vmatprep.subr.mxu0 0.0
      %v812 = vand.u32 %v150, 4294901760
      %v813 = vsub.f32 %v150, %v812
      %v814 = vand.u32 %v813, 4294901760
      %815 = vmatpush1.msra.mxu0 %v814
      %816 = vmatprep.subr.mxu0 0.0
      %v817 = vand.u32 %v151, 4294901760
      %v818 = vsub.f32 %v151, %v817
      %v819 = vand.u32 %v818, 4294901760
      %820 = vmatpush1.msra.mxu0 %v819
      %821 = vmatprep.subr.mxu0 0.0
      %v822 = vand.u32 %v152, 4294901760
      %v823 = vsub.f32 %v152, %v822
      %v824 = vand.u32 %v823, 4294901760
      %825 = vmatpush1.msra.mxu0 %v824
      %826 = vmatprep.subr.mxu0 0.0
      %v827 = vand.u32 %v153, 4294901760
      %v828 = vsub.f32 %v153, %v827
      %v829 = vand.u32 %v828, 4294901760
      %830 = vmatpush1.msra.mxu0 %v829
      %831 = vmatprep.subr.mxu0 0.0
      %v832 = vand.u32 %v154, 4294901760
      %v833 = vsub.f32 %v154, %v832
      %v834 = vand.u32 %v833, 4294901760
      %835 = vmatpush1.msra.mxu0 %v834
      %836 = vmatprep.subr.mxu0 0.0
      %v837 = vand.u32 %v155, 4294901760
      %v838 = vsub.f32 %v155, %v837
      %v839 = vand.u32 %v838, 4294901760
      %840 = vmatpush1.msra.mxu0 %v839
      %841 = vmatprep.subr.mxu0 0.0
      %v842 = vand.u32 %v156, 4294901760
      %v843 = vsub.f32 %v156, %v842
      %v844 = vand.u32 %v843, 4294901760
      %845 = vmatpush1.msra.mxu0 %v844
      %846 = vmatprep.subr.mxu0 0.0
      %v847 = vand.u32 %v157, 4294901760
      %v848 = vsub.f32 %v157, %v847
      %v849 = vand.u32 %v848, 4294901760
      %850 = vmatpush1.msra.mxu0 %v849
      %851 = vmatprep.subr.mxu0 0.0
      %v852 = vand.u32 %v158, 4294901760
      %v853 = vsub.f32 %v158, %v852
      %v854 = vand.u32 %v853, 4294901760
      %855 = vmatpush1.msra.mxu0 %v854
      %856 = vmatprep.subr.mxu0 0.0
      %v857 = vand.u32 %v159, 4294901760
      %v858 = vsub.f32 %v159, %v857
      %v859 = vand.u32 %v858, 4294901760
      %860 = vmatpush1.msra.mxu0 %v859
      %861 = vmatprep.subr.mxu0 0.0
      %v862 = vand.u32 %v160, 4294901760
      %v863 = vsub.f32 %v160, %v862
      %v864 = vand.u32 %v863, 4294901760
      %865 = vmatpush1.msra.mxu0 %v864
      %866 = vmatprep.subr.mxu0 0.0
      %v867 = vand.u32 %v161, 4294901760
      %v868 = vsub.f32 %v161, %v867
      %v869 = vand.u32 %v868, 4294901760
      %870 = vmatpush1.msra.mxu0 %v869
      %871 = vmatprep.subr.mxu0 0.0
      %v872 = vand.u32 %v162, 4294901760
      %v873 = vsub.f32 %v162, %v872
      %v874 = vand.u32 %v873, 4294901760
      %875 = vmatpush1.msra.mxu0 %v874
      %876 = vmatprep.subr.mxu0 0.0
      %v877 = vand.u32 %v163, 4294901760
      %v878 = vsub.f32 %v163, %v877
      %v879 = vand.u32 %v878, 4294901760
      %880 = vmatpush1.msra.mxu0 %v879
      %881 = vmatprep.subr.mxu0 0.0
      %v882 = vand.u32 %v164, 4294901760
      %v883 = vsub.f32 %v164, %v882
      %v884 = vand.u32 %v883, 4294901760
      %885 = vmatpush1.msra.mxu0 %v884
      %886 = vmatprep.subr.mxu0 0.0
      %v887 = vand.u32 %v165, 4294901760
      %v888 = vsub.f32 %v165, %v887
      %v889 = vand.u32 %v888, 4294901760
      %890 = vmatpush1.msra.mxu0 %v889
      %891 = vmatprep.subr.mxu0 0.0
      %v892 = vand.u32 %v166, 4294901760
      %v893 = vsub.f32 %v166, %v892
      %v894 = vand.u32 %v893, 4294901760
      %895 = vmatpush1.msra.mxu0 %v894
      %896 = vmatprep.subr.mxu0 0.0
      %v897 = vand.u32 %v167, 4294901760
      %v898 = vsub.f32 %v167, %v897
      %v899 = vand.u32 %v898, 4294901760
      %900 = vmatpush1.msra.mxu0 %v899
      %901 = vmatprep.subr.mxu0 0.0
      %v902 = vand.u32 %v168, 4294901760
      %v903 = vsub.f32 %v168, %v902
      %v904 = vand.u32 %v903, 4294901760
      %905 = vmatpush1.msra.mxu0 %v904
      %906 = vmatprep.subr.mxu0 0.0
      %v907 = vand.u32 %v169, 4294901760
      %v908 = vsub.f32 %v169, %v907
      %v909 = vand.u32 %v908, 4294901760
      %910 = vmatpush1.msra.mxu0 %v909
      %911 = vmatprep.subr.mxu0 0.0
      %v912 = vand.u32 %v170, 4294901760
      %v913 = vsub.f32 %v170, %v912
      %v914 = vand.u32 %v913, 4294901760
      %915 = vmatpush1.msra.mxu0 %v914
      %916 = vmatprep.subr.mxu0 0.0
      %v917 = vand.u32 %v171, 4294901760
      %v918 = vsub.f32 %v171, %v917
      %v919 = vand.u32 %v918, 4294901760
      %920 = vmatpush1.msra.mxu0 %v919
      %921 = vmatprep.subr.mxu0 0.0
      %v922 = vand.u32 %v172, 4294901760
      %v923 = vsub.f32 %v172, %v922
      %v924 = vand.u32 %v923, 4294901760
      %925 = vmatpush1.msra.mxu0 %v924
      %926 = vmatprep.subr.mxu0 0.0
      %v927 = vand.u32 %v173, 4294901760
      %v928 = vsub.f32 %v173, %v927
      %v929 = vand.u32 %v928, 4294901760
      %930 = vmatpush1.msra.mxu0 %v929
      %931 = vmatprep.subr.mxu0 0.0
      %v932 = vand.u32 %v174, 4294901760
      %v933 = vsub.f32 %v174, %v932
      %v934 = vand.u32 %v933, 4294901760
      %935 = vmatpush1.msra.mxu0 %v934
      %v936 = vand.u32 %v183, 4294901760
      %937 = vmatprep.mubr.f32.mxu0 %v936
      %v938 = vand.u32 %v182, 4294901760
      %939 = vmatmul.mubr.f32.gmra.mrb[0].mxu0 %v938
      %v940 = vpop.f32.mrb[0].mxu0
      %v941 = vadd.f32 %v773, %v940
      %v942 = vpop.f32.mrb[0].mxu0
      %943 = vdwg.mxu0
      %944 = vmatprep.subr.mxu0 0.0
      %v945 = vand.u32 %v143, 4294901760
      %946 = vmatpush1.msra.mxu0 %v945
      %947 = vmatprep.subr.mxu0 0.0
      %v948 = vand.u32 %v144, 4294901760
      %949 = vmatpush1.msra.mxu0 %v948
      %950 = vmatprep.subr.mxu0 0.0
      %v951 = vand.u32 %v145, 4294901760
      %952 = vmatpush1.msra.mxu0 %v951
      %953 = vmatprep.subr.mxu0 0.0
      %v954 = vand.u32 %v146, 4294901760
      %955 = vmatpush1.msra.mxu0 %v954
      %956 = vmatprep.subr.mxu0 0.0
      %v957 = vand.u32 %v147, 4294901760
      %958 = vmatpush1.msra.mxu0 %v957
      %959 = vmatprep.subr.mxu0 0.0
      %v960 = vand.u32 %v148, 4294901760
      %961 = vmatpush1.msra.mxu0 %v960
      %962 = vmatprep.subr.mxu0 0.0
      %v963 = vand.u32 %v149, 4294901760
      %964 = vmatpush1.msra.mxu0 %v963
      %965 = vmatprep.subr.mxu0 0.0
      %v966 = vand.u32 %v150, 4294901760
      %967 = vmatpush1.msra.mxu0 %v966
      %968 = vmatprep.subr.mxu0 0.0
      %v969 = vand.u32 %v151, 4294901760
      %970 = vmatpush1.msra.mxu0 %v969
      %971 = vmatprep.subr.mxu0 0.0
      %v972 = vand.u32 %v152, 4294901760
      %973 = vmatpush1.msra.mxu0 %v972
      %974 = vmatprep.subr.mxu0 0.0
      %v975 = vand.u32 %v153, 4294901760
      %976 = vmatpush1.msra.mxu0 %v975
      %977 = vmatprep.subr.mxu0 0.0
      %v978 = vand.u32 %v154, 4294901760
      %979 = vmatpush1.msra.mxu0 %v978
      %980 = vmatprep.subr.mxu0 0.0
      %v981 = vand.u32 %v155, 4294901760
      %982 = vmatpush1.msra.mxu0 %v981
      %983 = vmatprep.subr.mxu0 0.0
      %v984 = vand.u32 %v156, 4294901760
      %985 = vmatpush1.msra.mxu0 %v984
      %986 = vmatprep.subr.mxu0 0.0
      %v987 = vand.u32 %v157, 4294901760
      %988 = vmatpush1.msra.mxu0 %v987
      %989 = vmatprep.subr.mxu0 0.0
      %v990 = vand.u32 %v158, 4294901760
      %991 = vmatpush1.msra.mxu0 %v990
      %992 = vmatprep.subr.mxu0 0.0
      %v993 = vand.u32 %v159, 4294901760
      %994 = vmatpush1.msra.mxu0 %v993
      %995 = vmatprep.subr.mxu0 0.0
      %v996 = vand.u32 %v160, 4294901760
      %997 = vmatpush1.msra.mxu0 %v996
      %998 = vmatprep.subr.mxu0 0.0
      %v999 = vand.u32 %v161, 4294901760
      %1000 = vmatpush1.msra.mxu0 %v999
      %1001 = vmatprep.subr.mxu0 0.0
      %v1002 = vand.u32 %v162, 4294901760
      %1003 = vmatpush1.msra.mxu0 %v1002
      %1004 = vmatprep.subr.mxu0 0.0
      %v1005 = vand.u32 %v163, 4294901760
      %1006 = vmatpush1.msra.mxu0 %v1005
      %1007 = vmatprep.subr.mxu0 0.0
      %v1008 = vand.u32 %v164, 4294901760
      %1009 = vmatpush1.msra.mxu0 %v1008
      %1010 = vmatprep.subr.mxu0 0.0
      %v1011 = vand.u32 %v165, 4294901760
      %1012 = vmatpush1.msra.mxu0 %v1011
      %1013 = vmatprep.subr.mxu0 0.0
      %v1014 = vand.u32 %v166, 4294901760
      %1015 = vmatpush1.msra.mxu0 %v1014
      %1016 = vmatprep.subr.mxu0 0.0
      %v1017 = vand.u32 %v167, 4294901760
      %1018 = vmatpush1.msra.mxu0 %v1017
      %1019 = vmatprep.subr.mxu0 0.0
      %v1020 = vand.u32 %v168, 4294901760
      %1021 = vmatpush1.msra.mxu0 %v1020
      %1022 = vmatprep.subr.mxu0 0.0
      %v1023 = vand.u32 %v169, 4294901760
      %1024 = vmatpush1.msra.mxu0 %v1023
      %1025 = vmatprep.subr.mxu0 0.0
      %v1026 = vand.u32 %v170, 4294901760
      %1027 = vmatpush1.msra.mxu0 %v1026
      %1028 = vmatprep.subr.mxu0 0.0
      %v1029 = vand.u32 %v171, 4294901760
      %1030 = vmatpush1.msra.mxu0 %v1029
      %1031 = vmatprep.subr.mxu0 0.0
      %v1032 = vand.u32 %v172, 4294901760
      %1033 = vmatpush1.msra.mxu0 %v1032
      %1034 = vmatprep.subr.mxu0 0.0
      %v1035 = vand.u32 %v173, 4294901760
      %1036 = vmatpush1.msra.mxu0 %v1035
      %1037 = vmatprep.subr.mxu0 0.0
      %v1038 = vand.u32 %v174, 4294901760
      %1039 = vmatpush1.msra.mxu0 %v1038
      %v1040 = vand.u32 %v183, 4294901760
      %1041 = vmatprep.mubr.f32.mxu0 %v1040
      %v1042 = vand.u32 %v182, 4294901760
      %1043 = vmatmul.mubr.f32.gmra.mrb[0].mxu0 %v1042
      %v1044 = vpop.f32.mrb[0].mxu0
      %v1045 = vadd.f32 %v941, %v1044
      %v1046 = vpop.f32.mrb[0].mxu0
      %1047 = vdwg.mxu0
      %v1048 = vmax.f32 %v1045, 0.0
      %vm1049 = vcmask 25600
      %1050 = vst.msk [vmem:[%s141] sm:$0x3] %vm1049, %v1048
      %p1051 = scmp.lt.s32.totalorder %s13, 1
      %s1052 = scalar_select %p1051, %s13, 1
      %s1053 = smul.addr %s1052, 2
      %s1054 = scalar_lea.vmem %s2, %s1053
      // Predicated region
      $region29: #{compressive3d_forward.3} parent=27 // pred_check
        %p1055 = pneg %p78
      $region30: #{compressive3d_forward.3} parent=27 // pred_check_branch
        %1057 = sbr.rel (%p1055) target = $region32
      $region31: #{compressive3d_forward.3} parent=27 // pred_region
        _
      $region32: #{compressive3d_forward.3} parent=27 // pred_fallthru
        _
    $region28: #{compressive3d_forward.3} parent=5 // pred_fallthru
      _
    %p1058 = scmp.le.s32.totalorder 2, %s8
    // Predicated region
    $region33: #{compressive3d_forward.3} parent=5 // pred_check
      %p1059 = pneg %p1058
    $region34: #{compressive3d_forward.3} parent=5 // pred_check_branch
      %1061 = sbr.rel (%p1059) target = $region36
    $region35: #{compressive3d_forward.3} parent=5 // pred_region
      %s1062 = ssub.s32 %s8, 2
      // Predicated region
      $region37: #{compressive3d_forward.3} parent=35 // pred_check
        %p1063 = pneg %p84
      $region38: #{compressive3d_forward.3} parent=35 // pred_check_branch
        %1065 = sbr.rel (%p1063) target = $region40
      $region39: #{compressive3d_forward.3} parent=35 // pred_region
        %p1066 = scmp.lt.s32.totalorder %s14, 1
        %s1067 = scalar_select %p1066, %s14, 1
        %s1068 = smul.addr %s1067, 2
        %s1069 = scalar_lea.vmem %s2, %s1068
      $region40: #{compressive3d_forward.3} parent=35 // pred_fallthru
        _
    $region36: #{compressive3d_forward.3} parent=5 // pred_fallthru
      _
  $region6: #{compressive3d_forward.3} parent=0 // loop_footer
    %s12 = sadd.s32 1, %s8
  $region7: #{compressive3d_forward.3} parent=0 // loop_footer_branch
    %7 = sbr.rel target = $region3
  $region8: #{compressive3d_forward.3} parent=0 // loop_exit
    _

// kernel: compressive3d_forward.4
$region0: #{compressive3d_forward.4}
  #allocation0 [shape = 'u32[]', space=smem, size = 0x4, offset = 0x4, fixed_abs, tag = 'smem constant byte address 0x4 - core index']
  #allocation1 [shape = 'u32[144,128]{1,0:T(1,128)}', space=vmem, size = 0x12000, scoped, tag = 'internal scratch']
  #allocation2 [shape = 'f32[1]{0:T(128)S(6)}', space=smem, size = 0x200, scoped, tag = 'scoped memory for compressive3d_forward.4']
  %s0 = inlined_call_operand.vmem [shape: f32[1,90], index: 0, kind: input, shape index: {}]
  %s1 = inlined_call_operand.<no memory space> [shape: f32[1], index: 1, kind: input, shape index: {}]
  %s2 = inlined_call_operand.vmem [shape: f32[2,2,640], index: 2, kind: input, shape index: {}]
  %s3 = inlined_call_operand.vmem [shape: f32[2,1,384], index: 3, kind: output, shape index: {}]
  %s4 = sld [smem:[#allocation0]]
  $region49: #{compressive3d_forward.4} parent=0
    _
  %s6 = ssub.s32 1, %s4
  %s7 = scalar_select 0, %s6, %s4
  %8 = sst [smem:[#allocation2]] %s1
  $region1: #{compressive3d_forward.4} parent=0
    #allocation3 [shape = 'u8[512]{0}', space=smem, size = 0x200, scoped, tag = 'input window, operand 0, single buffered']
    #allocation4 [shape = 's32[2]{0}', space=sflag, size = 0x8, scoped, tag = 'scoped memory for compressive3d_forward.4']
    %9 = vsyncpa [#allocation4], 0
    loop: start=0, step=1, limit=4
    $region2: #{compressive3d_forward.4} parent=1 // loop_pre_header
      _
    $region3: #{compressive3d_forward.4} parent=1 // loop_header
      %s11 = sphi 0, %s15
      %p12 = scmp.ge.s32.totalorder %s11, 4
      %s19 = sphi 0, %s19
      %s21 = sphi 0, %s19
      %s22 = sphi 0, %s21
      %s36 = sphi 0, %s22
      %s40 = sphi 0, %s40
      %s42 = sphi 0, %s40
      %s43 = sphi 0, %s42
      %s57 = sphi 0, %s43
      %s63 = sphi 0, %s65
      %s66 = sphi 0, %s63
      %s67 = sphi 0, %s66
      %s83 = sphi 0, %s67
      %s89 = sphi 0, %s91
      %s92 = sphi 0, %s89
      %s93 = sphi 0, %s92
      %s109 = sphi 0, %s93
    $region4: #{compressive3d_forward.4} parent=1 // loop_header_branch
      %14 = sbr.rel (%p12) target = $region8
    $region5: #{compressive3d_forward.4} parent=1 // loop_body
      %s16 = ssub.s32 %s11, 1
      %s17 = ssub.s32 %s11, 2
      %s18 = sadd.s32 %s11, 1
      %s20 = sadd.s32 %s19, 1
      %p23 = scmp.eq.s32.totalorder %s11, 1
      %p24 = scmp.ne.s32.totalorder %s19, %s21
      %p25 = scmp.eq.s32.totalorder %s11, 0
      %p26 = por %p24, %p25
      %p27 = scmp.ne.s32.totalorder %s19, %s21
      %p28 = scmp.eq.s32.totalorder %s16, 1
      %p29 = por %p27, %p28
      %p30 = scmp.ne.s32.totalorder %s21, %s22
      %p31 = scmp.eq.s32.totalorder %s16, 0
      %p32 = por %p30, %p31
      %p33 = scmp.ne.s32.totalorder %s21, %s22
      %p34 = scmp.eq.s32.totalorder %s17, 1
      %p35 = por %p33, %p34
      %p37 = scmp.ne.s32.totalorder %s22, %s36
      %p38 = scmp.eq.s32.totalorder %s17, 0
      %p39 = por %p37, %p38
      %s41 = sadd.s32 %s40, 1
      %p44 = scmp.eq.s32.totalorder %s11, 1
      %p45 = scmp.ne.s32.totalorder %s40, %s42
      %p46 = scmp.eq.s32.totalorder %s11, 0
      %p47 = por %p45, %p46
      %p48 = scmp.ne.s32.totalorder %s40, %s42
      %p49 = scmp.eq.s32.totalorder %s16, 1
      %p50 = por %p48, %p49
      %p51 = scmp.ne.s32.totalorder %s42, %s43
      %p52 = scmp.eq.s32.totalorder %s16, 0
      %p53 = por %p51, %p52
      %p54 = scmp.ne.s32.totalorder %s42, %s43
      %p55 = scmp.eq.s32.totalorder %s17, 1
      %p56 = por %p54, %p55
      %p58 = scmp.ne.s32.totalorder %s43, %s57
      %p59 = scmp.eq.s32.totalorder %s17, 0
      %p60 = por %p58, %p59
      %s61 = ssub.s32 %s11, %s18
      %p62 = scmp.eq.s32.totalorder %s61, 0
      %s64 = sadd.s32 %s63, 1
      %s65 = scalar_select %p62, %s63, %s64
      %p68 = pneg %p62
      %p69 = scmp.eq.s32.totalorder %s11, 1
      %p70 = por %p68, %p69
      %p71 = scmp.ne.s32.totalorder %s63, %s66
      %p72 = scmp.eq.s32.totalorder %s11, 0
      %p73 = por %p71, %p72
      %p74 = scmp.ne.s32.totalorder %s63, %s66
      %p75 = scmp.eq.s32.totalorder %s16, 1
      %p76 = por %p74, %p75
      %p77 = scmp.ne.s32.totalorder %s66, %s67
      %p78 = scmp.eq.s32.totalorder %s16, 0
      %p79 = por %p77, %p78
      %p80 = scmp.ne.s32.totalorder %s66, %s67
      %p81 = scmp.eq.s32.totalorder %s17, 1
      %p82 = por %p80, %p81
      %p84 = scmp.ne.s32.totalorder %s67, %s83
      %p85 = scmp.eq.s32.totalorder %s17, 0
      %p86 = por %p84, %p85
      %s87 = ssub.s32 %s11, %s18
      %p88 = scmp.eq.s32.totalorder %s87, 0
      %s90 = sadd.s32 %s89, 1
      %s91 = scalar_select %p88, %s89, %s90
      %p94 = pneg %p88
      %p95 = scmp.eq.s32.totalorder %s11, 1
      %p96 = por %p94, %p95
      %p97 = scmp.ne.s32.totalorder %s89, %s92
      %p98 = scmp.eq.s32.totalorder %s11, 0
      %p99 = por %p97, %p98
      %p100 = scmp.ne.s32.totalorder %s89, %s92
      %p101 = scmp.eq.s32.totalorder %s16, 1
      %p102 = por %p100, %p101
      %p103 = scmp.ne.s32.totalorder %s92, %s93
      %p104 = scmp.eq.s32.totalorder %s16, 0
      %p105 = por %p103, %p104
      %p106 = scmp.ne.s32.totalorder %s92, %s93
      %p107 = scmp.eq.s32.totalorder %s17, 1
      %p108 = por %p106, %p107
      %p110 = scmp.ne.s32.totalorder %s93, %s109
      %p111 = scmp.eq.s32.totalorder %s17, 0
      %p112 = por %p110, %p111
      %p113 = scmp.le.s32.totalorder 1, %s11
      %p114 = scmp.lt.s32.totalorder %s11, 3
      %p115 = pnand %p113, %p114
      %p116 = pneg %p115
      // Predicated region
      $region9: #{compressive3d_forward.4} parent=5 // pred_check
        _
      $region10: #{compressive3d_forward.4} parent=5 // pred_check_branch
        %118 = sbr.rel (%p115) target = $region12
      $region11: #{compressive3d_forward.4} parent=5 // pred_region
        %s119 = ssub.s32 %s11, 1
        // Predicated region
        $region13: #{compressive3d_forward.4} parent=11 // pred_check
          %p120 = pneg %p32
        $region14: #{compressive3d_forward.4} parent=11 // pred_check_branch
          %122 = sbr.rel (%p120) target = $region16
        $region15: #{compressive3d_forward.4} parent=11 // pred_region
          %s124 = ssub.s32 16, 16
          %125 = vsyncadd [#allocation4], %s124
          %s127 = sshll.u32 %s0, 4
          %s128 = int_to_ptr.vmem [resolvable:$true] %s127
          %130 = dma.vmem_to_smem %s128, 16, [#allocation3], [#allocation4]
        $region16: #{compressive3d_forward.4} parent=11 // pred_fallthru
          _
        // Predicated region
        $region17: #{compressive3d_forward.4} parent=11 // pred_check
          %p131 = pneg %p53
        $region18: #{compressive3d_forward.4} parent=11 // pred_check_branch
          %133 = sbr.rel (%p131) target = $region20
        $region19: #{compressive3d_forward.4} parent=11 // pred_region
          _
        $region20: #{compressive3d_forward.4} parent=11 // pred_fallthru
          _
      $region12: #{compressive3d_forward.4} parent=5 // pred_fallthru
        _
      %p134 = scmp.lt.s32.totalorder %s11, 2
      // Predicated region
      $region21: #{compressive3d_forward.4} parent=5 // pred_check
        %p135 = pneg %p134
      $region22: #{compressive3d_forward.4} parent=5 // pred_check_branch
        %137 = sbr.rel (%p135) target = $region24
      $region23: #{compressive3d_forward.4} parent=5 // pred_region
        // Predicated region
        $region25: #{compressive3d_forward.4} parent=23 // pred_check
          %p138 = pneg %p73
        $region26: #{compressive3d_forward.4} parent=23 // pred_check_branch
          %140 = sbr.rel (%p138) target = $region28
        $region27: #{compressive3d_forward.4} parent=23 // pred_region
          %p141 = scmp.lt.s32.totalorder %s11, 1
          %s142 = scalar_select %p141, %s11, 1
          %s143 = smul.addr %s142, 5
          %s144 = smul.addr %s143, 2
          %s145 = scalar_lea.vmem %s2, %s144
        $region28: #{compressive3d_forward.4} parent=23 // pred_fallthru
          _
      $region24: #{compressive3d_forward.4} parent=5 // pred_fallthru
        _
      %p146 = scmp.le.s32.totalorder 1, %s11
      %p147 = scmp.lt.s32.totalorder %s11, 3
      %p148 = pnand %p146, %p147
      %p149 = pneg %p148
      // Predicated region
      $region29: #{compressive3d_forward.4} parent=5 // pred_check
        _
      $region30: #{compressive3d_forward.4} parent=5 // pred_check_branch
        %151 = sbr.rel (%p148) target = $region32
      $region31: #{compressive3d_forward.4} parent=5 // pred_region
        %s152 = ssub.s32 %s11, 1
        // Predicated region
        $region33: #{compressive3d_forward.4} parent=31 // pred_check
          %p153 = pneg %p32
        $region34: #{compressive3d_forward.4} parent=31 // pred_check_branch
          %155 = sbr.rel (%p153) target = $region36
        $region35: #{compressive3d_forward.4} parent=31 // pred_region
          %156 = dma.done [#allocation4], 16
        $region36: #{compressive3d_forward.4} parent=31 // pred_fallthru
          _
        %157 = sfence
        %p158 = pneg %p32
        %p159 = pneg %p29
        %p160 = pneg %p53
        %p161 = pneg %p50
        %p162 = scmp.lt.s32.totalorder %s16, 1
        %s163 = scalar_select %p162, %s16, 1
        %s164 = smul.addr %s163, 5
        %s165 = smul.addr %s164, 2
        %s166 = scalar_lea.vmem %s2, %s165
        %p167 = pneg %p79
        %p168 = pneg %p76
        %p169 = pneg %p105
        %p170 = pneg %p102
        %p171 = scmp.lt.s32.totalorder %s16, 1
        %s172 = scalar_select %p171, %s16, 1
        %s173 = smul.addr %s172, 3
        %s174 = scalar_lea.vmem %s3, %s173
        %p175 = scmp.lt.s32.totalorder %s16, 1
        %s176 = scalar_select %p175, %s16, 1
        %s177 = smul.addr %s176, 5
        %s178 = smul.addr %s177, 2
        %s179 = scalar_lea.vmem %s2, %s178
        %p180 = scmp.lt.s32.totalorder %s16, 1
        %s181 = scalar_select %p180, %s16, 1
        %s182 = smul.addr %s181, 3
        %s183 = scalar_lea.vmem %s3, %s182
        %s184 = sld [smem:[#allocation2]]
        %v185 = vstv %s184
        %v186 = vadd.f32 %v185, 0.0
        %v187 = vld [vmem:[%s179] ss:$2 sm:$0x7]
        %s188 = sld [smem:[#allocation3]]
        %v189 = vstv %s188
        %v190 = vmul.f32 %v189, %v187
        %v191 = vadd.f32 %v186, %v190
        %v192 = vld [vmem:[%s179] ss:$2 sm:$0xf]
        %s193 = sld [smem:[#allocation3 + $0x1]]
        %v194 = vstv %s193
        %v195 = vmul.f32 %v194, %v192
        %197 = vrot.lane.b32.xlu0 %v195, 127
        %v198 = vpop.permute.xlu0 %197
        %v199 = vrot.slane %v198, 1
        %vm200 = vcmask 1039360
        %v201 = vsel %vm200, %v198, %v199
        %v203 = vadd.f32 %v191, %v201
        %s204 = sld [smem:[#allocation3 + $0x2]]
        %v205 = vstv %s204
        %v206 = vmul.f32 %v205, %v192
        %208 = vrot.lane.b32.xlu0 %v206, 126
        %v209 = vpop.permute.xlu0 %208
        %v210 = vrot.slane %v209, 1
        %vm211 = vcmask 1031168
        %v212 = vsel %vm211, %v209, %v210
        %v214 = vadd.f32 %v203, %v212
        %s215 = sld [smem:[#allocation3 + $0x3]]
        %v216 = vstv %s215
        %v217 = vmul.f32 %v216, %v192
        %219 = vrot.lane.b32.xlu0 %v217, 122
        %v220 = vpop.permute.xlu0 %219
        %v221 = vrot.slane %v220, 1
        %vm222 = vcmask 998400
        %v223 = vsel %vm222, %v220, %v221
        %v225 = vadd.f32 %v214, %v223
        %s226 = sld [smem:[#allocation3 + $0x4]]
        %v227 = vstv %s226
        %v228 = vmul.f32 %v227, %v192
        %230 = vrot.lane.b32.xlu0 %v228, 121
        %v231 = vpop.permute.xlu0 %230
        %v232 = vrot.slane %v231, 1
        %vm233 = vcmask 990208
        %v234 = vsel %vm233, %v231, %v232
        %v236 = vadd.f32 %v225, %v234
        %s237 = sld [smem:[#allocation3 + $0x5]]
        %v238 = vstv %s237
        %v239 = vmul.f32 %v238, %v192
        %241 = vrot.lane.b32.xlu0 %v239, 120
        %v242 = vpop.permute.xlu0 %241
        %v243 = vrot.slane %v242, 1
        %vm244 = vcmask 982016
        %v245 = vsel %vm244, %v242, %v243
        %v247 = vadd.f32 %v236, %v245
        %s248 = sld [smem:[#allocation3 + $0x6]]
        %v249 = vstv %s248
        %v250 = vmul.f32 %v249, %v192
        %252 = vrot.lane.b32.xlu0 %v250, 116
        %v253 = vpop.permute.xlu0 %252
        %v254 = vrot.slane %v253, 1
        %vm255 = vcmask 949248
        %v256 = vsel %vm255, %v253, %v254
        %v258 = vadd.f32 %v247, %v256
        %s259 = sld [smem:[#allocation3 + $0x7]]
        %v260 = vstv %s259
        %v261 = vmul.f32 %v260, %v192
        %263 = vrot.lane.b32.xlu0 %v261, 115
        %v264 = vpop.permute.xlu0 %263
        %v265 = vrot.slane %v264, 1
        %vm266 = vcmask 941056
        %v267 = vsel %vm266, %v264, %v265
        %v269 = vadd.f32 %v258, %v267
        %s270 = sld [smem:[#allocation3 + $0x8]]
        %v271 = vstv %s270
        %v272 = vmul.f32 %v271, %v192
        %274 = vrot.lane.b32.xlu0 %v272, 114
        %v275 = vpop.permute.xlu0 %274
        %v276 = vrot.slane %v275, 1
        %vm277 = vcmask 932864
        %v278 = vsel %vm277, %v275, %v276
        %v280 = vadd.f32 %v269, %v278
        %s281 = sld [smem:[#allocation3 + $0x9]]
        %v282 = vstv %s281
        %v283 = vmul.f32 %v282, %v192
        %285 = vrot.lane.b32.xlu0 %v283, 92
        %v286 = vpop.permute.xlu0 %285
        %v287 = vrot.slane %v286, 1
        %vm288 = vcmask 752640
        %v289 = vsel %vm288, %v286, %v287
        %v291 = vadd.f32 %v280, %v289
        %s292 = sld [smem:[#allocation3 + $0xa]]
        %v293 = vstv %s292
        %v294 = vmul.f32 %v293, %v192
        %296 = vrot.lane.b32.xlu0 %v294, 91
        %v297 = vpop.permute.xlu0 %296
        %v298 = vrot.slane %v297, 1
        %vm299 = vcmask 744448
        %v300 = vsel %vm299, %v297, %v298
        %v302 = vadd.f32 %v291, %v300
        %s303 = sld [smem:[#allocation3 + $0xb]]
        %v304 = vstv %s303
        %v305 = vmul.f32 %v304, %v192
        %307 = vrot.lane.b32.xlu0 %v305, 90
        %v308 = vpop.permute.xlu0 %307
        %v309 = vrot.slane %v308, 1
        %vm310 = vcmask 736256
        %v311 = vsel %vm310, %v308, %v309
        %v313 = vadd.f32 %v302, %v311
        %s314 = sld [smem:[#allocation3 + $0xc]]
        %v315 = vstv %s314
        %v316 = vmul.f32 %v315, %v192
        %318 = vrot.lane.b32.xlu0 %v316, 86
        %v319 = vpop.permute.xlu0 %318
        %v320 = vrot.slane %v319, 1
        %vm321 = vcmask 703488
        %v322 = vsel %vm321, %v319, %v320
        %v324 = vadd.f32 %v313, %v322
        %s325 = sld [smem:[#allocation3 + $0xd]]
        %v326 = vstv %s325
        %v327 = vmul.f32 %v326, %v192
        %329 = vrot.lane.b32.xlu0 %v327, 85
        %v330 = vpop.permute.xlu0 %329
        %v331 = vrot.slane %v330, 1
        %vm332 = vcmask 695296
        %v333 = vsel %vm332, %v330, %v331
        %v335 = vadd.f32 %v324, %v333
        %s336 = sld [smem:[#allocation3 + $0xe]]
        %v337 = vstv %s336
        %v338 = vmul.f32 %v337, %v192
        %340 = vrot.lane.b32.xlu0 %v338, 84
        %v341 = vpop.permute.xlu0 %340
        %v342 = vrot.slane %v341, 1
        %vm343 = vcmask 687104
        %v344 = vsel %vm343, %v341, %v342
        %v346 = vadd.f32 %v335, %v344
        %s347 = sld [smem:[#allocation3 + $0xf]]
        %v348 = vstv %s347
        %v349 = vmul.f32 %v348, %v192
        %351 = vrot.lane.b32.xlu0 %v349, 80
        %v352 = vpop.permute.xlu0 %351
        %v353 = vrot.slane %v352, 1
        %vm354 = vcmask 654336
        %v355 = vsel %vm354, %v352, %v353
        %v357 = vadd.f32 %v346, %v355
        %s358 = sld [smem:[#allocation3 + $0x10]]
        %v359 = vstv %s358
        %v360 = vmul.f32 %v359, %v192
        %362 = vrot.lane.b32.xlu0 %v360, 79
        %v363 = vpop.permute.xlu0 %362
        %v364 = vrot.slane %v363, 1
        %vm365 = vcmask 646144
        %v366 = vsel %vm365, %v363, %v364
        %v368 = vadd.f32 %v357, %v366
        %s369 = sld [smem:[#allocation3 + $0x11]]
        %v370 = vstv %s369
        %v371 = vmul.f32 %v370, %v192
        %373 = vrot.lane.b32.xlu0 %v371, 78
        %v374 = vpop.permute.xlu0 %373
        %v375 = vrot.slane %v374, 1
        %vm376 = vcmask 637952
        %v377 = vsel %vm376, %v374, %v375
        %v379 = vadd.f32 %v368, %v377
        %s380 = sld [smem:[#allocation3 + $0x12]]
        %v381 = vstv %s380
        %v382 = vmul.f32 %v381, %v192
        %384 = vrot.lane.b32.xlu0 %v382, 56
        %v385 = vpop.permute.xlu0 %384
        %v386 = vrot.slane %v385, 1
        %vm387 = vcmask 457728
        %v388 = vsel %vm387, %v385, %v386
        %v390 = vadd.f32 %v379, %v388
        %s391 = sld [smem:[#allocation3 + $0x13]]
        %v392 = vstv %s391
        %v393 = vmul.f32 %v392, %v192
        %395 = vrot.lane.b32.xlu0 %v393, 55
        %v396 = vpop.permute.xlu0 %395
        %v397 = vrot.slane %v396, 1
        %vm398 = vcmask 449536
        %v399 = vsel %vm398, %v396, %v397
        %v401 = vadd.f32 %v390, %v399
        %s402 = sld [smem:[#allocation3 + $0x14]]
        %v403 = vstv %s402
        %v404 = vmul.f32 %v403, %v192
        %406 = vrot.lane.b32.xlu0 %v404, 54
        %v407 = vpop.permute.xlu0 %406
        %v408 = vrot.slane %v407, 1
        %vm409 = vcmask 441344
        %v410 = vsel %vm409, %v407, %v408
        %v412 = vadd.f32 %v401, %v410
        %s413 = sld [smem:[#allocation3 + $0x15]]
        %v414 = vstv %s413
        %v415 = vmul.f32 %v414, %v192
        %417 = vrot.lane.b32.xlu0 %v415, 50
        %v418 = vpop.permute.xlu0 %417
        %v419 = vrot.slane %v418, 1
        %vm420 = vcmask 408576
        %v421 = vsel %vm420, %v418, %v419
        %v423 = vadd.f32 %v412, %v421
        %s424 = sld [smem:[#allocation3 + $0x16]]
        %v425 = vstv %s424
        %v426 = vmul.f32 %v425, %v192
        %428 = vrot.lane.b32.xlu0 %v426, 49
        %v429 = vpop.permute.xlu0 %428
        %v430 = vrot.slane %v429, 1
        %vm431 = vcmask 400384
        %v432 = vsel %vm431, %v429, %v430
        %v434 = vadd.f32 %v423, %v432
        %s435 = sld [smem:[#allocation3 + $0x17]]
        %v436 = vstv %s435
        %v437 = vmul.f32 %v436, %v192
        %439 = vrot.lane.b32.xlu0 %v437, 48
        %v440 = vpop.permute.xlu0 %439
        %v441 = vrot.slane %v440, 1
        %vm442 = vcmask 392192
        %v443 = vsel %vm442, %v440, %v441
        %v445 = vadd.f32 %v434, %v443
        %s446 = sld [smem:[#allocation3 + $0x18]]
        %v447 = vstv %s446
        %v448 = vmul.f32 %v447, %v192
        %450 = vrot.lane.b32.xlu0 %v448, 44
        %v451 = vpop.permute.xlu0 %450
        %v452 = vrot.slane %v451, 1
        %vm453 = vcmask 359424
        %v454 = vsel %vm453, %v451, %v452
        %v456 = vadd.f32 %v445, %v454
        %s457 = sld [smem:[#allocation3 + $0x19]]
        %v458 = vstv %s457
        %v459 = vmul.f32 %v458, %v192
        %461 = vrot.lane.b32.xlu0 %v459, 43
        %v462 = vpop.permute.xlu0 %461
        %v463 = vrot.slane %v462, 1
        %vm464 = vcmask 351232
        %v465 = vsel %vm464, %v462, %v463
        %v467 = vadd.f32 %v456, %v465
        %s468 = sld [smem:[#allocation3 + $0x1a]]
        %v469 = vstv %s468
        %v470 = vmul.f32 %v469, %v192
        %472 = vrot.lane.b32.xlu0 %v470, 42
        %v473 = vpop.permute.xlu0 %472
        %v474 = vrot.slane %v473, 1
        %vm475 = vcmask 343040
        %v476 = vsel %vm475, %v473, %v474
        %v478 = vadd.f32 %v467, %v476
        %s479 = sld [smem:[#allocation3 + $0x1b]]
        %v480 = vstv %s479
        %v481 = vmul.f32 %v480, %v192
        %483 = vrot.lane.b32.xlu0 %v481, 20
        %v484 = vpop.permute.xlu0 %483
        %v485 = vrot.slane %v484, 1
        %vm486 = vcmask 162816
        %v487 = vsel %vm486, %v484, %v485
        %v489 = vadd.f32 %v478, %v487
        %s490 = sld [smem:[#allocation3 + $0x1c]]
        %v491 = vstv %s490
        %v492 = vmul.f32 %v491, %v192
        %494 = vrot.lane.b32.xlu0 %v492, 19
        %v495 = vpop.permute.xlu0 %494
        %v496 = vrot.slane %v495, 1
        %vm497 = vcmask 154624
        %v498 = vsel %vm497, %v495, %v496
        %v500 = vadd.f32 %v489, %v498
        %s501 = sld [smem:[#allocation3 + $0x1d]]
        %v502 = vstv %s501
        %v503 = vmul.f32 %v502, %v192
        %505 = vrot.lane.b32.xlu0 %v503, 18
        %v506 = vpop.permute.xlu0 %505
        %v507 = vrot.slane %v506, 1
        %vm508 = vcmask 146432
        %v509 = vsel %vm508, %v506, %v507
        %v511 = vadd.f32 %v500, %v509
        %s512 = sld [smem:[#allocation3 + $0x1e]]
        %v513 = vstv %s512
        %v514 = vmul.f32 %v513, %v192
        %516 = vrot.lane.b32.xlu0 %v514, 14
        %v517 = vpop.permute.xlu0 %516
        %v518 = vrot.slane %v517, 1
        %vm519 = vcmask 113664
        %v520 = vsel %vm519, %v517, %v518
        %v522 = vadd.f32 %v511, %v520
        %s523 = sld [smem:[#allocation3 + $0x1f]]
        %v524 = vstv %s523
        %v525 = vmul.f32 %v524, %v192
        %527 = vrot.lane.b32.xlu0 %v525, 13
        %v528 = vpop.permute.xlu0 %527
        %v529 = vrot.slane %v528, 1
        %vm530 = vcmask 105472
        %v531 = vsel %vm530, %v528, %v529
        %v533 = vadd.f32 %v522, %v531
        %s534 = sld [smem:[#allocation3 + $0x20]]
        %v535 = vstv %s534
        %v536 = vmul.f32 %v535, %v192
        %538 = vrot.lane.b32.xlu0 %v536, 12
        %v539 = vpop.permute.xlu0 %538
        %v540 = vrot.slane %v539, 1
        %vm541 = vcmask 97280
        %v542 = vsel %vm541, %v539, %v540
        %v544 = vadd.f32 %v533, %v542
        %s545 = sld [smem:[#allocation3 + $0x21]]
        %v546 = vstv %s545
        %v547 = vmul.f32 %v546, %v192
        %549 = vrot.lane.b32.xlu0 %v547, 8
        %v550 = vpop.permute.xlu0 %549
        %v551 = vrot.slane %v550, 1
        %vm552 = vcmask 64512
        %v553 = vsel %vm552, %v550, %v551
        %v555 = vadd.f32 %v544, %v553
        %s556 = sld [smem:[#allocation3 + $0x22]]
        %v557 = vstv %s556
        %v558 = vmul.f32 %v557, %v192
        %560 = vrot.lane.b32.xlu0 %v558, 7
        %v561 = vpop.permute.xlu0 %560
        %v562 = vrot.slane %v561, 1
        %vm563 = vcmask 56320
        %v564 = vsel %vm563, %v561, %v562
        %v566 = vadd.f32 %v555, %v564
        %s567 = sld [smem:[#allocation3 + $0x23]]
        %v568 = vstv %s567
        %v569 = vmul.f32 %v568, %v192
        %571 = vrot.lane.b32.xlu0 %v569, 6
        %v572 = vpop.permute.xlu0 %571
        %v573 = vrot.slane %v572, 1
        %vm574 = vcmask 48128
        %v575 = vsel %vm574, %v572, %v573
        %v577 = vadd.f32 %v566, %v575
        %s578 = scalar_lea.vmem %s179, 2
        %v579 = vld [vmem:[%s578] ss:$2 sm:$0xf]
        %s580 = sld [smem:[#allocation3 + $0x24]]
        %v581 = vstv %s580
        %v582 = vmul.f32 %v581, %v579
        %584 = vrot.lane.b32.xlu0 %v582, 112
        %v585 = vpop.permute.xlu0 %584
        %v586 = vrot.slane %v585, 1
        %vm587 = vcmask 916480
        %v588 = vsel %vm587, %v585, %v586
        %v590 = vadd.f32 %v577, %v588
        %s591 = sld [smem:[#allocation3 + $0x25]]
        %v592 = vstv %s591
        %v593 = vmul.f32 %v592, %v579
        %595 = vrot.lane.b32.xlu0 %v593, 111
        %v596 = vpop.permute.xlu0 %595
        %v597 = vrot.slane %v596, 1
        %vm598 = vcmask 908288
        %v599 = vsel %vm598, %v596, %v597
        %v601 = vadd.f32 %v590, %v599
        %s602 = sld [smem:[#allocation3 + $0x26]]
        %v603 = vstv %s602
        %v604 = vmul.f32 %v603, %v579
        %606 = vrot.lane.b32.xlu0 %v604, 110
        %v607 = vpop.permute.xlu0 %606
        %v608 = vrot.slane %v607, 1
        %vm609 = vcmask 900096
        %v610 = vsel %vm609, %v607, %v608
        %v612 = vadd.f32 %v601, %v610
        %s613 = sld [smem:[#allocation3 + $0x27]]
        %v614 = vstv %s613
        %v615 = vmul.f32 %v614, %v579
        %617 = vrot.lane.b32.xlu0 %v615, 106
        %v618 = vpop.permute.xlu0 %617
        %v619 = vrot.slane %v618, 1
        %vm620 = vcmask 867328
        %v621 = vsel %vm620, %v618, %v619
        %v623 = vadd.f32 %v612, %v621
        %s624 = sld [smem:[#allocation3 + $0x28]]
        %v625 = vstv %s624
        %v626 = vmul.f32 %v625, %v579
        %628 = vrot.lane.b32.xlu0 %v626, 105
        %v629 = vpop.permute.xlu0 %628
        %v630 = vrot.slane %v629, 1
        %vm631 = vcmask 859136
        %v632 = vsel %vm631, %v629, %v630
        %v634 = vadd.f32 %v623, %v632
        %s635 = sld [smem:[#allocation3 + $0x29]]
        %v636 = vstv %s635
        %v637 = vmul.f32 %v636, %v579
        %639 = vrot.lane.b32.xlu0 %v637, 104
        %v640 = vpop.permute.xlu0 %639
        %v641 = vrot.slane %v640, 1
        %vm642 = vcmask 850944
        %v643 = vsel %vm642, %v640, %v641
        %v645 = vadd.f32 %v634, %v643
        %s646 = sld [smem:[#allocation3 + $0x2a]]
        %v647 = vstv %s646
        %v648 = vmul.f32 %v647, %v579
        %650 = vrot.lane.b32.xlu0 %v648, 100
        %v651 = vpop.permute.xlu0 %650
        %v652 = vrot.slane %v651, 1
        %vm653 = vcmask 818176
        %v654 = vsel %vm653, %v651, %v652
        %v656 = vadd.f32 %v645, %v654
        %s657 = sld [smem:[#allocation3 + $0x2b]]
        %v658 = vstv %s657
        %v659 = vmul.f32 %v658, %v579
        %661 = vrot.lane.b32.xlu0 %v659, 99
        %v662 = vpop.permute.xlu0 %661
        %v663 = vrot.slane %v662, 1
        %vm664 = vcmask 809984
        %v665 = vsel %vm664, %v662, %v663
        %v667 = vadd.f32 %v656, %v665
        %s668 = sld [smem:[#allocation3 + $0x2c]]
        %v669 = vstv %s668
        %v670 = vmul.f32 %v669, %v579
        %672 = vrot.lane.b32.xlu0 %v670, 98
        %v673 = vpop.permute.xlu0 %672
        %v674 = vrot.slane %v673, 1
        %vm675 = vcmask 801792
        %v676 = vsel %vm675, %v673, %v674
        %v678 = vadd.f32 %v667, %v676
        %s679 = scalar_lea.vmem %s179, 1
        %v680 = vld [vmem:[%s679] ss:$2 sm:$0x7]
        %s681 = sld [smem:[#allocation3 + $0x2d]]
        %v682 = vstv %s681
        %v683 = vmul.f32 %v682, %v680
        %v684 = vadd.f32 %v678, %v683
        %v685 = vld [vmem:[%s679] ss:$2 sm:$0xf]
        %s686 = sld [smem:[#allocation3 + $0x2e]]
        %v687 = vstv %s686
        %v688 = vmul.f32 %v687, %v685
        %690 = vrot.lane.b32.xlu0 %v688, 127
        %v691 = vpop.permute.xlu0 %690
        %v692 = vrot.slane %v691, 1
        %v693 = vsel %vm200, %v691, %v692
        %v695 = vadd.f32 %v684, %v693
        %s696 = sld [smem:[#allocation3 + $0x2f]]
        %v697 = vstv %s696
        %v698 = vmul.f32 %v697, %v685
        %700 = vrot.lane.b32.xlu0 %v698, 126
        %v701 = vpop.permute.xlu0 %700
        %v702 = vrot.slane %v701, 1
        %v703 = vsel %vm211, %v701, %v702
        %v705 = vadd.f32 %v695, %v703
        %s706 = sld [smem:[#allocation3 + $0x30]]
        %v707 = vstv %s706
        %v708 = vmul.f32 %v707, %v685
        %710 = vrot.lane.b32.xlu0 %v708, 122
        %v711 = vpop.permute.xlu0 %710
        %v712 = vrot.slane %v711, 1
        %v713 = vsel %vm222, %v711, %v712
        %v715 = vadd.f32 %v705, %v713
        %s716 = sld [smem:[#allocation3 + $0x31]]
        %v717 = vstv %s716
        %v718 = vmul.f32 %v717, %v685
        %720 = vrot.lane.b32.xlu0 %v718, 121
        %v721 = vpop.permute.xlu0 %720
        %v722 = vrot.slane %v721, 1
        %v723 = vsel %vm233, %v721, %v722
        %v725 = vadd.f32 %v715, %v723
        %s726 = sld [smem:[#allocation3 + $0x32]]
        %v727 = vstv %s726
        %v728 = vmul.f32 %v727, %v685
        %730 = vrot.lane.b32.xlu0 %v728, 120
        %v731 = vpop.permute.xlu0 %730
        %v732 = vrot.slane %v731, 1
        %v733 = vsel %vm244, %v731, %v732
        %v735 = vadd.f32 %v725, %v733
        %s736 = sld [smem:[#allocation3 + $0x33]]
        %v737 = vstv %s736
        %v738 = vmul.f32 %v737, %v685
        %740 = vrot.lane.b32.xlu0 %v738, 116
        %v741 = vpop.permute.xlu0 %740
        %v742 = vrot.slane %v741, 1
        %v743 = vsel %vm255, %v741, %v742
        %v745 = vadd.f32 %v735, %v743
        %s746 = sld [smem:[#allocation3 + $0x34]]
        %v747 = vstv %s746
        %v748 = vmul.f32 %v747, %v685
        %750 = vrot.lane.b32.xlu0 %v748, 115
        %v751 = vpop.permute.xlu0 %750
        %v752 = vrot.slane %v751, 1
        %v753 = vsel %vm266, %v751, %v752
        %v755 = vadd.f32 %v745, %v753
        %s756 = sld [smem:[#allocation3 + $0x35]]
        %v757 = vstv %s756
        %v758 = vmul.f32 %v757, %v685
        %760 = vrot.lane.b32.xlu0 %v758, 114
        %v761 = vpop.permute.xlu0 %760
        %v762 = vrot.slane %v761, 1
        %v763 = vsel %vm277, %v761, %v762
        %v765 = vadd.f32 %v755, %v763
        %s766 = sld [smem:[#allocation3 + $0x36]]
        %v767 = vstv %s766
        %v768 = vmul.f32 %v767, %v685
        %770 = vrot.lane.b32.xlu0 %v768, 92
        %v771 = vpop.permute.xlu0 %770
        %v772 = vrot.slane %v771, 1
        %v773 = vsel %vm288, %v771, %v772
        %v775 = vadd.f32 %v765, %v773
        %s776 = sld [smem:[#allocation3 + $0x37]]
        %v777 = vstv %s776
        %v778 = vmul.f32 %v777, %v685
        %780 = vrot.lane.b32.xlu0 %v778, 91
        %v781 = vpop.permute.xlu0 %780
        %v782 = vrot.slane %v781, 1
        %v783 = vsel %vm299, %v781, %v782
        %v785 = vadd.f32 %v775, %v783
        %s786 = sld [smem:[#allocation3 + $0x38]]
        %v787 = vstv %s786
        %v788 = vmul.f32 %v787, %v685
        %790 = vrot.lane.b32.xlu0 %v788, 90
        %v791 = vpop.permute.xlu0 %790
        %v792 = vrot.slane %v791, 1
        %v793 = vsel %vm310, %v791, %v792
        %v795 = vadd.f32 %v785, %v793
        %s796 = sld [smem:[#allocation3 + $0x39]]
        %v797 = vstv %s796
        %v798 = vmul.f32 %v797, %v685
        %800 = vrot.lane.b32.xlu0 %v798, 86
        %v801 = vpop.permute.xlu0 %800
        %v802 = vrot.slane %v801, 1
        %v803 = vsel %vm321, %v801, %v802
        %v805 = vadd.f32 %v795, %v803
        %s806 = sld [smem:[#allocation3 + $0x3a]]
        %v807 = vstv %s806
        %v808 = vmul.f32 %v807, %v685
        %810 = vrot.lane.b32.xlu0 %v808, 85
        %v811 = vpop.permute.xlu0 %810
        %v812 = vrot.slane %v811, 1
        %v813 = vsel %vm332, %v811, %v812
        %v815 = vadd.f32 %v805, %v813
        %s816 = sld [smem:[#allocation3 + $0x3b]]
        %v817 = vstv %s816
        %v818 = vmul.f32 %v817, %v685
        %820 = vrot.lane.b32.xlu0 %v818, 84
        %v821 = vpop.permute.xlu0 %820
        %v822 = vrot.slane %v821, 1
        %v823 = vsel %vm343, %v821, %v822
        %v825 = vadd.f32 %v815, %v823
        %s826 = sld [smem:[#allocation3 + $0x3c]]
        %v827 = vstv %s826
        %v828 = vmul.f32 %v827, %v685
        %830 = vrot.lane.b32.xlu0 %v828, 80
        %v831 = vpop.permute.xlu0 %830
        %v832 = vrot.slane %v831, 1
        %v833 = vsel %vm354, %v831, %v832
        %v835 = vadd.f32 %v825, %v833
        %s836 = sld [smem:[#allocation3 + $0x3d]]
        %v837 = vstv %s836
        %v838 = vmul.f32 %v837, %v685
        %840 = vrot.lane.b32.xlu0 %v838, 79
        %v841 = vpop.permute.xlu0 %840
        %v842 = vrot.slane %v841, 1
        %v843 = vsel %vm365, %v841, %v842
        %v845 = vadd.f32 %v835, %v843
        %s846 = sld [smem:[#allocation3 + $0x3e]]
        %v847 = vstv %s846
        %v848 = vmul.f32 %v847, %v685
        %850 = vrot.lane.b32.xlu0 %v848, 78
        %v851 = vpop.permute.xlu0 %850
        %v852 = vrot.slane %v851, 1
        %v853 = vsel %vm376, %v851, %v852
        %v855 = vadd.f32 %v845, %v853
        %s856 = sld [smem:[#allocation3 + $0x3f]]
        %v857 = vstv %s856
        %v858 = vmul.f32 %v857, %v685
        %860 = vrot.lane.b32.xlu0 %v858, 56
        %v861 = vpop.permute.xlu0 %860
        %v862 = vrot.slane %v861, 1
        %v863 = vsel %vm387, %v861, %v862
        %v865 = vadd.f32 %v855, %v863
        %s866 = sld [smem:[#allocation3 + $0x40]]
        %v867 = vstv %s866
        %v868 = vmul.f32 %v867, %v685
        %870 = vrot.lane.b32.xlu0 %v868, 55
        %v871 = vpop.permute.xlu0 %870
        %v872 = vrot.slane %v871, 1
        %v873 = vsel %vm398, %v871, %v872
        %v875 = vadd.f32 %v865, %v873
        %s876 = sld [smem:[#allocation3 + $0x41]]
        %v877 = vstv %s876
        %v878 = vmul.f32 %v877, %v685
        %880 = vrot.lane.b32.xlu0 %v878, 54
        %v881 = vpop.permute.xlu0 %880
        %v882 = vrot.slane %v881, 1
        %v883 = vsel %vm409, %v881, %v882
        %v885 = vadd.f32 %v875, %v883
        %s886 = sld [smem:[#allocation3 + $0x42]]
        %v887 = vstv %s886
        %v888 = vmul.f32 %v887, %v685
        %890 = vrot.lane.b32.xlu0 %v888, 50
        %v891 = vpop.permute.xlu0 %890
        %v892 = vrot.slane %v891, 1
        %v893 = vsel %vm420, %v891, %v892
        %v895 = vadd.f32 %v885, %v893
        %s896 = sld [smem:[#allocation3 + $0x43]]
        %v897 = vstv %s896
        %v898 = vmul.f32 %v897, %v685
        %900 = vrot.lane.b32.xlu0 %v898, 49
        %v901 = vpop.permute.xlu0 %900
        %v902 = vrot.slane %v901, 1
        %v903 = vsel %vm431, %v901, %v902
        %v905 = vadd.f32 %v895, %v903
        %s906 = sld [smem:[#allocation3 + $0x44]]
        %v907 = vstv %s906
        %v908 = vmul.f32 %v907, %v685
        %910 = vrot.lane.b32.xlu0 %v908, 48
        %v911 = vpop.permute.xlu0 %910
        %v912 = vrot.slane %v911, 1
        %v913 = vsel %vm442, %v911, %v912
        %v915 = vadd.f32 %v905, %v913
        %s916 = sld [smem:[#allocation3 + $0x45]]
        %v917 = vstv %s916
        %v918 = vmul.f32 %v917, %v685
        %920 = vrot.lane.b32.xlu0 %v918, 44
        %v921 = vpop.permute.xlu0 %920
        %v922 = vrot.slane %v921, 1
        %v923 = vsel %vm453, %v921, %v922
        %v925 = vadd.f32 %v915, %v923
        %s926 = sld [smem:[#allocation3 + $0x46]]
        %v927 = vstv %s926
        %v928 = vmul.f32 %v927, %v685
        %930 = vrot.lane.b32.xlu0 %v928, 43
        %v931 = vpop.permute.xlu0 %930
        %v932 = vrot.slane %v931, 1
        %v933 = vsel %vm464, %v931, %v932
        %v935 = vadd.f32 %v925, %v933
        %s936 = sld [smem:[#allocation3 + $0x47]]
        %v937 = vstv %s936
        %v938 = vmul.f32 %v937, %v685
        %940 = vrot.lane.b32.xlu0 %v938, 42
        %v941 = vpop.permute.xlu0 %940
        %v942 = vrot.slane %v941, 1
        %v943 = vsel %vm475, %v941, %v942
        %v945 = vadd.f32 %v935, %v943
        %s946 = sld [smem:[#allocation3 + $0x48]]
        %v947 = vstv %s946
        %v948 = vmul.f32 %v947, %v685
        %950 = vrot.lane.b32.xlu0 %v948, 20
        %v951 = vpop.permute.xlu0 %950
        %v952 = vrot.slane %v951, 1
        %v953 = vsel %vm486, %v951, %v952
        %v955 = vadd.f32 %v945, %v953
        %s956 = sld [smem:[#allocation3 + $0x49]]
        %v957 = vstv %s956
        %v958 = vmul.f32 %v957, %v685
        %960 = vrot.lane.b32.xlu0 %v958, 19
        %v961 = vpop.permute.xlu0 %960
        %v962 = vrot.slane %v961, 1
        %v963 = vsel %vm497, %v961, %v962
        %v965 = vadd.f32 %v955, %v963
        %s966 = sld [smem:[#allocation3 + $0x4a]]
        %v967 = vstv %s966
        %v968 = vmul.f32 %v967, %v685
        %970 = vrot.lane.b32.xlu0 %v968, 18
        %v971 = vpop.permute.xlu0 %970
        %v972 = vrot.slane %v971, 1
        %v973 = vsel %vm508, %v971, %v972
        %v975 = vadd.f32 %v965, %v973
        %s976 = sld [smem:[#allocation3 + $0x4b]]
        %v977 = vstv %s976
        %v978 = vmul.f32 %v977, %v685
        %980 = vrot.lane.b32.xlu0 %v978, 14
        %v981 = vpop.permute.xlu0 %980
        %v982 = vrot.slane %v981, 1
        %v983 = vsel %vm519, %v981, %v982
        %v985 = vadd.f32 %v975, %v983
        %s986 = sld [smem:[#allocation3 + $0x4c]]
        %v987 = vstv %s986
        %v988 = vmul.f32 %v987, %v685
        %990 = vrot.lane.b32.xlu0 %v988, 13
        %v991 = vpop.permute.xlu0 %990
        %v992 = vrot.slane %v991, 1
        %v993 = vsel %vm530, %v991, %v992
        %v995 = vadd.f32 %v985, %v993
        %s996 = sld [smem:[#allocation3 + $0x4d]]
        %v997 = vstv %s996
        %v998 = vmul.f32 %v997, %v685
        %1000 = vrot.lane.b32.xlu0 %v998, 12
        %v1001 = vpop.permute.xlu0 %1000
        %v1002 = vrot.slane %v1001, 1
        %v1003 = vsel %vm541, %v1001, %v1002
        %v1005 = vadd.f32 %v995, %v1003
        %s1006 = sld [smem:[#allocation3 + $0x4e]]
        %v1007 = vstv %s1006
        %v1008 = vmul.f32 %v1007, %v685
        %1010 = vrot.lane.b32.xlu0 %v1008, 8
        %v1011 = vpop.permute.xlu0 %1010
        %v1012 = vrot.slane %v1011, 1
        %v1013 = vsel %vm552, %v1011, %v1012
        %v1015 = vadd.f32 %v1005, %v1013
        %s1016 = sld [smem:[#allocation3 + $0x4f]]
        %v1017 = vstv %s1016
        %v1018 = vmul.f32 %v1017, %v685
        %1020 = vrot.lane.b32.xlu0 %v1018, 7
        %v1021 = vpop.permute.xlu0 %1020
        %v1022 = vrot.slane %v1021, 1
        %v1023 = vsel %vm563, %v1021, %v1022
        %v1025 = vadd.f32 %v1015, %v1023
        %s1026 = sld [smem:[#allocation3 + $0x50]]
        %v1027 = vstv %s1026
        %v1028 = vmul.f32 %v1027, %v685
        %1030 = vrot.lane.b32.xlu0 %v1028, 6
        %v1031 = vpop.permute.xlu0 %1030
        %v1032 = vrot.slane %v1031, 1
        %v1033 = vsel %vm574, %v1031, %v1032
        %v1035 = vadd.f32 %v1025, %v1033
        %s1036 = scalar_lea.vmem %s179, 3
        %v1037 = vld [vmem:[%s1036] ss:$2 sm:$0xf]
        %s1038 = sld [smem:[#allocation3 + $0x51]]
        %v1039 = vstv %s1038
        %v1040 = vmul.f32 %v1039, %v1037
        %1042 = vrot.lane.b32.xlu0 %v1040, 112
        %v1043 = vpop.permute.xlu0 %1042
        %v1044 = vrot.slane %v1043, 1
        %v1045 = vsel %vm587, %v1043, %v1044
        %v1047 = vadd.f32 %v1035, %v1045
        %s1048 = sld [smem:[#allocation3 + $0x52]]
        %v1049 = vstv %s1048
        %v1050 = vmul.f32 %v1049, %v1037
        %1052 = vrot.lane.b32.xlu0 %v1050, 111
        %v1053 = vpop.permute.xlu0 %1052
        %v1054 = vrot.slane %v1053, 1
        %v1055 = vsel %vm598, %v1053, %v1054
        %v1057 = vadd.f32 %v1047, %v1055
        %s1058 = sld [smem:[#allocation3 + $0x53]]
        %v1059 = vstv %s1058
        %v1060 = vmul.f32 %v1059, %v1037
        %1062 = vrot.lane.b32.xlu0 %v1060, 110
        %v1063 = vpop.permute.xlu0 %1062
        %v1064 = vrot.slane %v1063, 1
        %v1065 = vsel %vm609, %v1063, %v1064
        %v1067 = vadd.f32 %v1057, %v1065
        %s1068 = sld [smem:[#allocation3 + $0x54]]
        %v1069 = vstv %s1068
        %v1070 = vmul.f32 %v1069, %v1037
        %1072 = vrot.lane.b32.xlu0 %v1070, 106
        %v1073 = vpop.permute.xlu0 %1072
        %v1074 = vrot.slane %v1073, 1
        %v1075 = vsel %vm620, %v1073, %v1074
        %v1077 = vadd.f32 %v1067, %v1075
        %s1078 = sld [smem:[#allocation3 + $0x55]]
        %v1079 = vstv %s1078
        %v1080 = vmul.f32 %v1079, %v1037
        %1082 = vrot.lane.b32.xlu0 %v1080, 105
        %v1083 = vpop.permute.xlu0 %1082
        %v1084 = vrot.slane %v1083, 1
        %v1085 = vsel %vm631, %v1083, %v1084
        %v1087 = vadd.f32 %v1077, %v1085
        %s1088 = sld [smem:[#allocation3 + $0x56]]
        %v1089 = vstv %s1088
        %v1090 = vmul.f32 %v1089, %v1037
        %1092 = vrot.lane.b32.xlu0 %v1090, 104
        %v1093 = vpop.permute.xlu0 %1092
        %v1094 = vrot.slane %v1093, 1
        %v1095 = vsel %vm642, %v1093, %v1094
        %v1097 = vadd.f32 %v1087, %v1095
        %s1098 = sld [smem:[#allocation3 + $0x57]]
        %v1099 = vstv %s1098
        %v1100 = vmul.f32 %v1099, %v1037
        %1102 = vrot.lane.b32.xlu0 %v1100, 100
        %v1103 = vpop.permute.xlu0 %1102
        %v1104 = vrot.slane %v1103, 1
        %v1105 = vsel %vm653, %v1103, %v1104
        %v1107 = vadd.f32 %v1097, %v1105
        %s1108 = sld [smem:[#allocation3 + $0x58]]
        %v1109 = vstv %s1108
        %v1110 = vmul.f32 %v1109, %v1037
        %1112 = vrot.lane.b32.xlu0 %v1110, 99
        %v1113 = vpop.permute.xlu0 %1112
        %v1114 = vrot.slane %v1113, 1
        %v1115 = vsel %vm664, %v1113, %v1114
        %v1117 = vadd.f32 %v1107, %v1115
        %s1118 = sld [smem:[#allocation3 + $0x59]]
        %v1119 = vstv %s1118
        %v1120 = vmul.f32 %v1119, %v1037
        %1122 = vrot.lane.b32.xlu0 %v1120, 98
        %v1123 = vpop.permute.xlu0 %1122
        %v1124 = vrot.slane %v1123, 1
        %v1125 = vsel %vm675, %v1123, %v1124
        %v1127 = vadd.f32 %v1117, %v1125
        %v1128 = vmax.f32 %v1127, 0.0
        %v1129 = vlaneseq
        %vm1130 = vcmp.ge.s32.totalorder %v1129, 0
        %vm1131 = vcmp.lt.s32.totalorder %v1129, 384
        %vm1132 = vmand %vm1130, %vm1131
        %1133 = vst.msk [vmem:[%s183] sm:$0x7] %vm1132, %v1128
        %p1134 = scmp.lt.s32.totalorder %s16, 1
        %s1135 = scalar_select %p1134, %s16, 1
        %s1136 = smul.addr %s1135, 3
        %s1137 = scalar_lea.vmem %s3, %s1136
        // Predicated region
        $region37: #{compressive3d_forward.4} parent=31 // pred_check
          %p1138 = pneg %p102
        $region38: #{compressive3d_forward.4} parent=31 // pred_check_branch
          %1140 = sbr.rel (%p1138) target = $region40
        $region39: #{compressive3d_forward.4} parent=31 // pred_region
          _
        $region40: #{compressive3d_forward.4} parent=31 // pred_fallthru
          _
      $region32: #{compressive3d_forward.4} parent=5 // pred_fallthru
        _
      %p1141 = scmp.le.s32.totalorder 2, %s11
      // Predicated region
      $region41: #{compressive3d_forward.4} parent=5 // pred_check
        %p1142 = pneg %p1141
      $region42: #{compressive3d_forward.4} parent=5 // pred_check_branch
        %1144 = sbr.rel (%p1142) target = $region44
      $region43: #{compressive3d_forward.4} parent=5 // pred_region
        %s1145 = ssub.s32 %s11, 2
        // Predicated region
        $region45: #{compressive3d_forward.4} parent=43 // pred_check
          %p1146 = pneg %p108
        $region46: #{compressive3d_forward.4} parent=43 // pred_check_branch
          %1148 = sbr.rel (%p1146) target = $region48
        $region47: #{compressive3d_forward.4} parent=43 // pred_region
          %p1149 = scmp.lt.s32.totalorder %s17, 1
          %s1150 = scalar_select %p1149, %s17, 1
          %s1151 = smul.addr %s1150, 3
          %s1152 = scalar_lea.vmem %s3, %s1151
        $region48: #{compressive3d_forward.4} parent=43 // pred_fallthru
          _
      $region44: #{compressive3d_forward.4} parent=5 // pred_fallthru
        _
    $region6: #{compressive3d_forward.4} parent=1 // loop_footer
      %s15 = sadd.s32 1, %s11
    $region7: #{compressive3d_forward.4} parent=1 // loop_footer_branch
      %10 = sbr.rel target = $region3
    $region8: #{compressive3d_forward.4} parent=1 // loop_exit
      _
    %1153 = vsyncpa [#allocation4], 1
    %s1154 = scalar_lea.sflag [#allocation4], 1
    %1155 = vsyncpa %s1154, 1

// kernel: compressive3d_forward.5
$region0: #{compressive3d_forward.5}
  #allocation0 [shape = 'u32[]', space=smem, size = 0x4, offset = 0x4, fixed_abs, tag = 'smem constant byte address 0x4 - core index']
  #allocation1 [shape = 'u32[144,128]{1,0:T(1,128)}', space=vmem, size = 0x12000, scoped, tag = 'internal scratch']
  #allocation2 [shape = 'f32[1]{0:T(128)S(6)}', space=smem, size = 0x200, scoped, tag = 'scoped memory for compressive3d_forward.5']
  %s0 = inlined_call_operand.vmem [shape: f32[1,45], index: 0, kind: input, shape index: {}]
  %s1 = inlined_call_operand.<no memory space> [shape: f32[1], index: 1, kind: input, shape index: {}]
  %s2 = inlined_call_operand.vmem [shape: f32[2,1,2560], index: 2, kind: input, shape index: {}]
  %s3 = inlined_call_operand.vmem [shape: f32[2,1,2048], index: 3, kind: output, shape index: {}]
  %s4 = sld [smem:[#allocation0]]
  $region49: #{compressive3d_forward.5} parent=0
    _
  %s6 = ssub.s32 1, %s4
  %s7 = scalar_select 0, %s6, %s4
  %8 = sst [smem:[#allocation2]] %s1
  $region1: #{compressive3d_forward.5} parent=0
    #allocation3 [shape = 'u8[512]{0}', space=smem, size = 0x200, scoped, tag = 'input window, operand 0, single buffered']
    #allocation4 [shape = 's32[2]{0}', space=sflag, size = 0x8, scoped, tag = 'scoped memory for compressive3d_forward.5']
    %9 = vsyncpa [#allocation4], 0
    loop: start=0, step=1, limit=4
    $region2: #{compressive3d_forward.5} parent=1 // loop_pre_header
      _
    $region3: #{compressive3d_forward.5} parent=1 // loop_header
      %s11 = sphi 0, %s15
      %p12 = scmp.ge.s32.totalorder %s11, 4
      %s19 = sphi 0, %s19
      %s21 = sphi 0, %s19
      %s22 = sphi 0, %s21
      %s36 = sphi 0, %s22
      %s40 = sphi 0, %s40
      %s42 = sphi 0, %s40
      %s43 = sphi 0, %s42
      %s57 = sphi 0, %s43
      %s63 = sphi 0, %s65
      %s66 = sphi 0, %s63
      %s67 = sphi 0, %s66
      %s83 = sphi 0, %s67
      %s89 = sphi 0, %s91
      %s92 = sphi 0, %s89
      %s93 = sphi 0, %s92
      %s109 = sphi 0, %s93
    $region4: #{compressive3d_forward.5} parent=1 // loop_header_branch
      %14 = sbr.rel (%p12) target = $region8
    $region5: #{compressive3d_forward.5} parent=1 // loop_body
      %s16 = ssub.s32 %s11, 1
      %s17 = ssub.s32 %s11, 2
      %s18 = sadd.s32 %s11, 1
      %s20 = sadd.s32 %s19, 1
      %p23 = scmp.eq.s32.totalorder %s11, 1
      %p24 = scmp.ne.s32.totalorder %s19, %s21
      %p25 = scmp.eq.s32.totalorder %s11, 0
      %p26 = por %p24, %p25
      %p27 = scmp.ne.s32.totalorder %s19, %s21
      %p28 = scmp.eq.s32.totalorder %s16, 1
      %p29 = por %p27, %p28
      %p30 = scmp.ne.s32.totalorder %s21, %s22
      %p31 = scmp.eq.s32.totalorder %s16, 0
      %p32 = por %p30, %p31
      %p33 = scmp.ne.s32.totalorder %s21, %s22
      %p34 = scmp.eq.s32.totalorder %s17, 1
      %p35 = por %p33, %p34
      %p37 = scmp.ne.s32.totalorder %s22, %s36
      %p38 = scmp.eq.s32.totalorder %s17, 0
      %p39 = por %p37, %p38
      %s41 = sadd.s32 %s40, 1
      %p44 = scmp.eq.s32.totalorder %s11, 1
      %p45 = scmp.ne.s32.totalorder %s40, %s42
      %p46 = scmp.eq.s32.totalorder %s11, 0
      %p47 = por %p45, %p46
      %p48 = scmp.ne.s32.totalorder %s40, %s42
      %p49 = scmp.eq.s32.totalorder %s16, 1
      %p50 = por %p48, %p49
      %p51 = scmp.ne.s32.totalorder %s42, %s43
      %p52 = scmp.eq.s32.totalorder %s16, 0
      %p53 = por %p51, %p52
      %p54 = scmp.ne.s32.totalorder %s42, %s43
      %p55 = scmp.eq.s32.totalorder %s17, 1
      %p56 = por %p54, %p55
      %p58 = scmp.ne.s32.totalorder %s43, %s57
      %p59 = scmp.eq.s32.totalorder %s17, 0
      %p60 = por %p58, %p59
      %s61 = ssub.s32 %s11, %s18
      %p62 = scmp.eq.s32.totalorder %s61, 0
      %s64 = sadd.s32 %s63, 1
      %s65 = scalar_select %p62, %s63, %s64
      %p68 = pneg %p62
      %p69 = scmp.eq.s32.totalorder %s11, 1
      %p70 = por %p68, %p69
      %p71 = scmp.ne.s32.totalorder %s63, %s66
      %p72 = scmp.eq.s32.totalorder %s11, 0
      %p73 = por %p71, %p72
      %p74 = scmp.ne.s32.totalorder %s63, %s66
      %p75 = scmp.eq.s32.totalorder %s16, 1
      %p76 = por %p74, %p75
      %p77 = scmp.ne.s32.totalorder %s66, %s67
      %p78 = scmp.eq.s32.totalorder %s16, 0
      %p79 = por %p77, %p78
      %p80 = scmp.ne.s32.totalorder %s66, %s67
      %p81 = scmp.eq.s32.totalorder %s17, 1
      %p82 = por %p80, %p81
      %p84 = scmp.ne.s32.totalorder %s67, %s83
      %p85 = scmp.eq.s32.totalorder %s17, 0
      %p86 = por %p84, %p85
      %s87 = ssub.s32 %s11, %s18
      %p88 = scmp.eq.s32.totalorder %s87, 0
      %s90 = sadd.s32 %s89, 1
      %s91 = scalar_select %p88, %s89, %s90
      %p94 = pneg %p88
      %p95 = scmp.eq.s32.totalorder %s11, 1
      %p96 = por %p94, %p95
      %p97 = scmp.ne.s32.totalorder %s89, %s92
      %p98 = scmp.eq.s32.totalorder %s11, 0
      %p99 = por %p97, %p98
      %p100 = scmp.ne.s32.totalorder %s89, %s92
      %p101 = scmp.eq.s32.totalorder %s16, 1
      %p102 = por %p100, %p101
      %p103 = scmp.ne.s32.totalorder %s92, %s93
      %p104 = scmp.eq.s32.totalorder %s16, 0
      %p105 = por %p103, %p104
      %p106 = scmp.ne.s32.totalorder %s92, %s93
      %p107 = scmp.eq.s32.totalorder %s17, 1
      %p108 = por %p106, %p107
      %p110 = scmp.ne.s32.totalorder %s93, %s109
      %p111 = scmp.eq.s32.totalorder %s17, 0
      %p112 = por %p110, %p111
      %p113 = scmp.le.s32.totalorder 1, %s11
      %p114 = scmp.lt.s32.totalorder %s11, 3
      %p115 = pnand %p113, %p114
      %p116 = pneg %p115
      // Predicated region
      $region9: #{compressive3d_forward.5} parent=5 // pred_check
        _
      $region10: #{compressive3d_forward.5} parent=5 // pred_check_branch
        %118 = sbr.rel (%p115) target = $region12
      $region11: #{compressive3d_forward.5} parent=5 // pred_region
        %s119 = ssub.s32 %s11, 1
        // Predicated region
        $region13: #{compressive3d_forward.5} parent=11 // pred_check
          %p120 = pneg %p32
        $region14: #{compressive3d_forward.5} parent=11 // pred_check_branch
          %122 = sbr.rel (%p120) target = $region16
        $region15: #{compressive3d_forward.5} parent=11 // pred_region
          %s124 = ssub.s32 16, 16
          %125 = vsyncadd [#allocation4], %s124
          %s127 = sshll.u32 %s0, 4
          %s128 = int_to_ptr.vmem [resolvable:$true] %s127
          %130 = dma.vmem_to_smem %s128, 16, [#allocation3], [#allocation4]
        $region16: #{compressive3d_forward.5} parent=11 // pred_fallthru
          _
        // Predicated region
        $region17: #{compressive3d_forward.5} parent=11 // pred_check
          %p131 = pneg %p53
        $region18: #{compressive3d_forward.5} parent=11 // pred_check_branch
          %133 = sbr.rel (%p131) target = $region20
        $region19: #{compressive3d_forward.5} parent=11 // pred_region
          _
        $region20: #{compressive3d_forward.5} parent=11 // pred_fallthru
          _
      $region12: #{compressive3d_forward.5} parent=5 // pred_fallthru
        _
      %p134 = scmp.lt.s32.totalorder %s11, 2
      // Predicated region
      $region21: #{compressive3d_forward.5} parent=5 // pred_check
        %p135 = pneg %p134
      $region22: #{compressive3d_forward.5} parent=5 // pred_check_branch
        %137 = sbr.rel (%p135) target = $region24
      $region23: #{compressive3d_forward.5} parent=5 // pred_region
        // Predicated region
        $region25: #{compressive3d_forward.5} parent=23 // pred_check
          %p138 = pneg %p73
        $region26: #{compressive3d_forward.5} parent=23 // pred_check_branch
          %140 = sbr.rel (%p138) target = $region28
        $region27: #{compressive3d_forward.5} parent=23 // pred_region
          %p141 = scmp.lt.s32.totalorder %s11, 1
          %s142 = scalar_select %p141, %s11, 1
          %s143 = smul.addr %s142, 20
          %s144 = scalar_lea.vmem %s2, %s143
        $region28: #{compressive3d_forward.5} parent=23 // pred_fallthru
          _
      $region24: #{compressive3d_forward.5} parent=5 // pred_fallthru
        _
      %p145 = scmp.le.s32.totalorder 1, %s11
      %p146 = scmp.lt.s32.totalorder %s11, 3
      %p147 = pnand %p145, %p146
      %p148 = pneg %p147
      // Predicated region
      $region29: #{compressive3d_forward.5} parent=5 // pred_check
        _
      $region30: #{compressive3d_forward.5} parent=5 // pred_check_branch
        %150 = sbr.rel (%p147) target = $region32
      $region31: #{compressive3d_forward.5} parent=5 // pred_region
        %s151 = ssub.s32 %s11, 1
        // Predicated region
        $region33: #{compressive3d_forward.5} parent=31 // pred_check
          %p152 = pneg %p32
        $region34: #{compressive3d_forward.5} parent=31 // pred_check_branch
          %154 = sbr.rel (%p152) target = $region36
        $region35: #{compressive3d_forward.5} parent=31 // pred_region
          %155 = dma.done [#allocation4], 16
        $region36: #{compressive3d_forward.5} parent=31 // pred_fallthru
          _
        %156 = sfence
        %p157 = pneg %p32
        %p158 = pneg %p29
        %p159 = pneg %p53
        %p160 = pneg %p50
        %p161 = scmp.lt.s32.totalorder %s16, 1
        %s162 = scalar_select %p161, %s16, 1
        %s163 = smul.addr %s162, 20
        %s164 = scalar_lea.vmem %s2, %s163
        %p165 = pneg %p79
        %p166 = pneg %p76
        %p167 = pneg %p105
        %p168 = pneg %p102
        %p169 = scmp.lt.s32.totalorder %s16, 1
        %s170 = scalar_select %p169, %s16, 1
        %s171 = smul.addr %s170, 16
        %s172 = scalar_lea.vmem %s3, %s171
        %p173 = scmp.lt.s32.totalorder %s16, 1
        %s174 = scalar_select %p173, %s16, 1
        %s175 = smul.addr %s174, 20
        %s176 = scalar_lea.vmem %s2, %s175
        %p177 = scmp.lt.s32.totalorder %s16, 1
        %s178 = scalar_select %p177, %s16, 1
        %s179 = smul.addr %s178, 16
        %s180 = scalar_lea.vmem %s3, %s179
        %s181 = sld [smem:[#allocation2]]
        %v182 = vstv %s181
        %v183 = vadd.f32 %v182, 0.0
        %v184 = vld [vmem:[%s176] sm:$0xff]
        %v185 = vld [vmem:[%s176 + $0x8] sm:$0xff]
        %s186 = sld [smem:[#allocation3]]
        %v187 = vstv %s186
        %v188 = vmul.f32 %v187, %v184
        %v189 = vmul.f32 %v187, %v185
        %v190 = vadd.f32 %v183, %v188
        %v191 = vadd.f32 %v183, %v189
        %v192 = vld [vmem:[%s176] sm:$0xff]
        %v193 = vld [vmem:[%s176 + $0x8] sm:$0xff]
        %v194 = vld [vmem:[%s176 + $0x10] sm:$0x1]
        %s195 = sld [smem:[#allocation3 + $0x1]]
        %v196 = vstv %s195
        %v197 = vmul.f32 %v196, %v192
        %v198 = vmul.f32 %v196, %v193
        %v199 = vmul.f32 %v196, %v194
        %203 = vrot.lane.b32.xlu0 %v197, 127
        %v204 = vpop.permute.xlu0 %203
        %205 = vrot.lane.b32.xlu0 %v198, 127
        %v206 = vpop.permute.xlu0 %205
        %207 = vrot.lane.b32.xlu0 %v199, 127
        %v208 = vpop.permute.xlu0 %207
        %v209 = vrot.slane %v204, 1
        %v210 = vrot.slane %v206, 1
        %v211 = vrot.slane %v208, 1
        %vm212 = vcmask 1046528
        %v213 = vsel %vm212, %v209, %v210
        %vm214 = vcmask 1039360
        %v215 = vsel %vm214, %v204, %v213
        %v216 = vsel %vm212, %v210, %v211
        %v217 = vsel %vm214, %v206, %v216
        %v220 = vadd.f32 %v190, %v215
        %v221 = vadd.f32 %v191, %v217
        %s222 = sld [smem:[#allocation3 + $0x2]]
        %v223 = vstv %s222
        %v224 = vmul.f32 %v223, %v192
        %v225 = vmul.f32 %v223, %v193
        %v226 = vmul.f32 %v223, %v194
        %230 = vrot.lane.b32.xlu0 %v224, 126
        %v231 = vpop.permute.xlu0 %230
        %232 = vrot.lane.b32.xlu0 %v225, 126
        %v233 = vpop.permute.xlu0 %232
        %234 = vrot.lane.b32.xlu0 %v226, 126
        %v235 = vpop.permute.xlu0 %234
        %v236 = vrot.slane %v231, 1
        %v237 = vrot.slane %v233, 1
        %v238 = vrot.slane %v235, 1
        %v239 = vsel %vm212, %v236, %v237
        %vm240 = vcmask 1031168
        %v241 = vsel %vm240, %v231, %v239
        %v242 = vsel %vm212, %v237, %v238
        %v243 = vsel %vm240, %v233, %v242
        %v246 = vadd.f32 %v220, %v241
        %v247 = vadd.f32 %v221, %v243
        %s248 = sld [smem:[#allocation3 + $0x3]]
        %v249 = vstv %s248
        %v250 = vmul.f32 %v249, %v192
        %v251 = vmul.f32 %v249, %v193
        %v252 = vmul.f32 %v249, %v194
        %256 = vrot.lane.b32.xlu0 %v250, 118
        %v257 = vpop.permute.xlu0 %256
        %258 = vrot.lane.b32.xlu0 %v251, 118
        %v259 = vpop.permute.xlu0 %258
        %260 = vrot.lane.b32.xlu0 %v252, 118
        %v261 = vpop.permute.xlu0 %260
        %v262 = vrot.slane %v257, 1
        %v263 = vrot.slane %v259, 1
        %v264 = vrot.slane %v261, 1
        %v265 = vsel %vm212, %v262, %v263
        %vm266 = vcmask 965632
        %v267 = vsel %vm266, %v257, %v265
        %v268 = vsel %vm212, %v263, %v264
        %v269 = vsel %vm266, %v259, %v268
        %v272 = vadd.f32 %v246, %v267
        %v273 = vadd.f32 %v247, %v269
        %s274 = sld [smem:[#allocation3 + $0x4]]
        %v275 = vstv %s274
        %v276 = vmul.f32 %v275, %v192
        %v277 = vmul.f32 %v275, %v193
        %v278 = vmul.f32 %v275, %v194
        %282 = vrot.lane.b32.xlu0 %v276, 117
        %v283 = vpop.permute.xlu0 %282
        %284 = vrot.lane.b32.xlu0 %v277, 117
        %v285 = vpop.permute.xlu0 %284
        %286 = vrot.lane.b32.xlu0 %v278, 117
        %v287 = vpop.permute.xlu0 %286
        %v288 = vrot.slane %v283, 1
        %v289 = vrot.slane %v285, 1
        %v290 = vrot.slane %v287, 1
        %v291 = vsel %vm212, %v288, %v289
        %vm292 = vcmask 957440
        %v293 = vsel %vm292, %v283, %v291
        %v294 = vsel %vm212, %v289, %v290
        %v295 = vsel %vm292, %v285, %v294
        %v298 = vadd.f32 %v272, %v293
        %v299 = vadd.f32 %v273, %v295
        %s300 = sld [smem:[#allocation3 + $0x5]]
        %v301 = vstv %s300
        %v302 = vmul.f32 %v301, %v192
        %v303 = vmul.f32 %v301, %v193
        %v304 = vmul.f32 %v301, %v194
        %308 = vrot.lane.b32.xlu0 %v302, 116
        %v309 = vpop.permute.xlu0 %308
        %310 = vrot.lane.b32.xlu0 %v303, 116
        %v311 = vpop.permute.xlu0 %310
        %312 = vrot.lane.b32.xlu0 %v304, 116
        %v313 = vpop.permute.xlu0 %312
        %v314 = vrot.slane %v309, 1
        %v315 = vrot.slane %v311, 1
        %v316 = vrot.slane %v313, 1
        %v317 = vsel %vm212, %v314, %v315
        %vm318 = vcmask 949248
        %v319 = vsel %vm318, %v309, %v317
        %v320 = vsel %vm212, %v315, %v316
        %v321 = vsel %vm318, %v311, %v320
        %v324 = vadd.f32 %v298, %v319
        %v325 = vadd.f32 %v299, %v321
        %s326 = sld [smem:[#allocation3 + $0x6]]
        %v327 = vstv %s326
        %v328 = vmul.f32 %v327, %v192
        %v329 = vmul.f32 %v327, %v193
        %v330 = vmul.f32 %v327, %v194
        %334 = vrot.lane.b32.xlu0 %v328, 108
        %v335 = vpop.permute.xlu0 %334
        %336 = vrot.lane.b32.xlu0 %v329, 108
        %v337 = vpop.permute.xlu0 %336
        %338 = vrot.lane.b32.xlu0 %v330, 108
        %v339 = vpop.permute.xlu0 %338
        %v340 = vrot.slane %v335, 1
        %v341 = vrot.slane %v337, 1
        %v342 = vrot.slane %v339, 1
        %v343 = vsel %vm212, %v340, %v341
        %vm344 = vcmask 883712
        %v345 = vsel %vm344, %v335, %v343
        %v346 = vsel %vm212, %v341, %v342
        %v347 = vsel %vm344, %v337, %v346
        %v350 = vadd.f32 %v324, %v345
        %v351 = vadd.f32 %v325, %v347
        %s352 = sld [smem:[#allocation3 + $0x7]]
        %v353 = vstv %s352
        %v354 = vmul.f32 %v353, %v192
        %v355 = vmul.f32 %v353, %v193
        %v356 = vmul.f32 %v353, %v194
        %360 = vrot.lane.b32.xlu0 %v354, 107
        %v361 = vpop.permute.xlu0 %360
        %362 = vrot.lane.b32.xlu0 %v355, 107
        %v363 = vpop.permute.xlu0 %362
        %364 = vrot.lane.b32.xlu0 %v356, 107
        %v365 = vpop.permute.xlu0 %364
        %v366 = vrot.slane %v361, 1
        %v367 = vrot.slane %v363, 1
        %v368 = vrot.slane %v365, 1
        %v369 = vsel %vm212, %v366, %v367
        %vm370 = vcmask 875520
        %v371 = vsel %vm370, %v361, %v369
        %v372 = vsel %vm212, %v367, %v368
        %v373 = vsel %vm370, %v363, %v372
        %v376 = vadd.f32 %v350, %v371
        %v377 = vadd.f32 %v351, %v373
        %s378 = sld [smem:[#allocation3 + $0x8]]
        %v379 = vstv %s378
        %v380 = vmul.f32 %v379, %v192
        %v381 = vmul.f32 %v379, %v193
        %v382 = vmul.f32 %v379, %v194
        %386 = vrot.lane.b32.xlu0 %v380, 106
        %v387 = vpop.permute.xlu0 %386
        %388 = vrot.lane.b32.xlu0 %v381, 106
        %v389 = vpop.permute.xlu0 %388
        %390 = vrot.lane.b32.xlu0 %v382, 106
        %v391 = vpop.permute.xlu0 %390
        %v392 = vrot.slane %v387, 1
        %v393 = vrot.slane %v389, 1
        %v394 = vrot.slane %v391, 1
        %v395 = vsel %vm212, %v392, %v393
        %vm396 = vcmask 867328
        %v397 = vsel %vm396, %v387, %v395
        %v398 = vsel %vm212, %v393, %v394
        %v399 = vsel %vm396, %v389, %v398
        %v402 = vadd.f32 %v376, %v397
        %v403 = vadd.f32 %v377, %v399
        %s404 = sld [smem:[#allocation3 + $0x9]]
        %v405 = vstv %s404
        %v406 = vmul.f32 %v405, %v192
        %v407 = vmul.f32 %v405, %v193
        %v408 = vmul.f32 %v405, %v194
        %412 = vrot.lane.b32.xlu0 %v406, 28
        %v413 = vpop.permute.xlu0 %412
        %414 = vrot.lane.b32.xlu0 %v407, 28
        %v415 = vpop.permute.xlu0 %414
        %416 = vrot.lane.b32.xlu0 %v408, 28
        %v417 = vpop.permute.xlu0 %416
        %v418 = vrot.slane %v413, 1
        %v419 = vrot.slane %v415, 1
        %v420 = vrot.slane %v417, 1
        %v421 = vsel %vm212, %v418, %v419
        %vm422 = vcmask 228352
        %v423 = vsel %vm422, %v413, %v421
        %v424 = vsel %vm212, %v419, %v420
        %v425 = vsel %vm422, %v415, %v424
        %v428 = vadd.f32 %v402, %v423
        %v429 = vadd.f32 %v403, %v425
        %s430 = sld [smem:[#allocation3 + $0xa]]
        %v431 = vstv %s430
        %v432 = vmul.f32 %v431, %v192
        %v433 = vmul.f32 %v431, %v193
        %v434 = vmul.f32 %v431, %v194
        %438 = vrot.lane.b32.xlu0 %v432, 27
        %v439 = vpop.permute.xlu0 %438
        %440 = vrot.lane.b32.xlu0 %v433, 27
        %v441 = vpop.permute.xlu0 %440
        %442 = vrot.lane.b32.xlu0 %v434, 27
        %v443 = vpop.permute.xlu0 %442
        %v444 = vrot.slane %v439, 1
        %v445 = vrot.slane %v441, 1
        %v446 = vrot.slane %v443, 1
        %v447 = vsel %vm212, %v444, %v445
        %vm448 = vcmask 220160
        %v449 = vsel %vm448, %v439, %v447
        %v450 = vsel %vm212, %v445, %v446
        %v451 = vsel %vm448, %v441, %v450
        %v454 = vadd.f32 %v428, %v449
        %v455 = vadd.f32 %v429, %v451
        %s456 = sld [smem:[#allocation3 + $0xb]]
        %v457 = vstv %s456
        %v458 = vmul.f32 %v457, %v192
        %v459 = vmul.f32 %v457, %v193
        %v460 = vmul.f32 %v457, %v194
        %464 = vrot.lane.b32.xlu0 %v458, 26
        %v465 = vpop.permute.xlu0 %464
        %466 = vrot.lane.b32.xlu0 %v459, 26
        %v467 = vpop.permute.xlu0 %466
        %468 = vrot.lane.b32.xlu0 %v460, 26
        %v469 = vpop.permute.xlu0 %468
        %v470 = vrot.slane %v465, 1
        %v471 = vrot.slane %v467, 1
        %v472 = vrot.slane %v469, 1
        %v473 = vsel %vm212, %v470, %v471
        %vm474 = vcmask 211968
        %v475 = vsel %vm474, %v465, %v473
        %v476 = vsel %vm212, %v471, %v472
        %v477 = vsel %vm474, %v467, %v476
        %v480 = vadd.f32 %v454, %v475
        %v481 = vadd.f32 %v455, %v477
        %s482 = sld [smem:[#allocation3 + $0xc]]
        %v483 = vstv %s482
        %v484 = vmul.f32 %v483, %v192
        %v485 = vmul.f32 %v483, %v193
        %v486 = vmul.f32 %v483, %v194
        %490 = vrot.lane.b32.xlu0 %v484, 18
        %v491 = vpop.permute.xlu0 %490
        %492 = vrot.lane.b32.xlu0 %v485, 18
        %v493 = vpop.permute.xlu0 %492
        %494 = vrot.lane.b32.xlu0 %v486, 18
        %v495 = vpop.permute.xlu0 %494
        %v496 = vrot.slane %v491, 1
        %v497 = vrot.slane %v493, 1
        %v498 = vrot.slane %v495, 1
        %v499 = vsel %vm212, %v496, %v497
        %vm500 = vcmask 146432
        %v501 = vsel %vm500, %v491, %v499
        %v502 = vsel %vm212, %v497, %v498
        %v503 = vsel %vm500, %v493, %v502
        %v506 = vadd.f32 %v480, %v501
        %v507 = vadd.f32 %v481, %v503
        %s508 = sld [smem:[#allocation3 + $0xd]]
        %v509 = vstv %s508
        %v510 = vmul.f32 %v509, %v192
        %v511 = vmul.f32 %v509, %v193
        %v512 = vmul.f32 %v509, %v194
        %516 = vrot.lane.b32.xlu0 %v510, 17
        %v517 = vpop.permute.xlu0 %516
        %518 = vrot.lane.b32.xlu0 %v511, 17
        %v519 = vpop.permute.xlu0 %518
        %520 = vrot.lane.b32.xlu0 %v512, 17
        %v521 = vpop.permute.xlu0 %520
        %v522 = vrot.slane %v517, 1
        %v523 = vrot.slane %v519, 1
        %v524 = vrot.slane %v521, 1
        %v525 = vsel %vm212, %v522, %v523
        %vm526 = vcmask 138240
        %v527 = vsel %vm526, %v517, %v525
        %v528 = vsel %vm212, %v523, %v524
        %v529 = vsel %vm526, %v519, %v528
        %v532 = vadd.f32 %v506, %v527
        %v533 = vadd.f32 %v507, %v529
        %s534 = sld [smem:[#allocation3 + $0xe]]
        %v535 = vstv %s534
        %v536 = vmul.f32 %v535, %v192
        %v537 = vmul.f32 %v535, %v193
        %v538 = vmul.f32 %v535, %v194
        %542 = vrot.lane.b32.xlu0 %v536, 16
        %v543 = vpop.permute.xlu0 %542
        %544 = vrot.lane.b32.xlu0 %v537, 16
        %v545 = vpop.permute.xlu0 %544
        %546 = vrot.lane.b32.xlu0 %v538, 16
        %v547 = vpop.permute.xlu0 %546
        %v548 = vrot.slane %v543, 1
        %v549 = vrot.slane %v545, 1
        %v550 = vrot.slane %v547, 1
        %v551 = vsel %vm212, %v548, %v549
        %vm552 = vcmask 130048
        %v553 = vsel %vm552, %v543, %v551
        %v554 = vsel %vm212, %v549, %v550
        %v555 = vsel %vm552, %v545, %v554
        %v558 = vadd.f32 %v532, %v553
        %v559 = vadd.f32 %v533, %v555
        %s560 = sld [smem:[#allocation3 + $0xf]]
        %v561 = vstv %s560
        %v562 = vmul.f32 %v561, %v192
        %v563 = vmul.f32 %v561, %v193
        %v564 = vmul.f32 %v561, %v194
        %568 = vrot.lane.b32.xlu0 %v562, 8
        %v569 = vpop.permute.xlu0 %568
        %570 = vrot.lane.b32.xlu0 %v563, 8
        %v571 = vpop.permute.xlu0 %570
        %572 = vrot.lane.b32.xlu0 %v564, 8
        %v573 = vpop.permute.xlu0 %572
        %v574 = vrot.slane %v569, 1
        %v575 = vrot.slane %v571, 1
        %v576 = vrot.slane %v573, 1
        %v577 = vsel %vm212, %v574, %v575
        %vm578 = vcmask 64512
        %v579 = vsel %vm578, %v569, %v577
        %v580 = vsel %vm212, %v575, %v576
        %v581 = vsel %vm578, %v571, %v580
        %v584 = vadd.f32 %v558, %v579
        %v585 = vadd.f32 %v559, %v581
        %s586 = sld [smem:[#allocation3 + $0x10]]
        %v587 = vstv %s586
        %v588 = vmul.f32 %v587, %v192
        %v589 = vmul.f32 %v587, %v193
        %v590 = vmul.f32 %v587, %v194
        %594 = vrot.lane.b32.xlu0 %v588, 7
        %v595 = vpop.permute.xlu0 %594
        %596 = vrot.lane.b32.xlu0 %v589, 7
        %v597 = vpop.permute.xlu0 %596
        %598 = vrot.lane.b32.xlu0 %v590, 7
        %v599 = vpop.permute.xlu0 %598
        %v600 = vrot.slane %v595, 1
        %v601 = vrot.slane %v597, 1
        %v602 = vrot.slane %v599, 1
        %v603 = vsel %vm212, %v600, %v601
        %vm604 = vcmask 56320
        %v605 = vsel %vm604, %v595, %v603
        %v606 = vsel %vm212, %v601, %v602
        %v607 = vsel %vm604, %v597, %v606
        %v610 = vadd.f32 %v584, %v605
        %v611 = vadd.f32 %v585, %v607
        %s612 = sld [smem:[#allocation3 + $0x11]]
        %v613 = vstv %s612
        %v614 = vmul.f32 %v613, %v192
        %v615 = vmul.f32 %v613, %v193
        %v616 = vmul.f32 %v613, %v194
        %620 = vrot.lane.b32.xlu0 %v614, 6
        %v621 = vpop.permute.xlu0 %620
        %622 = vrot.lane.b32.xlu0 %v615, 6
        %v623 = vpop.permute.xlu0 %622
        %624 = vrot.lane.b32.xlu0 %v616, 6
        %v625 = vpop.permute.xlu0 %624
        %v626 = vrot.slane %v621, 1
        %v627 = vrot.slane %v623, 1
        %v628 = vrot.slane %v625, 1
        %v629 = vsel %vm212, %v626, %v627
        %vm630 = vcmask 48128
        %v631 = vsel %vm630, %v621, %v629
        %v632 = vsel %vm212, %v627, %v628
        %v633 = vsel %vm630, %v623, %v632
        %v636 = vadd.f32 %v610, %v631
        %v637 = vadd.f32 %v611, %v633
        %v638 = vld [vmem:[%s176 + $0x1] sm:$0xff]
        %v639 = vld [vmem:[%s176 + $0x9] sm:$0xff]
        %v640 = vld [vmem:[%s176 + $0x11] sm:$0x1]
        %s641 = sld [smem:[#allocation3 + $0x12]]
        %v642 = vstv %s641
        %v643 = vmul.f32 %v642, %v638
        %v644 = vmul.f32 %v642, %v639
        %v645 = vmul.f32 %v642, %v640
        %649 = vrot.lane.b32.xlu0 %v643, 56
        %v650 = vpop.permute.xlu0 %649
        %651 = vrot.lane.b32.xlu0 %v644, 56
        %v652 = vpop.permute.xlu0 %651
        %653 = vrot.lane.b32.xlu0 %v645, 56
        %v654 = vpop.permute.xlu0 %653
        %v655 = vrot.slane %v650, 1
        %v656 = vrot.slane %v652, 1
        %v657 = vrot.slane %v654, 1
        %v658 = vsel %vm212, %v655, %v656
        %vm659 = vcmask 457728
        %v660 = vsel %vm659, %v650, %v658
        %v661 = vsel %vm212, %v656, %v657
        %v662 = vsel %vm659, %v652, %v661
        %v665 = vadd.f32 %v636, %v660
        %v666 = vadd.f32 %v637, %v662
        %s667 = sld [smem:[#allocation3 + $0x13]]
        %v668 = vstv %s667
        %v669 = vmul.f32 %v668, %v638
        %v670 = vmul.f32 %v668, %v639
        %v671 = vmul.f32 %v668, %v640
        %675 = vrot.lane.b32.xlu0 %v669, 55
        %v676 = vpop.permute.xlu0 %675
        %677 = vrot.lane.b32.xlu0 %v670, 55
        %v678 = vpop.permute.xlu0 %677
        %679 = vrot.lane.b32.xlu0 %v671, 55
        %v680 = vpop.permute.xlu0 %679
        %v681 = vrot.slane %v676, 1
        %v682 = vrot.slane %v678, 1
        %v683 = vrot.slane %v680, 1
        %v684 = vsel %vm212, %v681, %v682
        %vm685 = vcmask 449536
        %v686 = vsel %vm685, %v676, %v684
        %v687 = vsel %vm212, %v682, %v683
        %v688 = vsel %vm685, %v678, %v687
        %v691 = vadd.f32 %v665, %v686
        %v692 = vadd.f32 %v666, %v688
        %s693 = sld [smem:[#allocation3 + $0x14]]
        %v694 = vstv %s693
        %v695 = vmul.f32 %v694, %v638
        %v696 = vmul.f32 %v694, %v639
        %v697 = vmul.f32 %v694, %v640
        %701 = vrot.lane.b32.xlu0 %v695, 54
        %v702 = vpop.permute.xlu0 %701
        %703 = vrot.lane.b32.xlu0 %v696, 54
        %v704 = vpop.permute.xlu0 %703
        %705 = vrot.lane.b32.xlu0 %v697, 54
        %v706 = vpop.permute.xlu0 %705
        %v707 = vrot.slane %v702, 1
        %v708 = vrot.slane %v704, 1
        %v709 = vrot.slane %v706, 1
        %v710 = vsel %vm212, %v707, %v708
        %vm711 = vcmask 441344
        %v712 = vsel %vm711, %v702, %v710
        %v713 = vsel %vm212, %v708, %v709
        %v714 = vsel %vm711, %v704, %v713
        %v717 = vadd.f32 %v691, %v712
        %v718 = vadd.f32 %v692, %v714
        %s719 = sld [smem:[#allocation3 + $0x15]]
        %v720 = vstv %s719
        %v721 = vmul.f32 %v720, %v638
        %v722 = vmul.f32 %v720, %v639
        %v723 = vmul.f32 %v720, %v640
        %727 = vrot.lane.b32.xlu0 %v721, 46
        %v728 = vpop.permute.xlu0 %727
        %729 = vrot.lane.b32.xlu0 %v722, 46
        %v730 = vpop.permute.xlu0 %729
        %731 = vrot.lane.b32.xlu0 %v723, 46
        %v732 = vpop.permute.xlu0 %731
        %v733 = vrot.slane %v728, 1
        %v734 = vrot.slane %v730, 1
        %v735 = vrot.slane %v732, 1
        %v736 = vsel %vm212, %v733, %v734
        %vm737 = vcmask 375808
        %v738 = vsel %vm737, %v728, %v736
        %v739 = vsel %vm212, %v734, %v735
        %v740 = vsel %vm737, %v730, %v739
        %v743 = vadd.f32 %v717, %v738
        %v744 = vadd.f32 %v718, %v740
        %s745 = sld [smem:[#allocation3 + $0x16]]
        %v746 = vstv %s745
        %v747 = vmul.f32 %v746, %v638
        %v748 = vmul.f32 %v746, %v639
        %v749 = vmul.f32 %v746, %v640
        %753 = vrot.lane.b32.xlu0 %v747, 45
        %v754 = vpop.permute.xlu0 %753
        %755 = vrot.lane.b32.xlu0 %v748, 45
        %v756 = vpop.permute.xlu0 %755
        %757 = vrot.lane.b32.xlu0 %v749, 45
        %v758 = vpop.permute.xlu0 %757
        %v759 = vrot.slane %v754, 1
        %v760 = vrot.slane %v756, 1
        %v761 = vrot.slane %v758, 1
        %v762 = vsel %vm212, %v759, %v760
        %vm763 = vcmask 367616
        %v764 = vsel %vm763, %v754, %v762
        %v765 = vsel %vm212, %v760, %v761
        %v766 = vsel %vm763, %v756, %v765
        %v769 = vadd.f32 %v743, %v764
        %v770 = vadd.f32 %v744, %v766
        %s771 = sld [smem:[#allocation3 + $0x17]]
        %v772 = vstv %s771
        %v773 = vmul.f32 %v772, %v638
        %v774 = vmul.f32 %v772, %v639
        %v775 = vmul.f32 %v772, %v640
        %779 = vrot.lane.b32.xlu0 %v773, 44
        %v780 = vpop.permute.xlu0 %779
        %781 = vrot.lane.b32.xlu0 %v774, 44
        %v782 = vpop.permute.xlu0 %781
        %783 = vrot.lane.b32.xlu0 %v775, 44
        %v784 = vpop.permute.xlu0 %783
        %v785 = vrot.slane %v780, 1
        %v786 = vrot.slane %v782, 1
        %v787 = vrot.slane %v784, 1
        %v788 = vsel %vm212, %v785, %v786
        %vm789 = vcmask 359424
        %v790 = vsel %vm789, %v780, %v788
        %v791 = vsel %vm212, %v786, %v787
        %v792 = vsel %vm789, %v782, %v791
        %v795 = vadd.f32 %v769, %v790
        %v796 = vadd.f32 %v770, %v792
        %s797 = sld [smem:[#allocation3 + $0x18]]
        %v798 = vstv %s797
        %v799 = vmul.f32 %v798, %v638
        %v800 = vmul.f32 %v798, %v639
        %v801 = vmul.f32 %v798, %v640
        %805 = vrot.lane.b32.xlu0 %v799, 36
        %v806 = vpop.permute.xlu0 %805
        %807 = vrot.lane.b32.xlu0 %v800, 36
        %v808 = vpop.permute.xlu0 %807
        %809 = vrot.lane.b32.xlu0 %v801, 36
        %v810 = vpop.permute.xlu0 %809
        %v811 = vrot.slane %v806, 1
        %v812 = vrot.slane %v808, 1
        %v813 = vrot.slane %v810, 1
        %v814 = vsel %vm212, %v811, %v812
        %vm815 = vcmask 293888
        %v816 = vsel %vm815, %v806, %v814
        %v817 = vsel %vm212, %v812, %v813
        %v818 = vsel %vm815, %v808, %v817
        %v821 = vadd.f32 %v795, %v816
        %v822 = vadd.f32 %v796, %v818
        %s823 = sld [smem:[#allocation3 + $0x19]]
        %v824 = vstv %s823
        %v825 = vmul.f32 %v824, %v638
        %v826 = vmul.f32 %v824, %v639
        %v827 = vmul.f32 %v824, %v640
        %831 = vrot.lane.b32.xlu0 %v825, 35
        %v832 = vpop.permute.xlu0 %831
        %833 = vrot.lane.b32.xlu0 %v826, 35
        %v834 = vpop.permute.xlu0 %833
        %835 = vrot.lane.b32.xlu0 %v827, 35
        %v836 = vpop.permute.xlu0 %835
        %v837 = vrot.slane %v832, 1
        %v838 = vrot.slane %v834, 1
        %v839 = vrot.slane %v836, 1
        %v840 = vsel %vm212, %v837, %v838
        %vm841 = vcmask 285696
        %v842 = vsel %vm841, %v832, %v840
        %v843 = vsel %vm212, %v838, %v839
        %v844 = vsel %vm841, %v834, %v843
        %v847 = vadd.f32 %v821, %v842
        %v848 = vadd.f32 %v822, %v844
        %s849 = sld [smem:[#allocation3 + $0x1a]]
        %v850 = vstv %s849
        %v851 = vmul.f32 %v850, %v638
        %v852 = vmul.f32 %v850, %v639
        %v853 = vmul.f32 %v850, %v640
        %857 = vrot.lane.b32.xlu0 %v851, 34
        %v858 = vpop.permute.xlu0 %857
        %859 = vrot.lane.b32.xlu0 %v852, 34
        %v860 = vpop.permute.xlu0 %859
        %861 = vrot.lane.b32.xlu0 %v853, 34
        %v862 = vpop.permute.xlu0 %861
        %v863 = vrot.slane %v858, 1
        %v864 = vrot.slane %v860, 1
        %v865 = vrot.slane %v862, 1
        %v866 = vsel %vm212, %v863, %v864
        %vm867 = vcmask 277504
        %v868 = vsel %vm867, %v858, %v866
        %v869 = vsel %vm212, %v864, %v865
        %v870 = vsel %vm867, %v860, %v869
        %v873 = vadd.f32 %v847, %v868
        %v874 = vadd.f32 %v848, %v870
        %v875 = vld [vmem:[%s176 + $0x2] sm:$0xff]
        %v876 = vld [vmem:[%s176 + $0xa] sm:$0xff]
        %v877 = vld [vmem:[%s176 + $0x12] sm:$0x1]
        %s878 = sld [smem:[#allocation3 + $0x1b]]
        %v879 = vstv %s878
        %v880 = vmul.f32 %v879, %v875
        %v881 = vmul.f32 %v879, %v876
        %v882 = vmul.f32 %v879, %v877
        %886 = vrot.lane.b32.xlu0 %v880, 84
        %v887 = vpop.permute.xlu0 %886
        %888 = vrot.lane.b32.xlu0 %v881, 84
        %v889 = vpop.permute.xlu0 %888
        %890 = vrot.lane.b32.xlu0 %v882, 84
        %v891 = vpop.permute.xlu0 %890
        %v892 = vrot.slane %v887, 1
        %v893 = vrot.slane %v889, 1
        %v894 = vrot.slane %v891, 1
        %v895 = vsel %vm212, %v892, %v893
        %vm896 = vcmask 687104
        %v897 = vsel %vm896, %v887, %v895
        %v898 = vsel %vm212, %v893, %v894
        %v899 = vsel %vm896, %v889, %v898
        %v902 = vadd.f32 %v873, %v897
        %v903 = vadd.f32 %v874, %v899
        %s904 = sld [smem:[#allocation3 + $0x1c]]
        %v905 = vstv %s904
        %v906 = vmul.f32 %v905, %v875
        %v907 = vmul.f32 %v905, %v876
        %v908 = vmul.f32 %v905, %v877
        %912 = vrot.lane.b32.xlu0 %v906, 83
        %v913 = vpop.permute.xlu0 %912
        %914 = vrot.lane.b32.xlu0 %v907, 83
        %v915 = vpop.permute.xlu0 %914
        %916 = vrot.lane.b32.xlu0 %v908, 83
        %v917 = vpop.permute.xlu0 %916
        %v918 = vrot.slane %v913, 1
        %v919 = vrot.slane %v915, 1
        %v920 = vrot.slane %v917, 1
        %v921 = vsel %vm212, %v918, %v919
        %vm922 = vcmask 678912
        %v923 = vsel %vm922, %v913, %v921
        %v924 = vsel %vm212, %v919, %v920
        %v925 = vsel %vm922, %v915, %v924
        %v928 = vadd.f32 %v902, %v923
        %v929 = vadd.f32 %v903, %v925
        %s930 = sld [smem:[#allocation3 + $0x1d]]
        %v931 = vstv %s930
        %v932 = vmul.f32 %v931, %v875
        %v933 = vmul.f32 %v931, %v876
        %v934 = vmul.f32 %v931, %v877
        %938 = vrot.lane.b32.xlu0 %v932, 82
        %v939 = vpop.permute.xlu0 %938
        %940 = vrot.lane.b32.xlu0 %v933, 82
        %v941 = vpop.permute.xlu0 %940
        %942 = vrot.lane.b32.xlu0 %v934, 82
        %v943 = vpop.permute.xlu0 %942
        %v944 = vrot.slane %v939, 1
        %v945 = vrot.slane %v941, 1
        %v946 = vrot.slane %v943, 1
        %v947 = vsel %vm212, %v944, %v945
        %vm948 = vcmask 670720
        %v949 = vsel %vm948, %v939, %v947
        %v950 = vsel %vm212, %v945, %v946
        %v951 = vsel %vm948, %v941, %v950
        %v954 = vadd.f32 %v928, %v949
        %v955 = vadd.f32 %v929, %v951
        %s956 = sld [smem:[#allocation3 + $0x1e]]
        %v957 = vstv %s956
        %v958 = vmul.f32 %v957, %v875
        %v959 = vmul.f32 %v957, %v876
        %v960 = vmul.f32 %v957, %v877
        %964 = vrot.lane.b32.xlu0 %v958, 74
        %v965 = vpop.permute.xlu0 %964
        %966 = vrot.lane.b32.xlu0 %v959, 74
        %v967 = vpop.permute.xlu0 %966
        %968 = vrot.lane.b32.xlu0 %v960, 74
        %v969 = vpop.permute.xlu0 %968
        %v970 = vrot.slane %v965, 1
        %v971 = vrot.slane %v967, 1
        %v972 = vrot.slane %v969, 1
        %v973 = vsel %vm212, %v970, %v971
        %vm974 = vcmask 605184
        %v975 = vsel %vm974, %v965, %v973
        %v976 = vsel %vm212, %v971, %v972
        %v977 = vsel %vm974, %v967, %v976
        %v980 = vadd.f32 %v954, %v975
        %v981 = vadd.f32 %v955, %v977
        %s982 = sld [smem:[#allocation3 + $0x1f]]
        %v983 = vstv %s982
        %v984 = vmul.f32 %v983, %v875
        %v985 = vmul.f32 %v983, %v876
        %v986 = vmul.f32 %v983, %v877
        %990 = vrot.lane.b32.xlu0 %v984, 73
        %v991 = vpop.permute.xlu0 %990
        %992 = vrot.lane.b32.xlu0 %v985, 73
        %v993 = vpop.permute.xlu0 %992
        %994 = vrot.lane.b32.xlu0 %v986, 73
        %v995 = vpop.permute.xlu0 %994
        %v996 = vrot.slane %v991, 1
        %v997 = vrot.slane %v993, 1
        %v998 = vrot.slane %v995, 1
        %v999 = vsel %vm212, %v996, %v997
        %vm1000 = vcmask 596992
        %v1001 = vsel %vm1000, %v991, %v999
        %v1002 = vsel %vm212, %v997, %v998
        %v1003 = vsel %vm1000, %v993, %v1002
        %v1006 = vadd.f32 %v980, %v1001
        %v1007 = vadd.f32 %v981, %v1003
        %s1008 = sld [smem:[#allocation3 + $0x20]]
        %v1009 = vstv %s1008
        %v1010 = vmul.f32 %v1009, %v875
        %v1011 = vmul.f32 %v1009, %v876
        %v1012 = vmul.f32 %v1009, %v877
        %1016 = vrot.lane.b32.xlu0 %v1010, 72
        %v1017 = vpop.permute.xlu0 %1016
        %1018 = vrot.lane.b32.xlu0 %v1011, 72
        %v1019 = vpop.permute.xlu0 %1018
        %1020 = vrot.lane.b32.xlu0 %v1012, 72
        %v1021 = vpop.permute.xlu0 %1020
        %v1022 = vrot.slane %v1017, 1
        %v1023 = vrot.slane %v1019, 1
        %v1024 = vrot.slane %v1021, 1
        %v1025 = vsel %vm212, %v1022, %v1023
        %vm1026 = vcmask 588800
        %v1027 = vsel %vm1026, %v1017, %v1025
        %v1028 = vsel %vm212, %v1023, %v1024
        %v1029 = vsel %vm1026, %v1019, %v1028
        %v1032 = vadd.f32 %v1006, %v1027
        %v1033 = vadd.f32 %v1007, %v1029
        %s1034 = sld [smem:[#allocation3 + $0x21]]
        %v1035 = vstv %s1034
        %v1036 = vmul.f32 %v1035, %v875
        %v1037 = vmul.f32 %v1035, %v876
        %v1038 = vmul.f32 %v1035, %v877
        %1042 = vrot.lane.b32.xlu0 %v1036, 64
        %v1043 = vpop.permute.xlu0 %1042
        %1044 = vrot.lane.b32.xlu0 %v1037, 64
        %v1045 = vpop.permute.xlu0 %1044
        %1046 = vrot.lane.b32.xlu0 %v1038, 64
        %v1047 = vpop.permute.xlu0 %1046
        %v1048 = vrot.slane %v1043, 1
        %v1049 = vrot.slane %v1045, 1
        %v1050 = vrot.slane %v1047, 1
        %v1051 = vsel %vm212, %v1048, %v1049
        %vm1052 = vcmask 523264
        %v1053 = vsel %vm1052, %v1043, %v1051
        %v1054 = vsel %vm212, %v1049, %v1050
        %v1055 = vsel %vm1052, %v1045, %v1054
        %v1058 = vadd.f32 %v1032, %v1053
        %v1059 = vadd.f32 %v1033, %v1055
        %s1060 = sld [smem:[#allocation3 + $0x22]]
        %v1061 = vstv %s1060
        %v1062 = vmul.f32 %v1061, %v875
        %v1063 = vmul.f32 %v1061, %v876
        %v1064 = vmul.f32 %v1061, %v877
        %1068 = vrot.lane.b32.xlu0 %v1062, 63
        %v1069 = vpop.permute.xlu0 %1068
        %1070 = vrot.lane.b32.xlu0 %v1063, 63
        %v1071 = vpop.permute.xlu0 %1070
        %1072 = vrot.lane.b32.xlu0 %v1064, 63
        %v1073 = vpop.permute.xlu0 %1072
        %v1074 = vrot.slane %v1069, 1
        %v1075 = vrot.slane %v1071, 1
        %v1076 = vrot.slane %v1073, 1
        %v1077 = vsel %vm212, %v1074, %v1075
        %vm1078 = vcmask 515072
        %v1079 = vsel %vm1078, %v1069, %v1077
        %v1080 = vsel %vm212, %v1075, %v1076
        %v1081 = vsel %vm1078, %v1071, %v1080
        %v1084 = vadd.f32 %v1058, %v1079
        %v1085 = vadd.f32 %v1059, %v1081
        %s1086 = sld [smem:[#allocation3 + $0x23]]
        %v1087 = vstv %s1086
        %v1088 = vmul.f32 %v1087, %v875
        %v1089 = vmul.f32 %v1087, %v876
        %v1090 = vmul.f32 %v1087, %v877
        %1094 = vrot.lane.b32.xlu0 %v1088, 62
        %v1095 = vpop.permute.xlu0 %1094
        %1096 = vrot.lane.b32.xlu0 %v1089, 62
        %v1097 = vpop.permute.xlu0 %1096
        %1098 = vrot.lane.b32.xlu0 %v1090, 62
        %v1099 = vpop.permute.xlu0 %1098
        %v1100 = vrot.slane %v1095, 1
        %v1101 = vrot.slane %v1097, 1
        %v1102 = vrot.slane %v1099, 1
        %v1103 = vsel %vm212, %v1100, %v1101
        %vm1104 = vcmask 506880
        %v1105 = vsel %vm1104, %v1095, %v1103
        %v1106 = vsel %vm212, %v1101, %v1102
        %v1107 = vsel %vm1104, %v1097, %v1106
        %v1110 = vadd.f32 %v1084, %v1105
        %v1111 = vadd.f32 %v1085, %v1107
        %v1112 = vld [vmem:[%s176 + $0x3] sm:$0xff]
        %v1113 = vld [vmem:[%s176 + $0xb] sm:$0xff]
        %v1114 = vld [vmem:[%s176 + $0x13] sm:$0x1]
        %s1115 = sld [smem:[#allocation3 + $0x24]]
        %v1116 = vstv %s1115
        %v1117 = vmul.f32 %v1116, %v1112
        %v1118 = vmul.f32 %v1116, %v1113
        %v1119 = vmul.f32 %v1116, %v1114
        %1123 = vrot.lane.b32.xlu0 %v1117, 112
        %v1124 = vpop.permute.xlu0 %1123
        %1125 = vrot.lane.b32.xlu0 %v1118, 112
        %v1126 = vpop.permute.xlu0 %1125
        %1127 = vrot.lane.b32.xlu0 %v1119, 112
        %v1128 = vpop.permute.xlu0 %1127
        %v1129 = vrot.slane %v1124, 1
        %v1130 = vrot.slane %v1126, 1
        %v1131 = vrot.slane %v1128, 1
        %v1132 = vsel %vm212, %v1129, %v1130
        %vm1133 = vcmask 916480
        %v1134 = vsel %vm1133, %v1124, %v1132
        %v1135 = vsel %vm212, %v1130, %v1131
        %v1136 = vsel %vm1133, %v1126, %v1135
        %v1139 = vadd.f32 %v1110, %v1134
        %v1140 = vadd.f32 %v1111, %v1136
        %s1141 = sld [smem:[#allocation3 + $0x25]]
        %v1142 = vstv %s1141
        %v1143 = vmul.f32 %v1142, %v1112
        %v1144 = vmul.f32 %v1142, %v1113
        %v1145 = vmul.f32 %v1142, %v1114
        %1149 = vrot.lane.b32.xlu0 %v1143, 111
        %v1150 = vpop.permute.xlu0 %1149
        %1151 = vrot.lane.b32.xlu0 %v1144, 111
        %v1152 = vpop.permute.xlu0 %1151
        %1153 = vrot.lane.b32.xlu0 %v1145, 111
        %v1154 = vpop.permute.xlu0 %1153
        %v1155 = vrot.slane %v1150, 1
        %v1156 = vrot.slane %v1152, 1
        %v1157 = vrot.slane %v1154, 1
        %v1158 = vsel %vm212, %v1155, %v1156
        %vm1159 = vcmask 908288
        %v1160 = vsel %vm1159, %v1150, %v1158
        %v1161 = vsel %vm212, %v1156, %v1157
        %v1162 = vsel %vm1159, %v1152, %v1161
        %v1165 = vadd.f32 %v1139, %v1160
        %v1166 = vadd.f32 %v1140, %v1162
        %s1167 = sld [smem:[#allocation3 + $0x26]]
        %v1168 = vstv %s1167
        %v1169 = vmul.f32 %v1168, %v1112
        %v1170 = vmul.f32 %v1168, %v1113
        %v1171 = vmul.f32 %v1168, %v1114
        %1175 = vrot.lane.b32.xlu0 %v1169, 110
        %v1176 = vpop.permute.xlu0 %1175
        %1177 = vrot.lane.b32.xlu0 %v1170, 110
        %v1178 = vpop.permute.xlu0 %1177
        %1179 = vrot.lane.b32.xlu0 %v1171, 110
        %v1180 = vpop.permute.xlu0 %1179
        %v1181 = vrot.slane %v1176, 1
        %v1182 = vrot.slane %v1178, 1
        %v1183 = vrot.slane %v1180, 1
        %v1184 = vsel %vm212, %v1181, %v1182
        %vm1185 = vcmask 900096
        %v1186 = vsel %vm1185, %v1176, %v1184
        %v1187 = vsel %vm212, %v1182, %v1183
        %v1188 = vsel %vm1185, %v1178, %v1187
        %v1191 = vadd.f32 %v1165, %v1186
        %v1192 = vadd.f32 %v1166, %v1188
        %s1193 = sld [smem:[#allocation3 + $0x27]]
        %v1194 = vstv %s1193
        %v1195 = vmul.f32 %v1194, %v1112
        %v1196 = vmul.f32 %v1194, %v1113
        %v1197 = vmul.f32 %v1194, %v1114
        %1201 = vrot.lane.b32.xlu0 %v1195, 102
        %v1202 = vpop.permute.xlu0 %1201
        %1203 = vrot.lane.b32.xlu0 %v1196, 102
        %v1204 = vpop.permute.xlu0 %1203
        %1205 = vrot.lane.b32.xlu0 %v1197, 102
        %v1206 = vpop.permute.xlu0 %1205
        %v1207 = vrot.slane %v1202, 1
        %v1208 = vrot.slane %v1204, 1
        %v1209 = vrot.slane %v1206, 1
        %v1210 = vsel %vm212, %v1207, %v1208
        %vm1211 = vcmask 834560
        %v1212 = vsel %vm1211, %v1202, %v1210
        %v1213 = vsel %vm212, %v1208, %v1209
        %v1214 = vsel %vm1211, %v1204, %v1213
        %v1217 = vadd.f32 %v1191, %v1212
        %v1218 = vadd.f32 %v1192, %v1214
        %s1219 = sld [smem:[#allocation3 + $0x28]]
        %v1220 = vstv %s1219
        %v1221 = vmul.f32 %v1220, %v1112
        %v1222 = vmul.f32 %v1220, %v1113
        %v1223 = vmul.f32 %v1220, %v1114
        %1227 = vrot.lane.b32.xlu0 %v1221, 101
        %v1228 = vpop.permute.xlu0 %1227
        %1229 = vrot.lane.b32.xlu0 %v1222, 101
        %v1230 = vpop.permute.xlu0 %1229
        %1231 = vrot.lane.b32.xlu0 %v1223, 101
        %v1232 = vpop.permute.xlu0 %1231
        %v1233 = vrot.slane %v1228, 1
        %v1234 = vrot.slane %v1230, 1
        %v1235 = vrot.slane %v1232, 1
        %v1236 = vsel %vm212, %v1233, %v1234
        %vm1237 = vcmask 826368
        %v1238 = vsel %vm1237, %v1228, %v1236
        %v1239 = vsel %vm212, %v1234, %v1235
        %v1240 = vsel %vm1237, %v1230, %v1239
        %v1243 = vadd.f32 %v1217, %v1238
        %v1244 = vadd.f32 %v1218, %v1240
        %s1245 = sld [smem:[#allocation3 + $0x29]]
        %v1246 = vstv %s1245
        %v1247 = vmul.f32 %v1246, %v1112
        %v1248 = vmul.f32 %v1246, %v1113
        %v1249 = vmul.f32 %v1246, %v1114
        %1253 = vrot.lane.b32.xlu0 %v1247, 100
        %v1254 = vpop.permute.xlu0 %1253
        %1255 = vrot.lane.b32.xlu0 %v1248, 100
        %v1256 = vpop.permute.xlu0 %1255
        %1257 = vrot.lane.b32.xlu0 %v1249, 100
        %v1258 = vpop.permute.xlu0 %1257
        %v1259 = vrot.slane %v1254, 1
        %v1260 = vrot.slane %v1256, 1
        %v1261 = vrot.slane %v1258, 1
        %v1262 = vsel %vm212, %v1259, %v1260
        %vm1263 = vcmask 818176
        %v1264 = vsel %vm1263, %v1254, %v1262
        %v1265 = vsel %vm212, %v1260, %v1261
        %v1266 = vsel %vm1263, %v1256, %v1265
        %v1269 = vadd.f32 %v1243, %v1264
        %v1270 = vadd.f32 %v1244, %v1266
        %s1271 = sld [smem:[#allocation3 + $0x2a]]
        %v1272 = vstv %s1271
        %v1273 = vmul.f32 %v1272, %v1112
        %v1274 = vmul.f32 %v1272, %v1113
        %v1275 = vmul.f32 %v1272, %v1114
        %1279 = vrot.lane.b32.xlu0 %v1273, 92
        %v1280 = vpop.permute.xlu0 %1279
        %1281 = vrot.lane.b32.xlu0 %v1274, 92
        %v1282 = vpop.permute.xlu0 %1281
        %1283 = vrot.lane.b32.xlu0 %v1275, 92
        %v1284 = vpop.permute.xlu0 %1283
        %v1285 = vrot.slane %v1280, 1
        %v1286 = vrot.slane %v1282, 1
        %v1287 = vrot.slane %v1284, 1
        %v1288 = vsel %vm212, %v1285, %v1286
        %vm1289 = vcmask 752640
        %v1290 = vsel %vm1289, %v1280, %v1288
        %v1291 = vsel %vm212, %v1286, %v1287
        %v1292 = vsel %vm1289, %v1282, %v1291
        %v1295 = vadd.f32 %v1269, %v1290
        %v1296 = vadd.f32 %v1270, %v1292
        %s1297 = sld [smem:[#allocation3 + $0x2b]]
        %v1298 = vstv %s1297
        %v1299 = vmul.f32 %v1298, %v1112
        %v1300 = vmul.f32 %v1298, %v1113
        %v1301 = vmul.f32 %v1298, %v1114
        %1305 = vrot.lane.b32.xlu0 %v1299, 91
        %v1306 = vpop.permute.xlu0 %1305
        %1307 = vrot.lane.b32.xlu0 %v1300, 91
        %v1308 = vpop.permute.xlu0 %1307
        %1309 = vrot.lane.b32.xlu0 %v1301, 91
        %v1310 = vpop.permute.xlu0 %1309
        %v1311 = vrot.slane %v1306, 1
        %v1312 = vrot.slane %v1308, 1
        %v1313 = vrot.slane %v1310, 1
        %v1314 = vsel %vm212, %v1311, %v1312
        %vm1315 = vcmask 744448
        %v1316 = vsel %vm1315, %v1306, %v1314
        %v1317 = vsel %vm212, %v1312, %v1313
        %v1318 = vsel %vm1315, %v1308, %v1317
        %v1321 = vadd.f32 %v1295, %v1316
        %v1322 = vadd.f32 %v1296, %v1318
        %s1323 = sld [smem:[#allocation3 + $0x2c]]
        %v1324 = vstv %s1323
        %v1325 = vmul.f32 %v1324, %v1112
        %v1326 = vmul.f32 %v1324, %v1113
        %v1327 = vmul.f32 %v1324, %v1114
        %1331 = vrot.lane.b32.xlu0 %v1325, 90
        %v1332 = vpop.permute.xlu0 %1331
        %1333 = vrot.lane.b32.xlu0 %v1326, 90
        %v1334 = vpop.permute.xlu0 %1333
        %1335 = vrot.lane.b32.xlu0 %v1327, 90
        %v1336 = vpop.permute.xlu0 %1335
        %v1337 = vrot.slane %v1332, 1
        %v1338 = vrot.slane %v1334, 1
        %v1339 = vrot.slane %v1336, 1
        %v1340 = vsel %vm212, %v1337, %v1338
        %vm1341 = vcmask 736256
        %v1342 = vsel %vm1341, %v1332, %v1340
        %v1343 = vsel %vm212, %v1338, %v1339
        %v1344 = vsel %vm1341, %v1334, %v1343
        %v1347 = vadd.f32 %v1321, %v1342
        %v1348 = vadd.f32 %v1322, %v1344
        %v1349 = vmax.f32 %v1347, 0.0
        %v1350 = vmax.f32 %v1348, 0.0
        %1351 = vst [vmem:[%s180] sm:$0xff] %v1349
        %1352 = vst [vmem:[%s180 + $0x8] sm:$0xff] %v1350
        %p1353 = scmp.lt.s32.totalorder %s16, 1
        %s1354 = scalar_select %p1353, %s16, 1
        %s1355 = smul.addr %s1354, 16
        %s1356 = scalar_lea.vmem %s3, %s1355
        // Predicated region
        $region37: #{compressive3d_forward.5} parent=31 // pred_check
          %p1357 = pneg %p102
        $region38: #{compressive3d_forward.5} parent=31 // pred_check_branch
          %1359 = sbr.rel (%p1357) target = $region40
        $region39: #{compressive3d_forward.5} parent=31 // pred_region
          _
        $region40: #{compressive3d_forward.5} parent=31 // pred_fallthru
          _
      $region32: #{compressive3d_forward.5} parent=5 // pred_fallthru
        _
      %p1360 = scmp.le.s32.totalorder 2, %s11
      // Predicated region
      $region41: #{compressive3d_forward.5} parent=5 // pred_check
        %p1361 = pneg %p1360
      $region42: #{compressive3d_forward.5} parent=5 // pred_check_branch
        %1363 = sbr.rel (%p1361) target = $region44
      $region43: #{compressive3d_forward.5} parent=5 // pred_region
        %s1364 = ssub.s32 %s11, 2
        // Predicated region
        $region45: #{compressive3d_forward.5} parent=43 // pred_check
          %p1365 = pneg %p108
        $region46: #{compressive3d_forward.5} parent=43 // pred_check_branch
          %1367 = sbr.rel (%p1365) target = $region48
        $region47: #{compressive3d_forward.5} parent=43 // pred_region
          %p1368 = scmp.lt.s32.totalorder %s17, 1
          %s1369 = scalar_select %p1368, %s17, 1
          %s1370 = smul.addr %s1369, 16
          %s1371 = scalar_lea.vmem %s3, %s1370
        $region48: #{compressive3d_forward.5} parent=43 // pred_fallthru
          _
      $region44: #{compressive3d_forward.5} parent=5 // pred_fallthru
        _
    $region6: #{compressive3d_forward.5} parent=1 // loop_footer
      %s15 = sadd.s32 1, %s11
    $region7: #{compressive3d_forward.5} parent=1 // loop_footer_branch
      %10 = sbr.rel target = $region3
    $region8: #{compressive3d_forward.5} parent=1 // loop_exit
      _
    %1372 = vsyncpa [#allocation4], 1
    %s1373 = scalar_lea.sflag [#allocation4], 1
    %1374 = vsyncpa %s1373, 1

</llo_original>
